<compile_context>
chip_gen: v6e
topology: v6e:2x2x1
jax: 0.10.0
libtpu: 0.0.40
codegen_flags: <defaults>
</compile_context>

<pallas_src>
import functools

import jax
import jax.numpy as jnp
from jax.experimental import pallas as pl
from jax.experimental.pallas import tpu as pltpu

EPS = 1e-5  # nn.LayerNorm default eps


# ----------------------------------------------------------------------------- fused kernel


def _transformer_block_kernel(
    q_ref, k_ref, v_ref,
    wq_ref, bq_ref, wk_ref, bk_ref, wv_ref, bv_ref,
    wo_ref, bo_ref,
    g1_ref, be1_ref,
    w1_ref, b1_ref, w2_ref, b2_ref,
    g2_ref, be2_ref,
    o_ref,
    *, heads: int, seq_len: int, batch_block: int, scale: float,
):
    f32 = jnp.float32
    cdt = jnp.bfloat16
    E = q_ref.shape[-1]
    hd = E // heads
    L = seq_len

    q_in = q_ref[...]  # (R, E) f32, R = batch_block * L -- also the residual branch
    k_in = k_ref[...]
    v_in = v_ref[...]

    # ---- QKV in-projections on the full row slab: bf16 MXU operands, f32 acc -----
    qp = jnp.dot(q_in.astype(cdt), wq_ref[...], preferred_element_type=f32) + bq_ref[...]
    kp = jnp.dot(k_in.astype(cdt), wk_ref[...], preferred_element_type=f32) + bk_ref[...]
    vp = jnp.dot(v_in.astype(cdt), wv_ref[...], preferred_element_type=f32) + bv_ref[...]

    # Fold the 1/sqrt(hd) scale into Q once; cast to bf16 once for the MXU.
    qp_b = (qp * scale).astype(cdt)
    kp_b = kp.astype(cdt)
    vp_b = vp.astype(cdt)

    # ---- multi-head scaled-dot-product attention (all VMEM resident) -------------
    batch_outs = []
    for b in range(batch_block):            # static unrolled loop over batch rows
        rs = slice(b * L, (b + 1) * L)       # sublane row slice (L aligned to 8)
        head_outs = []
        for h in range(heads):               # static unrolled loop over heads
            cs = slice(h * hd, (h + 1) * hd)
            qh = qp_b[rs, cs]                # (L, hd)
            kh = kp_b[rs, cs]
            vh = vp_b[rs, cs]
            # scores = qh @ kh^T (contract head_dim on both operands)
            s = jax.lax.dot_general(
                qh, kh, (((1,), (1,)), ((), ())), preferred_element_type=f32
            )  # (L, L)
            m = jnp.max(s, axis=-1, keepdims=True)
            p = jnp.exp(s - m)
            p = p * pl.reciprocal(jnp.sum(p, axis=-1, keepdims=True), approx=True)
            head_outs.append(jnp.dot(p.astype(cdt), vh, preferred_element_type=f32))
        batch_outs.append(jnp.concatenate(head_outs, axis=-1))  # (L, E)
    attn = jnp.concatenate(batch_outs, axis=0)  # (R, E) -- heads merged on lanes

    # ---- out projection + residual + LayerNorm 1 ----------------------------------
    attn_out = jnp.dot(attn.astype(cdt), wo_ref[...], preferred_element_type=f32) + bo_ref[...]
    z = attn_out + q_in
    mu = jnp.mean(z, axis=-1, keepdims=True)
    var = jnp.mean((z - mu) ** 2, axis=-1, keepdims=True)
    x = (z - mu) * jax.lax.rsqrt(var + EPS) * g1_ref[...] + be1_ref[...]

    # ---- feed-forward (Linear -> ReLU -> Linear) + residual + LayerNorm 2 ---------
    h1 = jnp.dot(x.astype(cdt), w1_ref[...], preferred_element_type=f32) + b1_ref[...]
    h1 = jnp.maximum(h1, 0.0)
    ff = jnp.dot(h1.astype(cdt), w2_ref[...], preferred_element_type=f32) + b2_ref[...]
    z2 = ff + x
    mu2 = jnp.mean(z2, axis=-1, keepdims=True)
    var2 = jnp.mean((z2 - mu2) ** 2, axis=-1, keepdims=True)
    out = (z2 - mu2) * jax.lax.rsqrt(var2 + EPS) * g2_ref[...] + be2_ref[...]

    o_ref[...] = out.astype(o_ref.dtype)


# ----------------------------------------------------------------------------- wrapper


def _pick_batch_block(N, L, max_rows=512):
    """Largest divisor of N such that the per-step row slab stays modest in VMEM."""
    nb = max(1, min(N, max(1, max_rows // max(L, 1))))
    while N % nb != 0:
        nb -= 1
    return nb


def transformer_block_forward(value, key, query, params):
    L, N, E = query.shape
    H = params["heads"]
    hd = E // H
    scale = 1.0 / float(hd) ** 0.5
    F = params["w1"].shape[1]
    cdt = jnp.bfloat16

    NB = _pick_batch_block(N, L)
    R = NB * L

    # Sequence-first (L, N, E) -> batch-major flattened rows (N*L, E): one cheap
    # input-side relayout so per-batch rows are contiguous; intermediates never
    # leave VMEM.
    q2 = jnp.transpose(query, (1, 0, 2)).reshape(N * L, E)
    k2 = jnp.transpose(key, (1, 0, 2)).reshape(N * L, E)
    v2 = jnp.transpose(value, (1, 0, 2)).reshape(N * L, E)

    # Weights fed to the MXU in bf16 (f32 accumulation in-kernel); biases/LN stay f32.
    wq = params["wq"].astype(cdt)
    wk = params["wk"].astype(cdt)
    wv = params["wv"].astype(cdt)
    wo = params["wo"].astype(cdt)
    w1 = params["w1"].astype(cdt)
    w2 = params["w2"].astype(cdt)

    row = lambda i: (i, 0)
    fixed = lambda i: (0, 0)

    out = pl.pallas_call(
        functools.partial(
            _transformer_block_kernel,
            heads=H, seq_len=L, batch_block=NB, scale=scale,
        ),
        out_shape=jax.ShapeDtypeStruct((N * L, E), jnp.float32),
        grid=(N // NB,),
        in_specs=[
            pl.BlockSpec((R, E), row),       # query rows
            pl.BlockSpec((R, E), row),       # key rows
            pl.BlockSpec((R, E), row),       # value rows
            pl.BlockSpec((E, E), fixed),     # wq
            pl.BlockSpec((1, E), fixed),     # bq
            pl.BlockSpec((E, E), fixed),     # wk
            pl.BlockSpec((1, E), fixed),     # bk
            pl.BlockSpec((E, E), fixed),     # wv
            pl.BlockSpec((1, E), fixed),     # bv
            pl.BlockSpec((E, E), fixed),     # wo
            pl.BlockSpec((1, E), fixed),     # bo
            pl.BlockSpec((1, E), fixed),     # gamma1
            pl.BlockSpec((1, E), fixed),     # beta1
            pl.BlockSpec((E, F), fixed),     # w1
            pl.BlockSpec((1, F), fixed),     # b1
            pl.BlockSpec((F, E), fixed),     # w2
            pl.BlockSpec((1, E), fixed),     # b2
            pl.BlockSpec((1, E), fixed),     # gamma2
            pl.BlockSpec((1, E), fixed),     # beta2
        ],
        out_specs=pl.BlockSpec((R, E), row),
        compiler_params=pltpu.CompilerParams(
            dimension_semantics=("parallel",),
        ),
    )(
        q2, k2, v2,
        wq, params["bq"], wk, params["bk"], wv, params["bv"],
        wo, params["bo"],
        params["g1"], params["beta1"],
        w1, params["b1"], w2, params["b2"],
        params["g2"], params["beta2"],
    )

    return jnp.transpose(out.reshape(N, L, E), (1, 0, 2))  # back to (L, N, E)


# ----------------------------------------------------------------------------- reference (pure JAX, f32)


def reference_forward(value, key, query, params):
    L, N, E = query.shape
    H = params["heads"]
    hd = E // H
    scale = 1.0 / (hd ** 0.5)

    def lin(x, w, b):
        return x @ w + b

    q = lin(query.reshape(L * N, E), params["wq"], params["bq"])
    k = lin(key.reshape(L * N, E), params["wk"], params["bk"])
    v = lin(value.reshape(L * N, E), params["wv"], params["bv"])

    def to_heads(x):
        return x.reshape(L, N * H, hd).transpose(1, 0, 2)

    qh, kh, vh = to_heads(q), to_heads(k), to_heads(v)
    s = jnp.einsum("bqd,bkd->bqk", qh * scale, kh)
    p = jax.nn.softmax(s, axis=-1)
    a = jnp.einsum("bqk,bkd->bqd", p, vh)
    a2 = a.transpose(1, 0, 2).reshape(L * N, E)
    attn_out = lin(a2, params["wo"], params["bo"])

    def ln(z, g, b):
        mu = jnp.mean(z, axis=-1, keepdims=True)
        var = jnp.mean((z - mu) ** 2, axis=-1, keepdims=True)
        return (z - mu) / jnp.sqrt(var + EPS) * g + b

    x = ln(attn_out + query.reshape(L * N, E), params["g1"], params["beta1"])
    h = jnp.maximum(x @ params["w1"] + params["b1"], 0.0)
    ff = h @ params["w2"] + params["b2"]
    out = ln(ff + x, params["g2"], params["beta2"])
    return out.reshape(L, N, E)


# ----------------------------------------------------------------------------- main


def init_params(key, E, H, FE):
    keys = jax.random.split(key, 12)
    s = 0.05
    F = FE * E
    return {
        "heads": H,
        # attention in-projections (stored as (in, out))
        "wq": s * jax.random.normal(keys[0], (E, E), jnp.float32),
        "wk": s * jax.random.normal(keys[1], (E, E), jnp.float32),
        "wv": s * jax.random.normal(keys[2], (E, E), jnp.float32),
        "bq": s * jax.random.normal(keys[3], (1, E), jnp.float32),
        "bk": s * jax.random.normal(keys[4], (1, E), jnp.float32),
        "bv": s * jax.random.normal(keys[5], (1, E), jnp.float32),
        # attention out projection
        "wo": s * jax.random.normal(keys[6], (E, E), jnp.float32),
        "bo": s * jax.random.normal(keys[7], (1, E), jnp.float32),
        # layer norms
        "g1": jnp.ones((1, E), jnp.float32),
        "beta1": jnp.zeros((1, E), jnp.float32),
        "g2": jnp.ones((1, E), jnp.float32),
        "beta2": jnp.zeros((1, E), jnp.float32),
        # feed-forward
        "w1": s * jax.random.normal(keys[8], (E, F), jnp.float32),
        "b1": s * jax.random.normal(keys[9], (1, F), jnp.float32),
        "w2": s * jax.random.normal(keys[10], (F, E), jnp.float32),
        "b2": s * jax.random.normal(keys[11], (1, E), jnp.float32),
    }


if __name__ == "__main__":
    L, N, E, H, FE = 8, 2, 128, 8, 8  # seq=8, batch=2, embed=128, heads=8, forward_expansion=8

    root = jax.random.PRNGKey(0)
    kq, kk, kv, kp = jax.random.split(root, 4)
    query = jax.random.normal(kq, (L, N, E), jnp.float32)
    key_in = jax.random.normal(kk, (L, N, E), jnp.float32)
    value = jax.random.normal(kv, (L, N, E), jnp.float32)
    params = init_params(kp, E, H, FE)

    out = transformer_block_forward(value, key_in, query, params)
    out = jax.block_until_ready(out)

    ref = reference_forward(value, key_in, query, params)
    assert out.shape == (L, N, E)
    # bf16 MXU operands + approx reciprocal vs f32 reference -> slightly wider tolerance
    assert jnp.allclose(out, ref, rtol=2e-2, atol=2e-2), "mismatch vs pure-JAX reference"

    print("KERNEL_OK")
</pallas_src>

<mosaic_0001>
module attributes {stable_mosaic.version = 11 : i64} {
  func.func @_transformer_block_kernel(%arg0: i32, %arg1: memref<16x128xf32, #tpu.memory_space<vmem>>, %arg2: memref<16x128xf32, #tpu.memory_space<vmem>>, %arg3: memref<16x128xf32, #tpu.memory_space<vmem>>, %arg4: memref<128x128xbf16, #tpu.memory_space<vmem>>, %arg5: memref<1x128xf32, #tpu.memory_space<vmem>>, %arg6: memref<128x128xbf16, #tpu.memory_space<vmem>>, %arg7: memref<1x128xf32, #tpu.memory_space<vmem>>, %arg8: memref<128x128xbf16, #tpu.memory_space<vmem>>, %arg9: memref<1x128xf32, #tpu.memory_space<vmem>>, %arg10: memref<128x128xbf16, #tpu.memory_space<vmem>>, %arg11: memref<1x128xf32, #tpu.memory_space<vmem>>, %arg12: memref<1x128xf32, #tpu.memory_space<vmem>>, %arg13: memref<1x128xf32, #tpu.memory_space<vmem>>, %arg14: memref<128x1024xbf16, #tpu.memory_space<vmem>>, %arg15: memref<1x1024xf32, #tpu.memory_space<vmem>>, %arg16: memref<1024x128xbf16, #tpu.memory_space<vmem>>, %arg17: memref<1x128xf32, #tpu.memory_space<vmem>>, %arg18: memref<1x128xf32, #tpu.memory_space<vmem>>, %arg19: memref<1x128xf32, #tpu.memory_space<vmem>>, %arg20: memref<16x128xf32, #tpu.memory_space<vmem>>) attributes {dimension_semantics = [#tpu.dimension_semantics<parallel>], iteration_bounds = array<i64: 1>, scalar_prefetch = 0 : i64, scratch_operands = 0 : i64, tpu.core_type = #tpu.core_type<tc>, window_params = [{transform_indices = @transform_0, window_bounds = array<i64: 16, 128>}, {transform_indices = @transform_1, window_bounds = array<i64: 16, 128>}, {transform_indices = @transform_2, window_bounds = array<i64: 16, 128>}, {pipeline_mode = #tpu.pipeline_mode<synchronous>, transform_indices = @transform_3, window_bounds = array<i64: 128, 128>}, {pipeline_mode = #tpu.pipeline_mode<synchronous>, transform_indices = @transform_4, window_bounds = array<i64: 1, 128>}, {pipeline_mode = #tpu.pipeline_mode<synchronous>, transform_indices = @transform_5, window_bounds = array<i64: 128, 128>}, {pipeline_mode = #tpu.pipeline_mode<synchronous>, transform_indices = @transform_6, window_bounds = array<i64: 1, 128>}, {pipeline_mode = #tpu.pipeline_mode<synchronous>, transform_indices = @transform_7, window_bounds = array<i64: 128, 128>}, {pipeline_mode = #tpu.pipeline_mode<synchronous>, transform_indices = @transform_8, window_bounds = array<i64: 1, 128>}, {pipeline_mode = #tpu.pipeline_mode<synchronous>, transform_indices = @transform_9, window_bounds = array<i64: 128, 128>}, {pipeline_mode = #tpu.pipeline_mode<synchronous>, transform_indices = @transform_10, window_bounds = array<i64: 1, 128>}, {pipeline_mode = #tpu.pipeline_mode<synchronous>, transform_indices = @transform_11, window_bounds = array<i64: 1, 128>}, {pipeline_mode = #tpu.pipeline_mode<synchronous>, transform_indices = @transform_12, window_bounds = array<i64: 1, 128>}, {pipeline_mode = #tpu.pipeline_mode<synchronous>, transform_indices = @transform_13, window_bounds = array<i64: 128, 1024>}, {pipeline_mode = #tpu.pipeline_mode<synchronous>, transform_indices = @transform_14, window_bounds = array<i64: 1, 1024>}, {pipeline_mode = #tpu.pipeline_mode<synchronous>, transform_indices = @transform_15, window_bounds = array<i64: 1024, 128>}, {pipeline_mode = #tpu.pipeline_mode<synchronous>, transform_indices = @transform_16, window_bounds = array<i64: 1, 128>}, {pipeline_mode = #tpu.pipeline_mode<synchronous>, transform_indices = @transform_17, window_bounds = array<i64: 1, 128>}, {pipeline_mode = #tpu.pipeline_mode<synchronous>, transform_indices = @transform_18, window_bounds = array<i64: 1, 128>}, {transform_indices = @transform_19, window_bounds = array<i64: 16, 128>}]} {
    %c0 = arith.constant 0 : index
    %c0_0 = arith.constant 0 : index
    %0 = vector.load %arg1[%c0, %c0_0] : memref<16x128xf32, #tpu.memory_space<vmem>>, vector<16x128xf32>
    %c0_1 = arith.constant 0 : index
    %c0_2 = arith.constant 0 : index
    %1 = vector.load %arg2[%c0_1, %c0_2] : memref<16x128xf32, #tpu.memory_space<vmem>>, vector<16x128xf32>
    %c0_3 = arith.constant 0 : index
    %c0_4 = arith.constant 0 : index
    %2 = vector.load %arg3[%c0_3, %c0_4] : memref<16x128xf32, #tpu.memory_space<vmem>>, vector<16x128xf32>
    %3 = arith.truncf %0 : vector<16x128xf32> to vector<16x128xbf16>
    %c0_5 = arith.constant 0 : index
    %c0_6 = arith.constant 0 : index
    %4 = vector.load %arg4[%c0_5, %c0_6] : memref<128x128xbf16, #tpu.memory_space<vmem>>, vector<128x128xbf16>
    %cst = arith.constant dense<0.000000e+00> : vector<16x128xf32>
    %5 = tpu.matmul %3, %4, %cst {dimension_numbers = #tpu.dot_dimension_numbers<[1], [0], [0], [1], [0, 0, 1, 1], [], []>} : vector<16x128xbf16>, vector<128x128xbf16>, vector<16x128xf32> -> vector<16x128xf32>
    %c0_7 = arith.constant 0 : index
    %c0_8 = arith.constant 0 : index
    %6 = vector.load %arg5[%c0_7, %c0_8] : memref<1x128xf32, #tpu.memory_space<vmem>>, vector<1x128xf32>
    %7 = vector.broadcast %6 : vector<1x128xf32> to vector<16x128xf32>
    %8 = arith.addf %5, %7 : vector<16x128xf32>
    %9 = arith.truncf %1 : vector<16x128xf32> to vector<16x128xbf16>
    %c0_9 = arith.constant 0 : index
    %c0_10 = arith.constant 0 : index
    %10 = vector.load %arg6[%c0_9, %c0_10] : memref<128x128xbf16, #tpu.memory_space<vmem>>, vector<128x128xbf16>
    %cst_11 = arith.constant dense<0.000000e+00> : vector<16x128xf32>
    %11 = tpu.matmul %9, %10, %cst_11 {dimension_numbers = #tpu.dot_dimension_numbers<[1], [0], [0], [1], [0, 0, 1, 1], [], []>} : vector<16x128xbf16>, vector<128x128xbf16>, vector<16x128xf32> -> vector<16x128xf32>
    %c0_12 = arith.constant 0 : index
    %c0_13 = arith.constant 0 : index
    %12 = vector.load %arg7[%c0_12, %c0_13] : memref<1x128xf32, #tpu.memory_space<vmem>>, vector<1x128xf32>
    %13 = vector.broadcast %12 : vector<1x128xf32> to vector<16x128xf32>
    %14 = arith.addf %11, %13 : vector<16x128xf32>
    %15 = arith.truncf %2 : vector<16x128xf32> to vector<16x128xbf16>
    %c0_14 = arith.constant 0 : index
    %c0_15 = arith.constant 0 : index
    %16 = vector.load %arg8[%c0_14, %c0_15] : memref<128x128xbf16, #tpu.memory_space<vmem>>, vector<128x128xbf16>
    %cst_16 = arith.constant dense<0.000000e+00> : vector<16x128xf32>
    %17 = tpu.matmul %15, %16, %cst_16 {dimension_numbers = #tpu.dot_dimension_numbers<[1], [0], [0], [1], [0, 0, 1, 1], [], []>} : vector<16x128xbf16>, vector<128x128xbf16>, vector<16x128xf32> -> vector<16x128xf32>
    %c0_17 = arith.constant 0 : index
    %c0_18 = arith.constant 0 : index
    %18 = vector.load %arg9[%c0_17, %c0_18] : memref<1x128xf32, #tpu.memory_space<vmem>>, vector<1x128xf32>
    %19 = vector.broadcast %18 : vector<1x128xf32> to vector<16x128xf32>
    %20 = arith.addf %17, %19 : vector<16x128xf32>
    %cst_19 = arith.constant 2.500000e-01 : f32
    %21 = vector.broadcast %cst_19 : f32 to vector<16x128xf32>
    %22 = arith.mulf %8, %21 : vector<16x128xf32>
    %23 = arith.truncf %22 : vector<16x128xf32> to vector<16x128xbf16>
    %24 = arith.truncf %14 : vector<16x128xf32> to vector<16x128xbf16>
    %25 = arith.truncf %20 : vector<16x128xf32> to vector<16x128xbf16>
    %26 = vector.extract_strided_slice %23 {offsets = [0, 0], sizes = [8, 16], strides = [1, 1]} : vector<16x128xbf16> to vector<8x16xbf16>
    %27 = vector.extract_strided_slice %24 {offsets = [0, 0], sizes = [8, 16], strides = [1, 1]} : vector<16x128xbf16> to vector<8x16xbf16>
    %28 = vector.extract_strided_slice %25 {offsets = [0, 0], sizes = [8, 16], strides = [1, 1]} : vector<16x128xbf16> to vector<8x16xbf16>
    %cst_20 = arith.constant dense<0.000000e+00> : vector<8x8xf32>
    %29 = tpu.matmul %26, %27, %cst_20 {dimension_numbers = #tpu.dot_dimension_numbers<[1], [1], [0], [0], [0, 0, 1, 0], [], []>} : vector<8x16xbf16>, vector<8x16xbf16>, vector<8x8xf32> -> vector<8x8xf32>
    %cst_21 = arith.constant dense<0xFF800000> : vector<8xf32>
    %30 = vector.multi_reduction <maximumf>, %29, %cst_21 [1] : vector<8x8xf32> to vector<8xf32>
    %31 = vector.shape_cast %30 : vector<8xf32> to vector<8x1xf32>
    %32 = vector.broadcast %31 : vector<8x1xf32> to vector<8x8xf32>
    %33 = arith.subf %29, %32 : vector<8x8xf32>
    %34 = math.exp %33 : vector<8x8xf32>
    %cst_22 = arith.constant dense<0.000000e+00> : vector<8xf32>
    %35 = vector.multi_reduction <add>, %34, %cst_22 [1] : vector<8x8xf32> to vector<8xf32>
    %36 = vector.shape_cast %35 : vector<8xf32> to vector<8x1xf32>
    %37 = tpu.reciprocal %36 {approx = true} : vector<8x1xf32> -> vector<8x1xf32>
    %38 = vector.broadcast %37 : vector<8x1xf32> to vector<8x8xf32>
    %39 = arith.mulf %34, %38 : vector<8x8xf32>
    %40 = arith.truncf %39 : vector<8x8xf32> to vector<8x8xbf16>
    %cst_23 = arith.constant dense<0.000000e+00> : vector<8x16xf32>
    %41 = tpu.matmul %40, %28, %cst_23 {dimension_numbers = #tpu.dot_dimension_numbers<[1], [0], [0], [1], [0, 0, 1, 1], [], []>} : vector<8x8xbf16>, vector<8x16xbf16>, vector<8x16xf32> -> vector<8x16xf32>
    %42 = vector.extract_strided_slice %23 {offsets = [0, 16], sizes = [8, 16], strides = [1, 1]} : vector<16x128xbf16> to vector<8x16xbf16>
    %43 = vector.extract_strided_slice %24 {offsets = [0, 16], sizes = [8, 16], strides = [1, 1]} : vector<16x128xbf16> to vector<8x16xbf16>
    %44 = vector.extract_strided_slice %25 {offsets = [0, 16], sizes = [8, 16], strides = [1, 1]} : vector<16x128xbf16> to vector<8x16xbf16>
    %cst_24 = arith.constant dense<0.000000e+00> : vector<8x8xf32>
    %45 = tpu.matmul %42, %43, %cst_24 {dimension_numbers = #tpu.dot_dimension_numbers<[1], [1], [0], [0], [0, 0, 1, 0], [], []>} : vector<8x16xbf16>, vector<8x16xbf16>, vector<8x8xf32> -> vector<8x8xf32>
    %cst_25 = arith.constant dense<0xFF800000> : vector<8xf32>
    %46 = vector.multi_reduction <maximumf>, %45, %cst_25 [1] : vector<8x8xf32> to vector<8xf32>
    %47 = vector.shape_cast %46 : vector<8xf32> to vector<8x1xf32>
    %48 = vector.broadcast %47 : vector<8x1xf32> to vector<8x8xf32>
    %49 = arith.subf %45, %48 : vector<8x8xf32>
    %50 = math.exp %49 : vector<8x8xf32>
    %cst_26 = arith.constant dense<0.000000e+00> : vector<8xf32>
    %51 = vector.multi_reduction <add>, %50, %cst_26 [1] : vector<8x8xf32> to vector<8xf32>
    %52 = vector.shape_cast %51 : vector<8xf32> to vector<8x1xf32>
    %53 = tpu.reciprocal %52 {approx = true} : vector<8x1xf32> -> vector<8x1xf32>
    %54 = vector.broadcast %53 : vector<8x1xf32> to vector<8x8xf32>
    %55 = arith.mulf %50, %54 : vector<8x8xf32>
    %56 = arith.truncf %55 : vector<8x8xf32> to vector<8x8xbf16>
    %cst_27 = arith.constant dense<0.000000e+00> : vector<8x16xf32>
    %57 = tpu.matmul %56, %44, %cst_27 {dimension_numbers = #tpu.dot_dimension_numbers<[1], [0], [0], [1], [0, 0, 1, 1], [], []>} : vector<8x8xbf16>, vector<8x16xbf16>, vector<8x16xf32> -> vector<8x16xf32>
    %58 = vector.extract_strided_slice %23 {offsets = [0, 32], sizes = [8, 16], strides = [1, 1]} : vector<16x128xbf16> to vector<8x16xbf16>
    %59 = vector.extract_strided_slice %24 {offsets = [0, 32], sizes = [8, 16], strides = [1, 1]} : vector<16x128xbf16> to vector<8x16xbf16>
    %60 = vector.extract_strided_slice %25 {offsets = [0, 32], sizes = [8, 16], strides = [1, 1]} : vector<16x128xbf16> to vector<8x16xbf16>
    %cst_28 = arith.constant dense<0.000000e+00> : vector<8x8xf32>
    %61 = tpu.matmul %58, %59, %cst_28 {dimension_numbers = #tpu.dot_dimension_numbers<[1], [1], [0], [0], [0, 0, 1, 0], [], []>} : vector<8x16xbf16>, vector<8x16xbf16>, vector<8x8xf32> -> vector<8x8xf32>
    %cst_29 = arith.constant dense<0xFF800000> : vector<8xf32>
    %62 = vector.multi_reduction <maximumf>, %61, %cst_29 [1] : vector<8x8xf32> to vector<8xf32>
    %63 = vector.shape_cast %62 : vector<8xf32> to vector<8x1xf32>
    %64 = vector.broadcast %63 : vector<8x1xf32> to vector<8x8xf32>
    %65 = arith.subf %61, %64 : vector<8x8xf32>
    %66 = math.exp %65 : vector<8x8xf32>
    %cst_30 = arith.constant dense<0.000000e+00> : vector<8xf32>
    %67 = vector.multi_reduction <add>, %66, %cst_30 [1] : vector<8x8xf32> to vector<8xf32>
    %68 = vector.shape_cast %67 : vector<8xf32> to vector<8x1xf32>
    %69 = tpu.reciprocal %68 {approx = true} : vector<8x1xf32> -> vector<8x1xf32>
    %70 = vector.broadcast %69 : vector<8x1xf32> to vector<8x8xf32>
    %71 = arith.mulf %66, %70 : vector<8x8xf32>
    %72 = arith.truncf %71 : vector<8x8xf32> to vector<8x8xbf16>
    %cst_31 = arith.constant dense<0.000000e+00> : vector<8x16xf32>
    %73 = tpu.matmul %72, %60, %cst_31 {dimension_numbers = #tpu.dot_dimension_numbers<[1], [0], [0], [1], [0, 0, 1, 1], [], []>} : vector<8x8xbf16>, vector<8x16xbf16>, vector<8x16xf32> -> vector<8x16xf32>
    %74 = vector.extract_strided_slice %23 {offsets = [0, 48], sizes = [8, 16], strides = [1, 1]} : vector<16x128xbf16> to vector<8x16xbf16>
    %75 = vector.extract_strided_slice %24 {offsets = [0, 48], sizes = [8, 16], strides = [1, 1]} : vector<16x128xbf16> to vector<8x16xbf16>
    %76 = vector.extract_strided_slice %25 {offsets = [0, 48], sizes = [8, 16], strides = [1, 1]} : vector<16x128xbf16> to vector<8x16xbf16>
    %cst_32 = arith.constant dense<0.000000e+00> : vector<8x8xf32>
    %77 = tpu.matmul %74, %75, %cst_32 {dimension_numbers = #tpu.dot_dimension_numbers<[1], [1], [0], [0], [0, 0, 1, 0], [], []>} : vector<8x16xbf16>, vector<8x16xbf16>, vector<8x8xf32> -> vector<8x8xf32>
    %cst_33 = arith.constant dense<0xFF800000> : vector<8xf32>
    %78 = vector.multi_reduction <maximumf>, %77, %cst_33 [1] : vector<8x8xf32> to vector<8xf32>
    %79 = vector.shape_cast %78 : vector<8xf32> to vector<8x1xf32>
    %80 = vector.broadcast %79 : vector<8x1xf32> to vector<8x8xf32>
    %81 = arith.subf %77, %80 : vector<8x8xf32>
    %82 = math.exp %81 : vector<8x8xf32>
    %cst_34 = arith.constant dense<0.000000e+00> : vector<8xf32>
    %83 = vector.multi_reduction <add>, %82, %cst_34 [1] : vector<8x8xf32> to vector<8xf32>
    %84 = vector.shape_cast %83 : vector<8xf32> to vector<8x1xf32>
    %85 = tpu.reciprocal %84 {approx = true} : vector<8x1xf32> -> vector<8x1xf32>
    %86 = vector.broadcast %85 : vector<8x1xf32> to vector<8x8xf32>
    %87 = arith.mulf %82, %86 : vector<8x8xf32>
    %88 = arith.truncf %87 : vector<8x8xf32> to vector<8x8xbf16>
    %cst_35 = arith.constant dense<0.000000e+00> : vector<8x16xf32>
    %89 = tpu.matmul %88, %76, %cst_35 {dimension_numbers = #tpu.dot_dimension_numbers<[1], [0], [0], [1], [0, 0, 1, 1], [], []>} : vector<8x8xbf16>, vector<8x16xbf16>, vector<8x16xf32> -> vector<8x16xf32>
    %90 = vector.extract_strided_slice %23 {offsets = [0, 64], sizes = [8, 16], strides = [1, 1]} : vector<16x128xbf16> to vector<8x16xbf16>
    %91 = vector.extract_strided_slice %24 {offsets = [0, 64], sizes = [8, 16], strides = [1, 1]} : vector<16x128xbf16> to vector<8x16xbf16>
    %92 = vector.extract_strided_slice %25 {offsets = [0, 64], sizes = [8, 16], strides = [1, 1]} : vector<16x128xbf16> to vector<8x16xbf16>
    %cst_36 = arith.constant dense<0.000000e+00> : vector<8x8xf32>
    %93 = tpu.matmul %90, %91, %cst_36 {dimension_numbers = #tpu.dot_dimension_numbers<[1], [1], [0], [0], [0, 0, 1, 0], [], []>} : vector<8x16xbf16>, vector<8x16xbf16>, vector<8x8xf32> -> vector<8x8xf32>
    %cst_37 = arith.constant dense<0xFF800000> : vector<8xf32>
    %94 = vector.multi_reduction <maximumf>, %93, %cst_37 [1] : vector<8x8xf32> to vector<8xf32>
    %95 = vector.shape_cast %94 : vector<8xf32> to vector<8x1xf32>
    %96 = vector.broadcast %95 : vector<8x1xf32> to vector<8x8xf32>
    %97 = arith.subf %93, %96 : vector<8x8xf32>
    %98 = math.exp %97 : vector<8x8xf32>
    %cst_38 = arith.constant dense<0.000000e+00> : vector<8xf32>
    %99 = vector.multi_reduction <add>, %98, %cst_38 [1] : vector<8x8xf32> to vector<8xf32>
    %100 = vector.shape_cast %99 : vector<8xf32> to vector<8x1xf32>
    %101 = tpu.reciprocal %100 {approx = true} : vector<8x1xf32> -> vector<8x1xf32>
    %102 = vector.broadcast %101 : vector<8x1xf32> to vector<8x8xf32>
    %103 = arith.mulf %98, %102 : vector<8x8xf32>
    %104 = arith.truncf %103 : vector<8x8xf32> to vector<8x8xbf16>
    %cst_39 = arith.constant dense<0.000000e+00> : vector<8x16xf32>
    %105 = tpu.matmul %104, %92, %cst_39 {dimension_numbers = #tpu.dot_dimension_numbers<[1], [0], [0], [1], [0, 0, 1, 1], [], []>} : vector<8x8xbf16>, vector<8x16xbf16>, vector<8x16xf32> -> vector<8x16xf32>
    %106 = vector.extract_strided_slice %23 {offsets = [0, 80], sizes = [8, 16], strides = [1, 1]} : vector<16x128xbf16> to vector<8x16xbf16>
    %107 = vector.extract_strided_slice %24 {offsets = [0, 80], sizes = [8, 16], strides = [1, 1]} : vector<16x128xbf16> to vector<8x16xbf16>
    %108 = vector.extract_strided_slice %25 {offsets = [0, 80], sizes = [8, 16], strides = [1, 1]} : vector<16x128xbf16> to vector<8x16xbf16>
    %cst_40 = arith.constant dense<0.000000e+00> : vector<8x8xf32>
    %109 = tpu.matmul %106, %107, %cst_40 {dimension_numbers = #tpu.dot_dimension_numbers<[1], [1], [0], [0], [0, 0, 1, 0], [], []>} : vector<8x16xbf16>, vector<8x16xbf16>, vector<8x8xf32> -> vector<8x8xf32>
    %cst_41 = arith.constant dense<0xFF800000> : vector<8xf32>
    %110 = vector.multi_reduction <maximumf>, %109, %cst_41 [1] : vector<8x8xf32> to vector<8xf32>
    %111 = vector.shape_cast %110 : vector<8xf32> to vector<8x1xf32>
    %112 = vector.broadcast %111 : vector<8x1xf32> to vector<8x8xf32>
    %113 = arith.subf %109, %112 : vector<8x8xf32>
    %114 = math.exp %113 : vector<8x8xf32>
    %cst_42 = arith.constant dense<0.000000e+00> : vector<8xf32>
    %115 = vector.multi_reduction <add>, %114, %cst_42 [1] : vector<8x8xf32> to vector<8xf32>
    %116 = vector.shape_cast %115 : vector<8xf32> to vector<8x1xf32>
    %117 = tpu.reciprocal %116 {approx = true} : vector<8x1xf32> -> vector<8x1xf32>
    %118 = vector.broadcast %117 : vector<8x1xf32> to vector<8x8xf32>
    %119 = arith.mulf %114, %118 : vector<8x8xf32>
    %120 = arith.truncf %119 : vector<8x8xf32> to vector<8x8xbf16>
    %cst_43 = arith.constant dense<0.000000e+00> : vector<8x16xf32>
    %121 = tpu.matmul %120, %108, %cst_43 {dimension_numbers = #tpu.dot_dimension_numbers<[1], [0], [0], [1], [0, 0, 1, 1], [], []>} : vector<8x8xbf16>, vector<8x16xbf16>, vector<8x16xf32> -> vector<8x16xf32>
    %122 = vector.extract_strided_slice %23 {offsets = [0, 96], sizes = [8, 16], strides = [1, 1]} : vector<16x128xbf16> to vector<8x16xbf16>
    %123 = vector.extract_strided_slice %24 {offsets = [0, 96], sizes = [8, 16], strides = [1, 1]} : vector<16x128xbf16> to vector<8x16xbf16>
    %124 = vector.extract_strided_slice %25 {offsets = [0, 96], sizes = [8, 16], strides = [1, 1]} : vector<16x128xbf16> to vector<8x16xbf16>
    %cst_44 = arith.constant dense<0.000000e+00> : vector<8x8xf32>
    %125 = tpu.matmul %122, %123, %cst_44 {dimension_numbers = #tpu.dot_dimension_numbers<[1], [1], [0], [0], [0, 0, 1, 0], [], []>} : vector<8x16xbf16>, vector<8x16xbf16>, vector<8x8xf32> -> vector<8x8xf32>
    %cst_45 = arith.constant dense<0xFF800000> : vector<8xf32>
    %126 = vector.multi_reduction <maximumf>, %125, %cst_45 [1] : vector<8x8xf32> to vector<8xf32>
    %127 = vector.shape_cast %126 : vector<8xf32> to vector<8x1xf32>
    %128 = vector.broadcast %127 : vector<8x1xf32> to vector<8x8xf32>
    %129 = arith.subf %125, %128 : vector<8x8xf32>
    %130 = math.exp %129 : vector<8x8xf32>
    %cst_46 = arith.constant dense<0.000000e+00> : vector<8xf32>
    %131 = vector.multi_reduction <add>, %130, %cst_46 [1] : vector<8x8xf32> to vector<8xf32>
    %132 = vector.shape_cast %131 : vector<8xf32> to vector<8x1xf32>
    %133 = tpu.reciprocal %132 {approx = true} : vector<8x1xf32> -> vector<8x1xf32>
    %134 = vector.broadcast %133 : vector<8x1xf32> to vector<8x8xf32>
    %135 = arith.mulf %130, %134 : vector<8x8xf32>
    %136 = arith.truncf %135 : vector<8x8xf32> to vector<8x8xbf16>
    %cst_47 = arith.constant dense<0.000000e+00> : vector<8x16xf32>
    %137 = tpu.matmul %136, %124, %cst_47 {dimension_numbers = #tpu.dot_dimension_numbers<[1], [0], [0], [1], [0, 0, 1, 1], [], []>} : vector<8x8xbf16>, vector<8x16xbf16>, vector<8x16xf32> -> vector<8x16xf32>
    %138 = vector.extract_strided_slice %23 {offsets = [0, 112], sizes = [8, 16], strides = [1, 1]} : vector<16x128xbf16> to vector<8x16xbf16>
    %139 = vector.extract_strided_slice %24 {offsets = [0, 112], sizes = [8, 16], strides = [1, 1]} : vector<16x128xbf16> to vector<8x16xbf16>
    %140 = vector.extract_strided_slice %25 {offsets = [0, 112], sizes = [8, 16], strides = [1, 1]} : vector<16x128xbf16> to vector<8x16xbf16>
    %cst_48 = arith.constant dense<0.000000e+00> : vector<8x8xf32>
    %141 = tpu.matmul %138, %139, %cst_48 {dimension_numbers = #tpu.dot_dimension_numbers<[1], [1], [0], [0], [0, 0, 1, 0], [], []>} : vector<8x16xbf16>, vector<8x16xbf16>, vector<8x8xf32> -> vector<8x8xf32>
    %cst_49 = arith.constant dense<0xFF800000> : vector<8xf32>
    %142 = vector.multi_reduction <maximumf>, %141, %cst_49 [1] : vector<8x8xf32> to vector<8xf32>
    %143 = vector.shape_cast %142 : vector<8xf32> to vector<8x1xf32>
    %144 = vector.broadcast %143 : vector<8x1xf32> to vector<8x8xf32>
    %145 = arith.subf %141, %144 : vector<8x8xf32>
    %146 = math.exp %145 : vector<8x8xf32>
    %cst_50 = arith.constant dense<0.000000e+00> : vector<8xf32>
    %147 = vector.multi_reduction <add>, %146, %cst_50 [1] : vector<8x8xf32> to vector<8xf32>
    %148 = vector.shape_cast %147 : vector<8xf32> to vector<8x1xf32>
    %149 = tpu.reciprocal %148 {approx = true} : vector<8x1xf32> -> vector<8x1xf32>
    %150 = vector.broadcast %149 : vector<8x1xf32> to vector<8x8xf32>
    %151 = arith.mulf %146, %150 : vector<8x8xf32>
    %152 = arith.truncf %151 : vector<8x8xf32> to vector<8x8xbf16>
    %cst_51 = arith.constant dense<0.000000e+00> : vector<8x16xf32>
    %153 = tpu.matmul %152, %140, %cst_51 {dimension_numbers = #tpu.dot_dimension_numbers<[1], [0], [0], [1], [0, 0, 1, 1], [], []>} : vector<8x8xbf16>, vector<8x16xbf16>, vector<8x16xf32> -> vector<8x16xf32>
    %154 = tpu.concatenate %41, %57, %73, %89, %105, %121, %137, %153 in 1 : vector<8x16xf32>, vector<8x16xf32>, vector<8x16xf32>, vector<8x16xf32>, vector<8x16xf32>, vector<8x16xf32>, vector<8x16xf32>, vector<8x16xf32> -> vector<8x128xf32>
    %155 = vector.extract_strided_slice %23 {offsets = [8, 0], sizes = [8, 16], strides = [1, 1]} : vector<16x128xbf16> to vector<8x16xbf16>
    %156 = vector.extract_strided_slice %24 {offsets = [8, 0], sizes = [8, 16], strides = [1, 1]} : vector<16x128xbf16> to vector<8x16xbf16>
    %157 = vector.extract_strided_slice %25 {offsets = [8, 0], sizes = [8, 16], strides = [1, 1]} : vector<16x128xbf16> to vector<8x16xbf16>
    %cst_52 = arith.constant dense<0.000000e+00> : vector<8x8xf32>
    %158 = tpu.matmul %155, %156, %cst_52 {dimension_numbers = #tpu.dot_dimension_numbers<[1], [1], [0], [0], [0, 0, 1, 0], [], []>} : vector<8x16xbf16>, vector<8x16xbf16>, vector<8x8xf32> -> vector<8x8xf32>
    %cst_53 = arith.constant dense<0xFF800000> : vector<8xf32>
    %159 = vector.multi_reduction <maximumf>, %158, %cst_53 [1] : vector<8x8xf32> to vector<8xf32>
    %160 = vector.shape_cast %159 : vector<8xf32> to vector<8x1xf32>
    %161 = vector.broadcast %160 : vector<8x1xf32> to vector<8x8xf32>
    %162 = arith.subf %158, %161 : vector<8x8xf32>
    %163 = math.exp %162 : vector<8x8xf32>
    %cst_54 = arith.constant dense<0.000000e+00> : vector<8xf32>
    %164 = vector.multi_reduction <add>, %163, %cst_54 [1] : vector<8x8xf32> to vector<8xf32>
    %165 = vector.shape_cast %164 : vector<8xf32> to vector<8x1xf32>
    %166 = tpu.reciprocal %165 {approx = true} : vector<8x1xf32> -> vector<8x1xf32>
    %167 = vector.broadcast %166 : vector<8x1xf32> to vector<8x8xf32>
    %168 = arith.mulf %163, %167 : vector<8x8xf32>
    %169 = arith.truncf %168 : vector<8x8xf32> to vector<8x8xbf16>
    %cst_55 = arith.constant dense<0.000000e+00> : vector<8x16xf32>
    %170 = tpu.matmul %169, %157, %cst_55 {dimension_numbers = #tpu.dot_dimension_numbers<[1], [0], [0], [1], [0, 0, 1, 1], [], []>} : vector<8x8xbf16>, vector<8x16xbf16>, vector<8x16xf32> -> vector<8x16xf32>
    %171 = vector.extract_strided_slice %23 {offsets = [8, 16], sizes = [8, 16], strides = [1, 1]} : vector<16x128xbf16> to vector<8x16xbf16>
    %172 = vector.extract_strided_slice %24 {offsets = [8, 16], sizes = [8, 16], strides = [1, 1]} : vector<16x128xbf16> to vector<8x16xbf16>
    %173 = vector.extract_strided_slice %25 {offsets = [8, 16], sizes = [8, 16], strides = [1, 1]} : vector<16x128xbf16> to vector<8x16xbf16>
    %cst_56 = arith.constant dense<0.000000e+00> : vector<8x8xf32>
    %174 = tpu.matmul %171, %172, %cst_56 {dimension_numbers = #tpu.dot_dimension_numbers<[1], [1], [0], [0], [0, 0, 1, 0], [], []>} : vector<8x16xbf16>, vector<8x16xbf16>, vector<8x8xf32> -> vector<8x8xf32>
    %cst_57 = arith.constant dense<0xFF800000> : vector<8xf32>
    %175 = vector.multi_reduction <maximumf>, %174, %cst_57 [1] : vector<8x8xf32> to vector<8xf32>
    %176 = vector.shape_cast %175 : vector<8xf32> to vector<8x1xf32>
    %177 = vector.broadcast %176 : vector<8x1xf32> to vector<8x8xf32>
    %178 = arith.subf %174, %177 : vector<8x8xf32>
    %179 = math.exp %178 : vector<8x8xf32>
    %cst_58 = arith.constant dense<0.000000e+00> : vector<8xf32>
    %180 = vector.multi_reduction <add>, %179, %cst_58 [1] : vector<8x8xf32> to vector<8xf32>
    %181 = vector.shape_cast %180 : vector<8xf32> to vector<8x1xf32>
    %182 = tpu.reciprocal %181 {approx = true} : vector<8x1xf32> -> vector<8x1xf32>
    %183 = vector.broadcast %182 : vector<8x1xf32> to vector<8x8xf32>
    %184 = arith.mulf %179, %183 : vector<8x8xf32>
    %185 = arith.truncf %184 : vector<8x8xf32> to vector<8x8xbf16>
    %cst_59 = arith.constant dense<0.000000e+00> : vector<8x16xf32>
    %186 = tpu.matmul %185, %173, %cst_59 {dimension_numbers = #tpu.dot_dimension_numbers<[1], [0], [0], [1], [0, 0, 1, 1], [], []>} : vector<8x8xbf16>, vector<8x16xbf16>, vector<8x16xf32> -> vector<8x16xf32>
    %187 = vector.extract_strided_slice %23 {offsets = [8, 32], sizes = [8, 16], strides = [1, 1]} : vector<16x128xbf16> to vector<8x16xbf16>
    %188 = vector.extract_strided_slice %24 {offsets = [8, 32], sizes = [8, 16], strides = [1, 1]} : vector<16x128xbf16> to vector<8x16xbf16>
    %189 = vector.extract_strided_slice %25 {offsets = [8, 32], sizes = [8, 16], strides = [1, 1]} : vector<16x128xbf16> to vector<8x16xbf16>
    %cst_60 = arith.constant dense<0.000000e+00> : vector<8x8xf32>
    %190 = tpu.matmul %187, %188, %cst_60 {dimension_numbers = #tpu.dot_dimension_numbers<[1], [1], [0], [0], [0, 0, 1, 0], [], []>} : vector<8x16xbf16>, vector<8x16xbf16>, vector<8x8xf32> -> vector<8x8xf32>
    %cst_61 = arith.constant dense<0xFF800000> : vector<8xf32>
    %191 = vector.multi_reduction <maximumf>, %190, %cst_61 [1] : vector<8x8xf32> to vector<8xf32>
    %192 = vector.shape_cast %191 : vector<8xf32> to vector<8x1xf32>
    %193 = vector.broadcast %192 : vector<8x1xf32> to vector<8x8xf32>
    %194 = arith.subf %190, %193 : vector<8x8xf32>
    %195 = math.exp %194 : vector<8x8xf32>
    %cst_62 = arith.constant dense<0.000000e+00> : vector<8xf32>
    %196 = vector.multi_reduction <add>, %195, %cst_62 [1] : vector<8x8xf32> to vector<8xf32>
    %197 = vector.shape_cast %196 : vector<8xf32> to vector<8x1xf32>
    %198 = tpu.reciprocal %197 {approx = true} : vector<8x1xf32> -> vector<8x1xf32>
    %199 = vector.broadcast %198 : vector<8x1xf32> to vector<8x8xf32>
    %200 = arith.mulf %195, %199 : vector<8x8xf32>
    %201 = arith.truncf %200 : vector<8x8xf32> to vector<8x8xbf16>
    %cst_63 = arith.constant dense<0.000000e+00> : vector<8x16xf32>
    %202 = tpu.matmul %201, %189, %cst_63 {dimension_numbers = #tpu.dot_dimension_numbers<[1], [0], [0], [1], [0, 0, 1, 1], [], []>} : vector<8x8xbf16>, vector<8x16xbf16>, vector<8x16xf32> -> vector<8x16xf32>
    %203 = vector.extract_strided_slice %23 {offsets = [8, 48], sizes = [8, 16], strides = [1, 1]} : vector<16x128xbf16> to vector<8x16xbf16>
    %204 = vector.extract_strided_slice %24 {offsets = [8, 48], sizes = [8, 16], strides = [1, 1]} : vector<16x128xbf16> to vector<8x16xbf16>
    %205 = vector.extract_strided_slice %25 {offsets = [8, 48], sizes = [8, 16], strides = [1, 1]} : vector<16x128xbf16> to vector<8x16xbf16>
    %cst_64 = arith.constant dense<0.000000e+00> : vector<8x8xf32>
    %206 = tpu.matmul %203, %204, %cst_64 {dimension_numbers = #tpu.dot_dimension_numbers<[1], [1], [0], [0], [0, 0, 1, 0], [], []>} : vector<8x16xbf16>, vector<8x16xbf16>, vector<8x8xf32> -> vector<8x8xf32>
    %cst_65 = arith.constant dense<0xFF800000> : vector<8xf32>
    %207 = vector.multi_reduction <maximumf>, %206, %cst_65 [1] : vector<8x8xf32> to vector<8xf32>
    %208 = vector.shape_cast %207 : vector<8xf32> to vector<8x1xf32>
    %209 = vector.broadcast %208 : vector<8x1xf32> to vector<8x8xf32>
    %210 = arith.subf %206, %209 : vector<8x8xf32>
    %211 = math.exp %210 : vector<8x8xf32>
    %cst_66 = arith.constant dense<0.000000e+00> : vector<8xf32>
    %212 = vector.multi_reduction <add>, %211, %cst_66 [1] : vector<8x8xf32> to vector<8xf32>
    %213 = vector.shape_cast %212 : vector<8xf32> to vector<8x1xf32>
    %214 = tpu.reciprocal %213 {approx = true} : vector<8x1xf32> -> vector<8x1xf32>
    %215 = vector.broadcast %214 : vector<8x1xf32> to vector<8x8xf32>
    %216 = arith.mulf %211, %215 : vector<8x8xf32>
    %217 = arith.truncf %216 : vector<8x8xf32> to vector<8x8xbf16>
    %cst_67 = arith.constant dense<0.000000e+00> : vector<8x16xf32>
    %218 = tpu.matmul %217, %205, %cst_67 {dimension_numbers = #tpu.dot_dimension_numbers<[1], [0], [0], [1], [0, 0, 1, 1], [], []>} : vector<8x8xbf16>, vector<8x16xbf16>, vector<8x16xf32> -> vector<8x16xf32>
    %219 = vector.extract_strided_slice %23 {offsets = [8, 64], sizes = [8, 16], strides = [1, 1]} : vector<16x128xbf16> to vector<8x16xbf16>
    %220 = vector.extract_strided_slice %24 {offsets = [8, 64], sizes = [8, 16], strides = [1, 1]} : vector<16x128xbf16> to vector<8x16xbf16>
    %221 = vector.extract_strided_slice %25 {offsets = [8, 64], sizes = [8, 16], strides = [1, 1]} : vector<16x128xbf16> to vector<8x16xbf16>
    %cst_68 = arith.constant dense<0.000000e+00> : vector<8x8xf32>
    %222 = tpu.matmul %219, %220, %cst_68 {dimension_numbers = #tpu.dot_dimension_numbers<[1], [1], [0], [0], [0, 0, 1, 0], [], []>} : vector<8x16xbf16>, vector<8x16xbf16>, vector<8x8xf32> -> vector<8x8xf32>
    %cst_69 = arith.constant dense<0xFF800000> : vector<8xf32>
    %223 = vector.multi_reduction <maximumf>, %222, %cst_69 [1] : vector<8x8xf32> to vector<8xf32>
    %224 = vector.shape_cast %223 : vector<8xf32> to vector<8x1xf32>
    %225 = vector.broadcast %224 : vector<8x1xf32> to vector<8x8xf32>
    %226 = arith.subf %222, %225 : vector<8x8xf32>
    %227 = math.exp %226 : vector<8x8xf32>
    %cst_70 = arith.constant dense<0.000000e+00> : vector<8xf32>
    %228 = vector.multi_reduction <add>, %227, %cst_70 [1] : vector<8x8xf32> to vector<8xf32>
    %229 = vector.shape_cast %228 : vector<8xf32> to vector<8x1xf32>
    %230 = tpu.reciprocal %229 {approx = true} : vector<8x1xf32> -> vector<8x1xf32>
    %231 = vector.broadcast %230 : vector<8x1xf32> to vector<8x8xf32>
    %232 = arith.mulf %227, %231 : vector<8x8xf32>
    %233 = arith.truncf %232 : vector<8x8xf32> to vector<8x8xbf16>
    %cst_71 = arith.constant dense<0.000000e+00> : vector<8x16xf32>
    %234 = tpu.matmul %233, %221, %cst_71 {dimension_numbers = #tpu.dot_dimension_numbers<[1], [0], [0], [1], [0, 0, 1, 1], [], []>} : vector<8x8xbf16>, vector<8x16xbf16>, vector<8x16xf32> -> vector<8x16xf32>
    %235 = vector.extract_strided_slice %23 {offsets = [8, 80], sizes = [8, 16], strides = [1, 1]} : vector<16x128xbf16> to vector<8x16xbf16>
    %236 = vector.extract_strided_slice %24 {offsets = [8, 80], sizes = [8, 16], strides = [1, 1]} : vector<16x128xbf16> to vector<8x16xbf16>
    %237 = vector.extract_strided_slice %25 {offsets = [8, 80], sizes = [8, 16], strides = [1, 1]} : vector<16x128xbf16> to vector<8x16xbf16>
    %cst_72 = arith.constant dense<0.000000e+00> : vector<8x8xf32>
    %238 = tpu.matmul %235, %236, %cst_72 {dimension_numbers = #tpu.dot_dimension_numbers<[1], [1], [0], [0], [0, 0, 1, 0], [], []>} : vector<8x16xbf16>, vector<8x16xbf16>, vector<8x8xf32> -> vector<8x8xf32>
    %cst_73 = arith.constant dense<0xFF800000> : vector<8xf32>
    %239 = vector.multi_reduction <maximumf>, %238, %cst_73 [1] : vector<8x8xf32> to vector<8xf32>
    %240 = vector.shape_cast %239 : vector<8xf32> to vector<8x1xf32>
    %241 = vector.broadcast %240 : vector<8x1xf32> to vector<8x8xf32>
    %242 = arith.subf %238, %241 : vector<8x8xf32>
    %243 = math.exp %242 : vector<8x8xf32>
    %cst_74 = arith.constant dense<0.000000e+00> : vector<8xf32>
    %244 = vector.multi_reduction <add>, %243, %cst_74 [1] : vector<8x8xf32> to vector<8xf32>
    %245 = vector.shape_cast %244 : vector<8xf32> to vector<8x1xf32>
    %246 = tpu.reciprocal %245 {approx = true} : vector<8x1xf32> -> vector<8x1xf32>
    %247 = vector.broadcast %246 : vector<8x1xf32> to vector<8x8xf32>
    %248 = arith.mulf %243, %247 : vector<8x8xf32>
    %249 = arith.truncf %248 : vector<8x8xf32> to vector<8x8xbf16>
    %cst_75 = arith.constant dense<0.000000e+00> : vector<8x16xf32>
    %250 = tpu.matmul %249, %237, %cst_75 {dimension_numbers = #tpu.dot_dimension_numbers<[1], [0], [0], [1], [0, 0, 1, 1], [], []>} : vector<8x8xbf16>, vector<8x16xbf16>, vector<8x16xf32> -> vector<8x16xf32>
    %251 = vector.extract_strided_slice %23 {offsets = [8, 96], sizes = [8, 16], strides = [1, 1]} : vector<16x128xbf16> to vector<8x16xbf16>
    %252 = vector.extract_strided_slice %24 {offsets = [8, 96], sizes = [8, 16], strides = [1, 1]} : vector<16x128xbf16> to vector<8x16xbf16>
    %253 = vector.extract_strided_slice %25 {offsets = [8, 96], sizes = [8, 16], strides = [1, 1]} : vector<16x128xbf16> to vector<8x16xbf16>
    %cst_76 = arith.constant dense<0.000000e+00> : vector<8x8xf32>
    %254 = tpu.matmul %251, %252, %cst_76 {dimension_numbers = #tpu.dot_dimension_numbers<[1], [1], [0], [0], [0, 0, 1, 0], [], []>} : vector<8x16xbf16>, vector<8x16xbf16>, vector<8x8xf32> -> vector<8x8xf32>
    %cst_77 = arith.constant dense<0xFF800000> : vector<8xf32>
    %255 = vector.multi_reduction <maximumf>, %254, %cst_77 [1] : vector<8x8xf32> to vector<8xf32>
    %256 = vector.shape_cast %255 : vector<8xf32> to vector<8x1xf32>
    %257 = vector.broadcast %256 : vector<8x1xf32> to vector<8x8xf32>
    %258 = arith.subf %254, %257 : vector<8x8xf32>
    %259 = math.exp %258 : vector<8x8xf32>
    %cst_78 = arith.constant dense<0.000000e+00> : vector<8xf32>
    %260 = vector.multi_reduction <add>, %259, %cst_78 [1] : vector<8x8xf32> to vector<8xf32>
    %261 = vector.shape_cast %260 : vector<8xf32> to vector<8x1xf32>
    %262 = tpu.reciprocal %261 {approx = true} : vector<8x1xf32> -> vector<8x1xf32>
    %263 = vector.broadcast %262 : vector<8x1xf32> to vector<8x8xf32>
    %264 = arith.mulf %259, %263 : vector<8x8xf32>
    %265 = arith.truncf %264 : vector<8x8xf32> to vector<8x8xbf16>
    %cst_79 = arith.constant dense<0.000000e+00> : vector<8x16xf32>
    %266 = tpu.matmul %265, %253, %cst_79 {dimension_numbers = #tpu.dot_dimension_numbers<[1], [0], [0], [1], [0, 0, 1, 1], [], []>} : vector<8x8xbf16>, vector<8x16xbf16>, vector<8x16xf32> -> vector<8x16xf32>
    %267 = vector.extract_strided_slice %23 {offsets = [8, 112], sizes = [8, 16], strides = [1, 1]} : vector<16x128xbf16> to vector<8x16xbf16>
    %268 = vector.extract_strided_slice %24 {offsets = [8, 112], sizes = [8, 16], strides = [1, 1]} : vector<16x128xbf16> to vector<8x16xbf16>
    %269 = vector.extract_strided_slice %25 {offsets = [8, 112], sizes = [8, 16], strides = [1, 1]} : vector<16x128xbf16> to vector<8x16xbf16>
    %cst_80 = arith.constant dense<0.000000e+00> : vector<8x8xf32>
    %270 = tpu.matmul %267, %268, %cst_80 {dimension_numbers = #tpu.dot_dimension_numbers<[1], [1], [0], [0], [0, 0, 1, 0], [], []>} : vector<8x16xbf16>, vector<8x16xbf16>, vector<8x8xf32> -> vector<8x8xf32>
    %cst_81 = arith.constant dense<0xFF800000> : vector<8xf32>
    %271 = vector.multi_reduction <maximumf>, %270, %cst_81 [1] : vector<8x8xf32> to vector<8xf32>
    %272 = vector.shape_cast %271 : vector<8xf32> to vector<8x1xf32>
    %273 = vector.broadcast %272 : vector<8x1xf32> to vector<8x8xf32>
    %274 = arith.subf %270, %273 : vector<8x8xf32>
    %275 = math.exp %274 : vector<8x8xf32>
    %cst_82 = arith.constant dense<0.000000e+00> : vector<8xf32>
    %276 = vector.multi_reduction <add>, %275, %cst_82 [1] : vector<8x8xf32> to vector<8xf32>
    %277 = vector.shape_cast %276 : vector<8xf32> to vector<8x1xf32>
    %278 = tpu.reciprocal %277 {approx = true} : vector<8x1xf32> -> vector<8x1xf32>
    %279 = vector.broadcast %278 : vector<8x1xf32> to vector<8x8xf32>
    %280 = arith.mulf %275, %279 : vector<8x8xf32>
    %281 = arith.truncf %280 : vector<8x8xf32> to vector<8x8xbf16>
    %cst_83 = arith.constant dense<0.000000e+00> : vector<8x16xf32>
    %282 = tpu.matmul %281, %269, %cst_83 {dimension_numbers = #tpu.dot_dimension_numbers<[1], [0], [0], [1], [0, 0, 1, 1], [], []>} : vector<8x8xbf16>, vector<8x16xbf16>, vector<8x16xf32> -> vector<8x16xf32>
    %283 = tpu.concatenate %170, %186, %202, %218, %234, %250, %266, %282 in 1 : vector<8x16xf32>, vector<8x16xf32>, vector<8x16xf32>, vector<8x16xf32>, vector<8x16xf32>, vector<8x16xf32>, vector<8x16xf32>, vector<8x16xf32> -> vector<8x128xf32>
    %284 = tpu.concatenate %154, %283 in 0 : vector<8x128xf32>, vector<8x128xf32> -> vector<16x128xf32>
    %285 = arith.truncf %284 : vector<16x128xf32> to vector<16x128xbf16>
    %c0_84 = arith.constant 0 : index
    %c0_85 = arith.constant 0 : index
    %286 = vector.load %arg10[%c0_84, %c0_85] : memref<128x128xbf16, #tpu.memory_space<vmem>>, vector<128x128xbf16>
    %cst_86 = arith.constant dense<0.000000e+00> : vector<16x128xf32>
    %287 = tpu.matmul %285, %286, %cst_86 {dimension_numbers = #tpu.dot_dimension_numbers<[1], [0], [0], [1], [0, 0, 1, 1], [], []>} : vector<16x128xbf16>, vector<128x128xbf16>, vector<16x128xf32> -> vector<16x128xf32>
    %c0_87 = arith.constant 0 : index
    %c0_88 = arith.constant 0 : index
    %288 = vector.load %arg11[%c0_87, %c0_88] : memref<1x128xf32, #tpu.memory_space<vmem>>, vector<1x128xf32>
    %289 = vector.broadcast %288 : vector<1x128xf32> to vector<16x128xf32>
    %290 = arith.addf %287, %289 : vector<16x128xf32>
    %291 = arith.addf %290, %0 : vector<16x128xf32>
    %cst_89 = arith.constant dense<0.000000e+00> : vector<16xf32>
    %292 = vector.multi_reduction <add>, %291, %cst_89 [1] : vector<16x128xf32> to vector<16xf32>
    %293 = vector.shape_cast %292 : vector<16xf32> to vector<16x1xf32>
    %cst_90 = arith.constant 1.280000e+02 : f32
    %294 = vector.broadcast %cst_90 : f32 to vector<16x1xf32>
    %295 = arith.divf %293, %294 : vector<16x1xf32>
    %296 = vector.broadcast %295 : vector<16x1xf32> to vector<16x128xf32>
    %297 = arith.subf %291, %296 : vector<16x128xf32>
    %298 = arith.mulf %297, %297 : vector<16x128xf32>
    %cst_91 = arith.constant dense<0.000000e+00> : vector<16xf32>
    %299 = vector.multi_reduction <add>, %298, %cst_91 [1] : vector<16x128xf32> to vector<16xf32>
    %300 = vector.shape_cast %299 : vector<16xf32> to vector<16x1xf32>
    %cst_92 = arith.constant 1.280000e+02 : f32
    %301 = vector.broadcast %cst_92 : f32 to vector<16x1xf32>
    %302 = arith.divf %300, %301 : vector<16x1xf32>
    %303 = vector.broadcast %295 : vector<16x1xf32> to vector<16x128xf32>
    %304 = arith.subf %291, %303 : vector<16x128xf32>
    %cst_93 = arith.constant 9.99999974E-6 : f32
    %305 = vector.broadcast %cst_93 : f32 to vector<16x1xf32>
    %306 = arith.addf %302, %305 : vector<16x1xf32>
    %307 = math.rsqrt %306 : vector<16x1xf32>
    %308 = vector.broadcast %307 : vector<16x1xf32> to vector<16x128xf32>
    %309 = arith.mulf %304, %308 : vector<16x128xf32>
    %c0_94 = arith.constant 0 : index
    %c0_95 = arith.constant 0 : index
    %310 = vector.load %arg12[%c0_94, %c0_95] : memref<1x128xf32, #tpu.memory_space<vmem>>, vector<1x128xf32>
    %311 = vector.broadcast %310 : vector<1x128xf32> to vector<16x128xf32>
    %312 = arith.mulf %309, %311 : vector<16x128xf32>
    %c0_96 = arith.constant 0 : index
    %c0_97 = arith.constant 0 : index
    %313 = vector.load %arg13[%c0_96, %c0_97] : memref<1x128xf32, #tpu.memory_space<vmem>>, vector<1x128xf32>
    %314 = vector.broadcast %313 : vector<1x128xf32> to vector<16x128xf32>
    %315 = arith.addf %312, %314 : vector<16x128xf32>
    %316 = arith.truncf %315 : vector<16x128xf32> to vector<16x128xbf16>
    %c0_98 = arith.constant 0 : index
    %c0_99 = arith.constant 0 : index
    %317 = vector.load %arg14[%c0_98, %c0_99] : memref<128x1024xbf16, #tpu.memory_space<vmem>>, vector<128x1024xbf16>
    %cst_100 = arith.constant dense<0.000000e+00> : vector<16x1024xf32>
    %318 = tpu.matmul %316, %317, %cst_100 {dimension_numbers = #tpu.dot_dimension_numbers<[1], [0], [0], [1], [0, 0, 1, 1], [], []>} : vector<16x128xbf16>, vector<128x1024xbf16>, vector<16x1024xf32> -> vector<16x1024xf32>
    %c0_101 = arith.constant 0 : index
    %c0_102 = arith.constant 0 : index
    %319 = vector.load %arg15[%c0_101, %c0_102] : memref<1x1024xf32, #tpu.memory_space<vmem>>, vector<1x1024xf32>
    %320 = vector.broadcast %319 : vector<1x1024xf32> to vector<16x1024xf32>
    %321 = arith.addf %318, %320 : vector<16x1024xf32>
    %cst_103 = arith.constant 0.000000e+00 : f32
    %322 = vector.broadcast %cst_103 : f32 to vector<16x1024xf32>
    %323 = arith.maximumf %321, %322 : vector<16x1024xf32>
    %324 = arith.truncf %323 : vector<16x1024xf32> to vector<16x1024xbf16>
    %c0_104 = arith.constant 0 : index
    %c0_105 = arith.constant 0 : index
    %325 = vector.load %arg16[%c0_104, %c0_105] : memref<1024x128xbf16, #tpu.memory_space<vmem>>, vector<1024x128xbf16>
    %cst_106 = arith.constant dense<0.000000e+00> : vector<16x128xf32>
    %326 = tpu.matmul %324, %325, %cst_106 {dimension_numbers = #tpu.dot_dimension_numbers<[1], [0], [0], [1], [0, 0, 1, 1], [], []>} : vector<16x1024xbf16>, vector<1024x128xbf16>, vector<16x128xf32> -> vector<16x128xf32>
    %c0_107 = arith.constant 0 : index
    %c0_108 = arith.constant 0 : index
    %327 = vector.load %arg17[%c0_107, %c0_108] : memref<1x128xf32, #tpu.memory_space<vmem>>, vector<1x128xf32>
    %328 = vector.broadcast %327 : vector<1x128xf32> to vector<16x128xf32>
    %329 = arith.addf %326, %328 : vector<16x128xf32>
    %330 = arith.addf %329, %315 : vector<16x128xf32>
    %cst_109 = arith.constant dense<0.000000e+00> : vector<16xf32>
    %331 = vector.multi_reduction <add>, %330, %cst_109 [1] : vector<16x128xf32> to vector<16xf32>
    %332 = vector.shape_cast %331 : vector<16xf32> to vector<16x1xf32>
    %cst_110 = arith.constant 1.280000e+02 : f32
    %333 = vector.broadcast %cst_110 : f32 to vector<16x1xf32>
    %334 = arith.divf %332, %333 : vector<16x1xf32>
    %335 = vector.broadcast %334 : vector<16x1xf32> to vector<16x128xf32>
    %336 = arith.subf %330, %335 : vector<16x128xf32>
    %337 = arith.mulf %336, %336 : vector<16x128xf32>
    %cst_111 = arith.constant dense<0.000000e+00> : vector<16xf32>
    %338 = vector.multi_reduction <add>, %337, %cst_111 [1] : vector<16x128xf32> to vector<16xf32>
    %339 = vector.shape_cast %338 : vector<16xf32> to vector<16x1xf32>
    %cst_112 = arith.constant 1.280000e+02 : f32
    %340 = vector.broadcast %cst_112 : f32 to vector<16x1xf32>
    %341 = arith.divf %339, %340 : vector<16x1xf32>
    %342 = vector.broadcast %334 : vector<16x1xf32> to vector<16x128xf32>
    %343 = arith.subf %330, %342 : vector<16x128xf32>
    %cst_113 = arith.constant 9.99999974E-6 : f32
    %344 = vector.broadcast %cst_113 : f32 to vector<16x1xf32>
    %345 = arith.addf %341, %344 : vector<16x1xf32>
    %346 = math.rsqrt %345 : vector<16x1xf32>
    %347 = vector.broadcast %346 : vector<16x1xf32> to vector<16x128xf32>
    %348 = arith.mulf %343, %347 : vector<16x128xf32>
    %c0_114 = arith.constant 0 : index
    %c0_115 = arith.constant 0 : index
    %349 = vector.load %arg18[%c0_114, %c0_115] : memref<1x128xf32, #tpu.memory_space<vmem>>, vector<1x128xf32>
    %350 = vector.broadcast %349 : vector<1x128xf32> to vector<16x128xf32>
    %351 = arith.mulf %348, %350 : vector<16x128xf32>
    %c0_116 = arith.constant 0 : index
    %c0_117 = arith.constant 0 : index
    %352 = vector.load %arg19[%c0_116, %c0_117] : memref<1x128xf32, #tpu.memory_space<vmem>>, vector<1x128xf32>
    %353 = vector.broadcast %352 : vector<1x128xf32> to vector<16x128xf32>
    %354 = arith.addf %351, %353 : vector<16x128xf32>
    %c0_118 = arith.constant 0 : index
    %c0_119 = arith.constant 0 : index
    %355 = vector.load %arg20[%c0_118, %c0_119] : memref<16x128xf32, #tpu.memory_space<vmem>>, vector<16x128xf32>
    tpu.vector_store %arg20[%c0_118, %c0_119], %354 {strides = array<i32>} : memref<16x128xf32, #tpu.memory_space<vmem>>, vector<16x128xf32>,
    return
  }
  func.func @transform_0(%arg0: i32) -> (i32, i32) {
    %c0_i32 = arith.constant 0 : i32
    %c0_i32_0 = arith.constant 0 : i32
    return %arg0, %c0_i32 : i32, i32
  }
  func.func @transform_1(%arg0: i32) -> (i32, i32) {
    %c0_i32 = arith.constant 0 : i32
    %c0_i32_0 = arith.constant 0 : i32
    return %arg0, %c0_i32 : i32, i32
  }
  func.func @transform_2(%arg0: i32) -> (i32, i32) {
    %c0_i32 = arith.constant 0 : i32
    %c0_i32_0 = arith.constant 0 : i32
    return %arg0, %c0_i32 : i32, i32
  }
  func.func @transform_3(%arg0: i32) -> (i32, i32) {
    %c0_i32 = arith.constant 0 : i32
    %c0_i32_0 = arith.constant 0 : i32
    %c0_i32_1 = arith.constant 0 : i32
    return %c0_i32, %c0_i32_0 : i32, i32
  }
  func.func @transform_4(%arg0: i32) -> (i32, i32) {
    %c0_i32 = arith.constant 0 : i32
    %c0_i32_0 = arith.constant 0 : i32
    %c0_i32_1 = arith.constant 0 : i32
    return %c0_i32, %c0_i32_0 : i32, i32
  }
  func.func @transform_5(%arg0: i32) -> (i32, i32) {
    %c0_i32 = arith.constant 0 : i32
    %c0_i32_0 = arith.constant 0 : i32
    %c0_i32_1 = arith.constant 0 : i32
    return %c0_i32, %c0_i32_0 : i32, i32
  }
  func.func @transform_6(%arg0: i32) -> (i32, i32) {
    %c0_i32 = arith.constant 0 : i32
    %c0_i32_0 = arith.constant 0 : i32
    %c0_i32_1 = arith.constant 0 : i32
    return %c0_i32, %c0_i32_0 : i32, i32
  }
  func.func @transform_7(%arg0: i32) -> (i32, i32) {
    %c0_i32 = arith.constant 0 : i32
    %c0_i32_0 = arith.constant 0 : i32
    %c0_i32_1 = arith.constant 0 : i32
    return %c0_i32, %c0_i32_0 : i32, i32
  }
  func.func @transform_8(%arg0: i32) -> (i32, i32) {
    %c0_i32 = arith.constant 0 : i32
    %c0_i32_0 = arith.constant 0 : i32
    %c0_i32_1 = arith.constant 0 : i32
    return %c0_i32, %c0_i32_0 : i32, i32
  }
  func.func @transform_9(%arg0: i32) -> (i32, i32) {
    %c0_i32 = arith.constant 0 : i32
    %c0_i32_0 = arith.constant 0 : i32
    %c0_i32_1 = arith.constant 0 : i32
    return %c0_i32, %c0_i32_0 : i32, i32
  }
  func.func @transform_10(%arg0: i32) -> (i32, i32) {
    %c0_i32 = arith.constant 0 : i32
    %c0_i32_0 = arith.constant 0 : i32
    %c0_i32_1 = arith.constant 0 : i32
    return %c0_i32, %c0_i32_0 : i32, i32
  }
  func.func @transform_11(%arg0: i32) -> (i32, i32) {
    %c0_i32 = arith.constant 0 : i32
    %c0_i32_0 = arith.constant 0 : i32
    %c0_i32_1 = arith.constant 0 : i32
    return %c0_i32, %c0_i32_0 : i32, i32
  }
  func.func @transform_12(%arg0: i32) -> (i32, i32) {
    %c0_i32 = arith.constant 0 : i32
    %c0_i32_0 = arith.constant 0 : i32
    %c0_i32_1 = arith.constant 0 : i32
    return %c0_i32, %c0_i32_0 : i32, i32
  }
  func.func @transform_13(%arg0: i32) -> (i32, i32) {
    %c0_i32 = arith.constant 0 : i32
    %c0_i32_0 = arith.constant 0 : i32
    %c0_i32_1 = arith.constant 0 : i32
    return %c0_i32, %c0_i32_0 : i32, i32
  }
  func.func @transform_14(%arg0: i32) -> (i32, i32) {
    %c0_i32 = arith.constant 0 : i32
    %c0_i32_0 = arith.constant 0 : i32
    %c0_i32_1 = arith.constant 0 : i32
    return %c0_i32, %c0_i32_0 : i32, i32
  }
  func.func @transform_15(%arg0: i32) -> (i32, i32) {
    %c0_i32 = arith.constant 0 : i32
    %c0_i32_0 = arith.constant 0 : i32
    %c0_i32_1 = arith.constant 0 : i32
    return %c0_i32, %c0_i32_0 : i32, i32
  }
  func.func @transform_16(%arg0: i32) -> (i32, i32) {
    %c0_i32 = arith.constant 0 : i32
    %c0_i32_0 = arith.constant 0 : i32
    %c0_i32_1 = arith.constant 0 : i32
    return %c0_i32, %c0_i32_0 : i32, i32
  }
  func.func @transform_17(%arg0: i32) -> (i32, i32) {
    %c0_i32 = arith.constant 0 : i32
    %c0_i32_0 = arith.constant 0 : i32
    %c0_i32_1 = arith.constant 0 : i32
    return %c0_i32, %c0_i32_0 : i32, i32
  }
  func.func @transform_18(%arg0: i32) -> (i32, i32) {
    %c0_i32 = arith.constant 0 : i32
    %c0_i32_0 = arith.constant 0 : i32
    %c0_i32_1 = arith.constant 0 : i32
    return %c0_i32, %c0_i32_0 : i32, i32
  }
  func.func @transform_19(%arg0: i32) -> (i32, i32) {
    %c0_i32 = arith.constant 0 : i32
    %c0_i32_0 = arith.constant 0 : i32
    return %arg0, %c0_i32 : i32, i32
  }
}

</mosaic_0001>

<llo_original>
// kernel: tpu_custom_call.1
$region0: #{tpu_custom_call.1}
  #allocation0 [shape = 'u32[]', space=smem, size = 0x4, offset = 0x4, fixed_abs, tag = 'smem constant byte address 0x4 - core index']
  #allocation1 [shape = 'u32[144,128]{1,0:T(1,128)}', space=vmem, size = 0x12000, scoped, tag = 'internal scratch']
  %s0 = inlined_call_operand.hbm [shape: f32[16,128], index: 0, kind: input, shape index: {}]
  %s1 = inlined_call_operand.hbm [shape: f32[16,128], index: 1, kind: input, shape index: {}]
  %s2 = inlined_call_operand.hbm [shape: f32[16,128], index: 2, kind: input, shape index: {}]
  %s3 = inlined_call_operand.hbm [shape: bf16[128,128], index: 3, kind: input, shape index: {}]
  %s4 = inlined_call_operand.vmem [shape: f32[1,128], index: 4, kind: input, shape index: {}]
  %s5 = inlined_call_operand.hbm [shape: bf16[128,128], index: 5, kind: input, shape index: {}]
  %s6 = inlined_call_operand.vmem [shape: f32[1,128], index: 6, kind: input, shape index: {}]
  %s7 = inlined_call_operand.hbm [shape: bf16[128,128], index: 7, kind: input, shape index: {}]
  %s8 = inlined_call_operand.vmem [shape: f32[1,128], index: 8, kind: input, shape index: {}]
  %s9 = inlined_call_operand.hbm [shape: bf16[128,128], index: 9, kind: input, shape index: {}]
  %s10 = inlined_call_operand.vmem [shape: f32[1,128], index: 10, kind: input, shape index: {}]
  %s11 = inlined_call_operand.vmem [shape: f32[1,128], index: 11, kind: input, shape index: {}]
  %s12 = inlined_call_operand.vmem [shape: f32[1,128], index: 12, kind: input, shape index: {}]
  %s13 = inlined_call_operand.hbm [shape: bf16[128,1024], index: 13, kind: input, shape index: {}]
  %s14 = inlined_call_operand.vmem [shape: f32[1,1024], index: 14, kind: input, shape index: {}]
  %s15 = inlined_call_operand.hbm [shape: bf16[1024,128], index: 15, kind: input, shape index: {}]
  %s16 = inlined_call_operand.vmem [shape: f32[1,128], index: 16, kind: input, shape index: {}]
  %s17 = inlined_call_operand.vmem [shape: f32[1,128], index: 17, kind: input, shape index: {}]
  %s18 = inlined_call_operand.vmem [shape: f32[1,128], index: 18, kind: input, shape index: {}]
  %s19 = inlined_call_operand.hbm [shape: f32[16,128], index: 19, kind: output, shape index: {}]
  %s20 = sld [smem:[#allocation0]]
  $region122: #{tpu_custom_call.1} parent=0
    _
  %s22 = ssub.s32 1, %s20
  %s23 = scalar_select 0, %s22, %s20
  $region1: #{tpu_custom_call.1} parent=0
    #allocation2 [shape = 'u8[8192]{0}', space=vmem, size = 0x2000, scoped, tag = 'input window, operand 0, single buffered']
    #allocation3 [shape = 's32[1]{0}', space=sflag, size = 0x4, scoped, tag = 'scoped memory for tpu_custom_call.1']
    #allocation4 [shape = 's32[1]{0}', space=sflag, size = 0x4, scoped, tag = 'scoped memory for tpu_custom_call.1']
    #allocation5 [shape = 'u8[8192]{0}', space=vmem, size = 0x2000, scoped, tag = 'input window, operand 1, single buffered']
    #allocation6 [shape = 's32[1]{0}', space=sflag, size = 0x4, scoped, tag = 'scoped memory for tpu_custom_call.1']
    #allocation7 [shape = 'u8[8192]{0}', space=vmem, size = 0x2000, scoped, tag = 'input window, operand 2, single buffered']
    #allocation8 [shape = 'u8[32768]{0}', space=vmem, size = 0x8000, scoped, tag = 'input window, operand 3, single buffered']
    #allocation9 [shape = 's32[1]{0}', space=sflag, size = 0x4, scoped, tag = 'scoped memory for tpu_custom_call.1']
    #allocation10 [shape = 'u8[32768]{0}', space=vmem, size = 0x8000, scoped, tag = 'input window, operand 5, single buffered']
    #allocation11 [shape = 'u8[32768]{0}', space=vmem, size = 0x8000, scoped, tag = 'input window, operand 7, single buffered']
    #allocation12 [shape = 's32[1]{0}', space=sflag, size = 0x4, scoped, tag = 'scoped memory for tpu_custom_call.1']
    #allocation13 [shape = 'u8[32768]{0}', space=vmem, size = 0x8000, scoped, tag = 'input window, operand 9, single buffered']
    #allocation14 [shape = 'u8[262144]{0}', space=vmem, size = 0x40000, scoped, tag = 'input window, operand 13, single buffered']
    #allocation15 [shape = 's32[1]{0}', space=sflag, size = 0x4, scoped, tag = 'scoped memory for tpu_custom_call.1']
    #allocation16 [shape = 'u8[262144]{0}', space=vmem, size = 0x40000, scoped, tag = 'input window, operand 15, single buffered']
    #allocation17 [shape = 'u8[8192]{0}', space=vmem, size = 0x2000, scoped, tag = 'output window, operand 0, single buffered']
    %24 = vsyncpa [#allocation3], 0
    %25 = vsyncpa [#allocation6], 0
    %26 = vsyncpa [#allocation9], 0
    %27 = vsyncpa [#allocation12], 0
    %28 = vsyncpa [#allocation15], 0
    %29 = vsyncpa [#allocation4], 0
    // Predicated region
    $region2: #{tpu_custom_call.1} parent=1 // pred_check
      _
    $region3: #{tpu_custom_call.1} parent=1 // pred_check_branch
      %31 = sbr.rel (0) target = $region5
    $region4: #{tpu_custom_call.1} parent=1 // pred_region
      %s33 = ssub.s32 256, 256
      %34 = vsyncadd [#allocation3], %s33
      %s35 = sshll.u32 [#allocation2], 4
      %s36 = int_to_ptr.vmem [resolvable:$true] %s35
      %41 = dma.hbm_to_vmem [thread:$0]  %s0, 256, %s36, [#allocation3], 128, 128, 8
    $region5: #{tpu_custom_call.1} parent=1 // pred_fallthru
      _
    // Predicated region
    $region6: #{tpu_custom_call.1} parent=1 // pred_check
      _
    $region7: #{tpu_custom_call.1} parent=1 // pred_check_branch
      %43 = sbr.rel (0) target = $region9
    $region8: #{tpu_custom_call.1} parent=1 // pred_region
      %s45 = ssub.s32 256, 256
      %46 = vsyncadd [#allocation6], %s45
      %s47 = sshll.u32 [#allocation5], 4
      %s48 = int_to_ptr.vmem [resolvable:$true] %s47
      %53 = dma.hbm_to_vmem [thread:$0]  %s1, 256, %s48, [#allocation6], 128, 128, 8
    $region9: #{tpu_custom_call.1} parent=1 // pred_fallthru
      _
    // Predicated region
    $region10: #{tpu_custom_call.1} parent=1 // pred_check
      _
    $region11: #{tpu_custom_call.1} parent=1 // pred_check_branch
      %55 = sbr.rel (0) target = $region13
    $region12: #{tpu_custom_call.1} parent=1 // pred_region
      %s57 = ssub.s32 256, 256
      %58 = vsyncadd [#allocation6], %s57
      %s59 = sshll.u32 [#allocation7], 4
      %s60 = int_to_ptr.vmem [resolvable:$true] %s59
      %65 = dma.hbm_to_vmem [thread:$0]  %s2, 256, %s60, [#allocation6], 128, 128, 8
    $region13: #{tpu_custom_call.1} parent=1 // pred_fallthru
      _
    // Predicated region
    $region14: #{tpu_custom_call.1} parent=1 // pred_check
      _
    $region15: #{tpu_custom_call.1} parent=1 // pred_check_branch
      %67 = sbr.rel (0) target = $region17
    $region16: #{tpu_custom_call.1} parent=1 // pred_region
      %s69 = ssub.s32 1024, 1024
      %70 = vsyncadd [#allocation9], %s69
      %s71 = sshll.u32 [#allocation8], 4
      %s72 = int_to_ptr.vmem [resolvable:$true] %s71
      %77 = dma.hbm_to_vmem [thread:$0]  %s3, 1024, %s72, [#allocation9], 64, 64, 4
    $region17: #{tpu_custom_call.1} parent=1 // pred_fallthru
      _
    // Predicated region
    $region18: #{tpu_custom_call.1} parent=1 // pred_check
      _
    $region19: #{tpu_custom_call.1} parent=1 // pred_check_branch
      %79 = sbr.rel (0) target = $region21
    $region20: #{tpu_custom_call.1} parent=1 // pred_region
      _
    $region21: #{tpu_custom_call.1} parent=1 // pred_fallthru
      _
    // Predicated region
    $region22: #{tpu_custom_call.1} parent=1 // pred_check
      _
    $region23: #{tpu_custom_call.1} parent=1 // pred_check_branch
      %81 = sbr.rel (0) target = $region25
    $region24: #{tpu_custom_call.1} parent=1 // pred_region
      %s83 = ssub.s32 1024, 1024
      %84 = vsyncadd [#allocation9], %s83
      %s85 = sshll.u32 [#allocation10], 4
      %s86 = int_to_ptr.vmem [resolvable:$true] %s85
      %91 = dma.hbm_to_vmem [thread:$0]  %s5, 1024, %s86, [#allocation9], 64, 64, 4
    $region25: #{tpu_custom_call.1} parent=1 // pred_fallthru
      _
    // Predicated region
    $region26: #{tpu_custom_call.1} parent=1 // pred_check
      _
    $region27: #{tpu_custom_call.1} parent=1 // pred_check_branch
      %93 = sbr.rel (0) target = $region29
    $region28: #{tpu_custom_call.1} parent=1 // pred_region
      _
    $region29: #{tpu_custom_call.1} parent=1 // pred_fallthru
      _
    // Predicated region
    $region30: #{tpu_custom_call.1} parent=1 // pred_check
      _
    $region31: #{tpu_custom_call.1} parent=1 // pred_check_branch
      %95 = sbr.rel (0) target = $region33
    $region32: #{tpu_custom_call.1} parent=1 // pred_region
      %s97 = ssub.s32 1024, 1024
      %98 = vsyncadd [#allocation12], %s97
      %s99 = sshll.u32 [#allocation11], 4
      %s100 = int_to_ptr.vmem [resolvable:$true] %s99
      %105 = dma.hbm_to_vmem [thread:$0]  %s7, 1024, %s100, [#allocation12], 64, 64, 4
    $region33: #{tpu_custom_call.1} parent=1 // pred_fallthru
      _
    // Predicated region
    $region34: #{tpu_custom_call.1} parent=1 // pred_check
      _
    $region35: #{tpu_custom_call.1} parent=1 // pred_check_branch
      %107 = sbr.rel (0) target = $region37
    $region36: #{tpu_custom_call.1} parent=1 // pred_region
      _
    $region37: #{tpu_custom_call.1} parent=1 // pred_fallthru
      _
    // Predicated region
    $region38: #{tpu_custom_call.1} parent=1 // pred_check
      _
    $region39: #{tpu_custom_call.1} parent=1 // pred_check_branch
      %109 = sbr.rel (0) target = $region41
    $region40: #{tpu_custom_call.1} parent=1 // pred_region
      %s111 = ssub.s32 1024, 1024
      %112 = vsyncadd [#allocation12], %s111
      %s113 = sshll.u32 [#allocation13], 4
      %s114 = int_to_ptr.vmem [resolvable:$true] %s113
      %119 = dma.hbm_to_vmem [thread:$0]  %s9, 1024, %s114, [#allocation12], 64, 64, 4
    $region41: #{tpu_custom_call.1} parent=1 // pred_fallthru
      _
    // Predicated region
    $region42: #{tpu_custom_call.1} parent=1 // pred_check
      _
    $region43: #{tpu_custom_call.1} parent=1 // pred_check_branch
      %121 = sbr.rel (0) target = $region45
    $region44: #{tpu_custom_call.1} parent=1 // pred_region
      _
    $region45: #{tpu_custom_call.1} parent=1 // pred_fallthru
      _
    // Predicated region
    $region46: #{tpu_custom_call.1} parent=1 // pred_check
      _
    $region47: #{tpu_custom_call.1} parent=1 // pred_check_branch
      %123 = sbr.rel (0) target = $region49
    $region48: #{tpu_custom_call.1} parent=1 // pred_region
      _
    $region49: #{tpu_custom_call.1} parent=1 // pred_fallthru
      _
    // Predicated region
    $region50: #{tpu_custom_call.1} parent=1 // pred_check
      _
    $region51: #{tpu_custom_call.1} parent=1 // pred_check_branch
      %125 = sbr.rel (0) target = $region53
    $region52: #{tpu_custom_call.1} parent=1 // pred_region
      _
    $region53: #{tpu_custom_call.1} parent=1 // pred_fallthru
      _
    // Predicated region
    $region54: #{tpu_custom_call.1} parent=1 // pred_check
      _
    $region55: #{tpu_custom_call.1} parent=1 // pred_check_branch
      %127 = sbr.rel (0) target = $region57
    $region56: #{tpu_custom_call.1} parent=1 // pred_region
      %s129 = ssub.s32 8192, 8192
      %130 = vsyncadd [#allocation15], %s129
      %s131 = sshll.u32 [#allocation14], 4
      %s132 = int_to_ptr.vmem [resolvable:$true] %s131
      %137 = dma.hbm_to_vmem [thread:$0]  %s13, 8192, %s132, [#allocation15], 512, 512, 32
    $region57: #{tpu_custom_call.1} parent=1 // pred_fallthru
      _
    // Predicated region
    $region58: #{tpu_custom_call.1} parent=1 // pred_check
      _
    $region59: #{tpu_custom_call.1} parent=1 // pred_check_branch
      %139 = sbr.rel (0) target = $region61
    $region60: #{tpu_custom_call.1} parent=1 // pred_region
      _
    $region61: #{tpu_custom_call.1} parent=1 // pred_fallthru
      _
    // Predicated region
    $region62: #{tpu_custom_call.1} parent=1 // pred_check
      _
    $region63: #{tpu_custom_call.1} parent=1 // pred_check_branch
      %141 = sbr.rel (0) target = $region65
    $region64: #{tpu_custom_call.1} parent=1 // pred_region
      %s143 = ssub.s32 8192, 8192
      %144 = vsyncadd [#allocation15], %s143
      %s145 = sshll.u32 [#allocation16], 4
      %s146 = int_to_ptr.vmem [resolvable:$true] %s145
      %151 = dma.hbm_to_vmem [thread:$0]  %s15, 8192, %s146, [#allocation15], 64, 64, 4
    $region65: #{tpu_custom_call.1} parent=1 // pred_fallthru
      _
    // Predicated region
    $region66: #{tpu_custom_call.1} parent=1 // pred_check
      _
    $region67: #{tpu_custom_call.1} parent=1 // pred_check_branch
      %153 = sbr.rel (0) target = $region69
    $region68: #{tpu_custom_call.1} parent=1 // pred_region
      _
    $region69: #{tpu_custom_call.1} parent=1 // pred_fallthru
      _
    // Predicated region
    $region70: #{tpu_custom_call.1} parent=1 // pred_check
      _
    $region71: #{tpu_custom_call.1} parent=1 // pred_check_branch
      %155 = sbr.rel (0) target = $region73
    $region72: #{tpu_custom_call.1} parent=1 // pred_region
      _
    $region73: #{tpu_custom_call.1} parent=1 // pred_fallthru
      _
    // Predicated region
    $region74: #{tpu_custom_call.1} parent=1 // pred_check
      _
    $region75: #{tpu_custom_call.1} parent=1 // pred_check_branch
      %157 = sbr.rel (0) target = $region77
    $region76: #{tpu_custom_call.1} parent=1 // pred_region
      _
    $region77: #{tpu_custom_call.1} parent=1 // pred_fallthru
      _
    // Predicated region
    $region78: #{tpu_custom_call.1} parent=1 // pred_check
      _
    $region79: #{tpu_custom_call.1} parent=1 // pred_check_branch
      %159 = sbr.rel (0) target = $region81
    $region80: #{tpu_custom_call.1} parent=1 // pred_region
      %160 = dma.done [#allocation3], 256
    $region81: #{tpu_custom_call.1} parent=1 // pred_fallthru
      _
    // Predicated region
    $region82: #{tpu_custom_call.1} parent=1 // pred_check
      _
    $region83: #{tpu_custom_call.1} parent=1 // pred_check_branch
      %162 = sbr.rel (0) target = $region85
    $region84: #{tpu_custom_call.1} parent=1 // pred_region
      %163 = dma.done [#allocation6], 256
    $region85: #{tpu_custom_call.1} parent=1 // pred_fallthru
      _
    // Predicated region
    $region86: #{tpu_custom_call.1} parent=1 // pred_check
      _
    $region87: #{tpu_custom_call.1} parent=1 // pred_check_branch
      %165 = sbr.rel (0) target = $region89
    $region88: #{tpu_custom_call.1} parent=1 // pred_region
      %166 = dma.done [#allocation6], 256
    $region89: #{tpu_custom_call.1} parent=1 // pred_fallthru
      _
    // Predicated region
    $region90: #{tpu_custom_call.1} parent=1 // pred_check
      _
    $region91: #{tpu_custom_call.1} parent=1 // pred_check_branch
      %168 = sbr.rel (0) target = $region93
    $region92: #{tpu_custom_call.1} parent=1 // pred_region
      %169 = dma.done [#allocation9], 1024
    $region93: #{tpu_custom_call.1} parent=1 // pred_fallthru
      _
    // Predicated region
    $region94: #{tpu_custom_call.1} parent=1 // pred_check
      _
    $region95: #{tpu_custom_call.1} parent=1 // pred_check_branch
      %171 = sbr.rel (0) target = $region97
    $region96: #{tpu_custom_call.1} parent=1 // pred_region
      %172 = dma.done [#allocation9], 1024
    $region97: #{tpu_custom_call.1} parent=1 // pred_fallthru
      _
    // Predicated region
    $region98: #{tpu_custom_call.1} parent=1 // pred_check
      _
    $region99: #{tpu_custom_call.1} parent=1 // pred_check_branch
      %174 = sbr.rel (0) target = $region101
    $region100: #{tpu_custom_call.1} parent=1 // pred_region
      %175 = dma.done [#allocation12], 1024
    $region101: #{tpu_custom_call.1} parent=1 // pred_fallthru
      _
    // Predicated region
    $region102: #{tpu_custom_call.1} parent=1 // pred_check
      _
    $region103: #{tpu_custom_call.1} parent=1 // pred_check_branch
      %177 = sbr.rel (0) target = $region105
    $region104: #{tpu_custom_call.1} parent=1 // pred_region
      %178 = dma.done [#allocation12], 1024
    $region105: #{tpu_custom_call.1} parent=1 // pred_fallthru
      _
    // Predicated region
    $region106: #{tpu_custom_call.1} parent=1 // pred_check
      _
    $region107: #{tpu_custom_call.1} parent=1 // pred_check_branch
      %180 = sbr.rel (0) target = $region109
    $region108: #{tpu_custom_call.1} parent=1 // pred_region
      %181 = dma.done [#allocation15], 8192
    $region109: #{tpu_custom_call.1} parent=1 // pred_fallthru
      _
    // Predicated region
    $region110: #{tpu_custom_call.1} parent=1 // pred_check
      _
    $region111: #{tpu_custom_call.1} parent=1 // pred_check_branch
      %183 = sbr.rel (0) target = $region113
    $region112: #{tpu_custom_call.1} parent=1 // pred_region
      %184 = dma.done [#allocation15], 8192
    $region113: #{tpu_custom_call.1} parent=1 // pred_fallthru
      _
    %v186 = vld [vmem:[#allocation2] sm:$0xff]
    %v187 = vld [vmem:[#allocation2 + $0x8] sm:$0xff]
    %v188 = vld [vmem:[#allocation5] sm:$0xff]
    %v189 = vld [vmem:[#allocation5 + $0x8] sm:$0xff]
    %v190 = vld [vmem:[#allocation7] sm:$0xff]
    %v191 = vld [vmem:[#allocation7 + $0x8] sm:$0xff]
    %v192 = vpack.c.bf16 %v187, %v186
    %v193 = vld [vmem:[#allocation8] sm:$0xf]
    %v194 = vld [vmem:[#allocation8 + $0x4] sm:$0xf]
    %v195 = vld [vmem:[#allocation8 + $0x8] sm:$0xf]
    %v196 = vld [vmem:[#allocation8 + $0xc] sm:$0xf]
    %v197 = vld [vmem:[#allocation8 + $0x10] sm:$0xf]
    %v198 = vld [vmem:[#allocation8 + $0x14] sm:$0xf]
    %v199 = vld [vmem:[#allocation8 + $0x18] sm:$0xf]
    %v200 = vld [vmem:[#allocation8 + $0x1c] sm:$0xf]
    %v201 = vld [vmem:[#allocation8 + $0x20] sm:$0xf]
    %v202 = vld [vmem:[#allocation8 + $0x24] sm:$0xf]
    %v203 = vld [vmem:[#allocation8 + $0x28] sm:$0xf]
    %v204 = vld [vmem:[#allocation8 + $0x2c] sm:$0xf]
    %v205 = vld [vmem:[#allocation8 + $0x30] sm:$0xf]
    %v206 = vld [vmem:[#allocation8 + $0x34] sm:$0xf]
    %v207 = vld [vmem:[#allocation8 + $0x38] sm:$0xf]
    %v208 = vld [vmem:[#allocation8 + $0x3c] sm:$0xf]
    %v209 = vld [vmem:[%s4] sm:$0x1]
    %v211 = vlaneseq
    %v212 = vshrl.u32 %v211, 7
    %v213 = vsub.s32 0, %v212
    %v214 = vrot.slane %v209, %v213
    %v232 = vunpack.c.l.b16 %v193
    %v233 = vunpack.c.l.b16 %v194
    %v234 = vunpack.c.l.b16 %v195
    %v235 = vunpack.c.l.b16 %v196
    %v236 = vunpack.c.l.b16 %v197
    %v237 = vunpack.c.l.b16 %v198
    %v238 = vunpack.c.l.b16 %v199
    %v239 = vunpack.c.l.b16 %v200
    %v240 = vunpack.c.l.b16 %v201
    %v241 = vunpack.c.l.b16 %v202
    %v242 = vunpack.c.l.b16 %v203
    %v243 = vunpack.c.l.b16 %v204
    %v244 = vunpack.c.l.b16 %v205
    %v245 = vunpack.c.l.b16 %v206
    %v246 = vunpack.c.l.b16 %v207
    %v247 = vunpack.c.l.b16 %v208
    %v248 = vpack.c.b16 %v233, %v232
    %v249 = vpack.c.b16 %v235, %v234
    %v250 = vpack.c.b16 %v237, %v236
    %v251 = vpack.c.b16 %v239, %v238
    %v252 = vpack.c.b16 %v241, %v240
    %v253 = vpack.c.b16 %v243, %v242
    %v254 = vpack.c.b16 %v245, %v244
    %v255 = vpack.c.b16 %v247, %v246
    %264 = vmatprep.subr.bf16.mxu0 0
    %265 = vmatpush1.bf16.msra.mxu0 %v255
    %266 = vmatprep.subr.bf16.mxu0 0
    %267 = vmatpush1.bf16.msra.mxu0 %v254
    %268 = vmatprep.subr.bf16.mxu0 0
    %269 = vmatpush1.bf16.msra.mxu0 %v253
    %270 = vmatprep.subr.bf16.mxu0 0
    %271 = vmatpush1.bf16.msra.mxu0 %v252
    %272 = vmatprep.subr.bf16.mxu0 0
    %273 = vmatpush1.bf16.msra.mxu0 %v251
    %274 = vmatprep.subr.bf16.mxu0 0
    %275 = vmatpush1.bf16.msra.mxu0 %v250
    %276 = vmatprep.subr.bf16.mxu0 0
    %277 = vmatpush1.bf16.msra.mxu0 %v249
    %278 = vmatprep.subr.bf16.mxu0 0
    %279 = vmatpush1.bf16.msra.mxu0 %v248
    %280 = vmatprep.subr.bf16.mxu0 0
    %281 = vmatpush2.bf16.msra.mxu0 0
    %282 = vmatprep.subr.bf16.mxu0 0
    %283 = vmatpush2.bf16.msra.mxu0 0
    %284 = vmatprep.subr.bf16.mxu0 0
    %285 = vmatpush2.bf16.msra.mxu0 0
    %286 = vmatprep.subr.bf16.mxu0 0
    %287 = vmatpush2.bf16.msra.mxu0 0
    %288 = vmatprep.subr.bf16.mxu0 0
    %289 = vmatpush2.bf16.msra.mxu0 0
    %290 = vmatprep.subr.bf16.mxu0 0
    %291 = vmatpush2.bf16.msra.mxu0 0
    %292 = vmatprep.subr.bf16.mxu0 0
    %293 = vmatpush2.bf16.msra.mxu0 0
    %294 = vmatprep.subr.bf16.mxu0 0
    %295 = vmatpush2.bf16.msra.mxu0 0
    %296 = vmatprep.mubr.bf16.mxu0 0
    %297 = vmatmul.mubr.bf16.gmra.mxu0 %v192
    %v298 = vpop.f32.mrf.mxu0
    %v299 = vadd.f32 %v214, %v298
    %v300 = vpop.f32.mrf.mxu0
    %v301 = vpop.f32.mrf.mxu0
    %v302 = vadd.f32 %v214, %v301
    %v303 = vpop.f32.mrf.mxu0
    %304 = vdwg.mxu0
    %v305 = vpack.c.bf16 %v189, %v188
    %v306 = vld [vmem:[#allocation10] sm:$0xf]
    %v307 = vld [vmem:[#allocation10 + $0x4] sm:$0xf]
    %v308 = vld [vmem:[#allocation10 + $0x8] sm:$0xf]
    %v309 = vld [vmem:[#allocation10 + $0xc] sm:$0xf]
    %v310 = vld [vmem:[#allocation10 + $0x10] sm:$0xf]
    %v311 = vld [vmem:[#allocation10 + $0x14] sm:$0xf]
    %v312 = vld [vmem:[#allocation10 + $0x18] sm:$0xf]
    %v313 = vld [vmem:[#allocation10 + $0x1c] sm:$0xf]
    %v314 = vld [vmem:[#allocation10 + $0x20] sm:$0xf]
    %v315 = vld [vmem:[#allocation10 + $0x24] sm:$0xf]
    %v316 = vld [vmem:[#allocation10 + $0x28] sm:$0xf]
    %v317 = vld [vmem:[#allocation10 + $0x2c] sm:$0xf]
    %v318 = vld [vmem:[#allocation10 + $0x30] sm:$0xf]
    %v319 = vld [vmem:[#allocation10 + $0x34] sm:$0xf]
    %v320 = vld [vmem:[#allocation10 + $0x38] sm:$0xf]
    %v321 = vld [vmem:[#allocation10 + $0x3c] sm:$0xf]
    %v322 = vld [vmem:[%s6] sm:$0x1]
    %v324 = vlaneseq
    %v325 = vshrl.u32 %v324, 7
    %v326 = vsub.s32 0, %v325
    %v327 = vrot.slane %v322, %v326
    %v345 = vunpack.c.l.b16 %v306
    %v346 = vunpack.c.l.b16 %v307
    %v347 = vunpack.c.l.b16 %v308
    %v348 = vunpack.c.l.b16 %v309
    %v349 = vunpack.c.l.b16 %v310
    %v350 = vunpack.c.l.b16 %v311
    %v351 = vunpack.c.l.b16 %v312
    %v352 = vunpack.c.l.b16 %v313
    %v353 = vunpack.c.l.b16 %v314
    %v354 = vunpack.c.l.b16 %v315
    %v355 = vunpack.c.l.b16 %v316
    %v356 = vunpack.c.l.b16 %v317
    %v357 = vunpack.c.l.b16 %v318
    %v358 = vunpack.c.l.b16 %v319
    %v359 = vunpack.c.l.b16 %v320
    %v360 = vunpack.c.l.b16 %v321
    %v361 = vpack.c.b16 %v346, %v345
    %v362 = vpack.c.b16 %v348, %v347
    %v363 = vpack.c.b16 %v350, %v349
    %v364 = vpack.c.b16 %v352, %v351
    %v365 = vpack.c.b16 %v354, %v353
    %v366 = vpack.c.b16 %v356, %v355
    %v367 = vpack.c.b16 %v358, %v357
    %v368 = vpack.c.b16 %v360, %v359
    %377 = vmatprep.subr.bf16.mxu0 0
    %378 = vmatpush1.bf16.msra.mxu0 %v368
    %379 = vmatprep.subr.bf16.mxu0 0
    %380 = vmatpush1.bf16.msra.mxu0 %v367
    %381 = vmatprep.subr.bf16.mxu0 0
    %382 = vmatpush1.bf16.msra.mxu0 %v366
    %383 = vmatprep.subr.bf16.mxu0 0
    %384 = vmatpush1.bf16.msra.mxu0 %v365
    %385 = vmatprep.subr.bf16.mxu0 0
    %386 = vmatpush1.bf16.msra.mxu0 %v364
    %387 = vmatprep.subr.bf16.mxu0 0
    %388 = vmatpush1.bf16.msra.mxu0 %v363
    %389 = vmatprep.subr.bf16.mxu0 0
    %390 = vmatpush1.bf16.msra.mxu0 %v362
    %391 = vmatprep.subr.bf16.mxu0 0
    %392 = vmatpush1.bf16.msra.mxu0 %v361
    %393 = vmatprep.subr.bf16.mxu0 0
    %394 = vmatpush2.bf16.msra.mxu0 0
    %395 = vmatprep.subr.bf16.mxu0 0
    %396 = vmatpush2.bf16.msra.mxu0 0
    %397 = vmatprep.subr.bf16.mxu0 0
    %398 = vmatpush2.bf16.msra.mxu0 0
    %399 = vmatprep.subr.bf16.mxu0 0
    %400 = vmatpush2.bf16.msra.mxu0 0
    %401 = vmatprep.subr.bf16.mxu0 0
    %402 = vmatpush2.bf16.msra.mxu0 0
    %403 = vmatprep.subr.bf16.mxu0 0
    %404 = vmatpush2.bf16.msra.mxu0 0
    %405 = vmatprep.subr.bf16.mxu0 0
    %406 = vmatpush2.bf16.msra.mxu0 0
    %407 = vmatprep.subr.bf16.mxu0 0
    %408 = vmatpush2.bf16.msra.mxu0 0
    %409 = vmatprep.mubr.bf16.mxu0 0
    %410 = vmatmul.mubr.bf16.gmra.mxu0 %v305
    %v411 = vpop.f32.mrf.mxu0
    %v412 = vadd.f32 %v327, %v411
    %v413 = vpop.f32.mrf.mxu0
    %v414 = vpop.f32.mrf.mxu0
    %v415 = vadd.f32 %v327, %v414
    %v416 = vpop.f32.mrf.mxu0
    %417 = vdwg.mxu0
    %v418 = vpack.c.bf16 %v191, %v190
    %v419 = vld [vmem:[#allocation11] sm:$0xf]
    %v420 = vld [vmem:[#allocation11 + $0x4] sm:$0xf]
    %v421 = vld [vmem:[#allocation11 + $0x8] sm:$0xf]
    %v422 = vld [vmem:[#allocation11 + $0xc] sm:$0xf]
    %v423 = vld [vmem:[#allocation11 + $0x10] sm:$0xf]
    %v424 = vld [vmem:[#allocation11 + $0x14] sm:$0xf]
    %v425 = vld [vmem:[#allocation11 + $0x18] sm:$0xf]
    %v426 = vld [vmem:[#allocation11 + $0x1c] sm:$0xf]
    %v427 = vld [vmem:[#allocation11 + $0x20] sm:$0xf]
    %v428 = vld [vmem:[#allocation11 + $0x24] sm:$0xf]
    %v429 = vld [vmem:[#allocation11 + $0x28] sm:$0xf]
    %v430 = vld [vmem:[#allocation11 + $0x2c] sm:$0xf]
    %v431 = vld [vmem:[#allocation11 + $0x30] sm:$0xf]
    %v432 = vld [vmem:[#allocation11 + $0x34] sm:$0xf]
    %v433 = vld [vmem:[#allocation11 + $0x38] sm:$0xf]
    %v434 = vld [vmem:[#allocation11 + $0x3c] sm:$0xf]
    %v435 = vld [vmem:[%s8] sm:$0x1]
    %v437 = vlaneseq
    %v438 = vshrl.u32 %v437, 7
    %v439 = vsub.s32 0, %v438
    %v440 = vrot.slane %v435, %v439
    %v458 = vunpack.c.l.b16 %v419
    %v459 = vunpack.c.l.b16 %v420
    %v460 = vunpack.c.l.b16 %v421
    %v461 = vunpack.c.l.b16 %v422
    %v462 = vunpack.c.l.b16 %v423
    %v463 = vunpack.c.l.b16 %v424
    %v464 = vunpack.c.l.b16 %v425
    %v465 = vunpack.c.l.b16 %v426
    %v466 = vunpack.c.l.b16 %v427
    %v467 = vunpack.c.l.b16 %v428
    %v468 = vunpack.c.l.b16 %v429
    %v469 = vunpack.c.l.b16 %v430
    %v470 = vunpack.c.l.b16 %v431
    %v471 = vunpack.c.l.b16 %v432
    %v472 = vunpack.c.l.b16 %v433
    %v473 = vunpack.c.l.b16 %v434
    %v474 = vpack.c.b16 %v459, %v458
    %v475 = vpack.c.b16 %v461, %v460
    %v476 = vpack.c.b16 %v463, %v462
    %v477 = vpack.c.b16 %v465, %v464
    %v478 = vpack.c.b16 %v467, %v466
    %v479 = vpack.c.b16 %v469, %v468
    %v480 = vpack.c.b16 %v471, %v470
    %v481 = vpack.c.b16 %v473, %v472
    %490 = vmatprep.subr.bf16.mxu0 0
    %491 = vmatpush1.bf16.msra.mxu0 %v481
    %492 = vmatprep.subr.bf16.mxu0 0
    %493 = vmatpush1.bf16.msra.mxu0 %v480
    %494 = vmatprep.subr.bf16.mxu0 0
    %495 = vmatpush1.bf16.msra.mxu0 %v479
    %496 = vmatprep.subr.bf16.mxu0 0
    %497 = vmatpush1.bf16.msra.mxu0 %v478
    %498 = vmatprep.subr.bf16.mxu0 0
    %499 = vmatpush1.bf16.msra.mxu0 %v477
    %500 = vmatprep.subr.bf16.mxu0 0
    %501 = vmatpush1.bf16.msra.mxu0 %v476
    %502 = vmatprep.subr.bf16.mxu0 0
    %503 = vmatpush1.bf16.msra.mxu0 %v475
    %504 = vmatprep.subr.bf16.mxu0 0
    %505 = vmatpush1.bf16.msra.mxu0 %v474
    %506 = vmatprep.subr.bf16.mxu0 0
    %507 = vmatpush2.bf16.msra.mxu0 0
    %508 = vmatprep.subr.bf16.mxu0 0
    %509 = vmatpush2.bf16.msra.mxu0 0
    %510 = vmatprep.subr.bf16.mxu0 0
    %511 = vmatpush2.bf16.msra.mxu0 0
    %512 = vmatprep.subr.bf16.mxu0 0
    %513 = vmatpush2.bf16.msra.mxu0 0
    %514 = vmatprep.subr.bf16.mxu0 0
    %515 = vmatpush2.bf16.msra.mxu0 0
    %516 = vmatprep.subr.bf16.mxu0 0
    %517 = vmatpush2.bf16.msra.mxu0 0
    %518 = vmatprep.subr.bf16.mxu0 0
    %519 = vmatpush2.bf16.msra.mxu0 0
    %520 = vmatprep.subr.bf16.mxu0 0
    %521 = vmatpush2.bf16.msra.mxu0 0
    %522 = vmatprep.mubr.bf16.mxu0 0
    %523 = vmatmul.mubr.bf16.gmra.mxu0 %v418
    %v524 = vpop.f32.mrf.mxu0
    %v525 = vadd.f32 %v440, %v524
    %v526 = vpop.f32.mrf.mxu0
    %v527 = vpop.f32.mrf.mxu0
    %v528 = vadd.f32 %v440, %v527
    %v529 = vpop.f32.mrf.mxu0
    %530 = vdwg.mxu0
    %v531 = vmul.f32 %v299, 0.25
    %v532 = vmul.f32 %v302, 0.25
    %v533 = vpack.c.bf16 %v532, %v531
    %v534 = vpack.c.bf16 %v415, %v412
    %v535 = vpack.c.bf16 %v528, %v525
    %vm536 = vcmask 130048
    %v538 = vsel %vm536, %v533, 0
    %v541 = vsel %vm536, %v534, 0
    %543 = vmatprep.subr.bf16.mxu0 0
    %544 = vmatpush1.bf16.xpose.msra.mxu0 0
    %545 = vmatprep.subr.bf16.mxu0 0
    %546 = vmatpush1.bf16.xpose.msra.mxu0 0
    %547 = vmatprep.subr.bf16.mxu0 0
    %548 = vmatpush1.bf16.xpose.msra.mxu0 0
    %549 = vmatprep.subr.bf16.mxu0 0
    %550 = vmatpush1.bf16.xpose.msra.mxu0 0
    %551 = vmatprep.subr.bf16.mxu0 0
    %552 = vmatpush1.bf16.xpose.msra.mxu0 0
    %553 = vmatprep.subr.bf16.mxu0 0
    %554 = vmatpush1.bf16.xpose.msra.mxu0 0
    %555 = vmatprep.subr.bf16.mxu0 0
    %556 = vmatpush1.bf16.xpose.msra.mxu0 0
    %557 = vmatprep.subr.bf16.mxu0 0
    %558 = vmatpush1.bf16.xpose.msra.mxu0 %v541
    %559 = vmatprep.subr.bf16.mxu0 0
    %560 = vmatpush2.bf16.xpose.msra.mxu0 0
    %561 = vmatprep.subr.bf16.mxu0 0
    %562 = vmatpush2.bf16.xpose.msra.mxu0 0
    %563 = vmatprep.subr.bf16.mxu0 0
    %564 = vmatpush2.bf16.xpose.msra.mxu0 0
    %565 = vmatprep.subr.bf16.mxu0 0
    %566 = vmatpush2.bf16.xpose.msra.mxu0 0
    %567 = vmatprep.subr.bf16.mxu0 0
    %568 = vmatpush2.bf16.xpose.msra.mxu0 0
    %569 = vmatprep.subr.bf16.mxu0 0
    %570 = vmatpush2.bf16.xpose.msra.mxu0 0
    %571 = vmatprep.subr.bf16.mxu0 0
    %572 = vmatpush2.bf16.xpose.msra.mxu0 0
    %573 = vmatprep.subr.bf16.mxu0 0
    %574 = vmatpush2.bf16.xpose.msra.mxu0 0
    %575 = vmatprep.mubr.bf16.mxu0 0
    %576 = vmatmul.mubr.bf16.gmra.mxu0 %v538
    %v577 = vpop.f32.mrf.mxu0
    %v578 = vadd.f32 0.0, %v577
    %v579 = vpop.f32.mrf.mxu0
    %v580 = vpop.f32.mrf.mxu0
    %v581 = vpop.f32.mrf.mxu0
    %582 = vdwg.mxu0
    %vm583 = vcmask 64512
    %v584 = vsel %vm583, %v578, -inf
    %585 = vmax.xlane.f32.xlu0 %v584
    %v586 = vpop.xlane.xlu0 %585
    %v587 = vsub.f32 %v578, %v586
    %v588 = vmul.f32 %v587, 1.442695
    %v589 = vpow.pop %v588
    %v590 = vsel %vm583, %v589, 0.0
    %591 = vadd.xlane.f32.xlu0 %v590
    %v592 = vpop.xlane.xlu0 %591
    %v593 = vrcp.pop %v592
    %v594 = vmul.f32 %v589, %v593
    %v595 = vpack.c.bf16 %v594, %v594
    %v597 = vsel %vm583, %v595, 0
    %vm599 = vcmask 1043456
    %v601 = vsel %vm599, %v535, 0
    %603 = vmatprep.subr.bf16.mxu0 0
    %604 = vmatpush1.bf16.msra.mxu0 0
    %605 = vmatprep.subr.bf16.mxu0 0
    %606 = vmatpush1.bf16.msra.mxu0 0
    %607 = vmatprep.subr.bf16.mxu0 0
    %608 = vmatpush1.bf16.msra.mxu0 0
    %609 = vmatprep.subr.bf16.mxu0 0
    %610 = vmatpush1.bf16.msra.mxu0 0
    %611 = vmatprep.subr.bf16.mxu0 0
    %612 = vmatpush1.bf16.msra.mxu0 0
    %613 = vmatprep.subr.bf16.mxu0 0
    %614 = vmatpush1.bf16.msra.mxu0 0
    %615 = vmatprep.subr.bf16.mxu0 0
    %616 = vmatpush1.bf16.msra.mxu0 0
    %617 = vmatprep.subr.bf16.mxu0 0
    %618 = vmatpush1.bf16.msra.mxu0 %v601
    %619 = vmatprep.subr.bf16.mxu0 0
    %620 = vmatpush2.bf16.msra.mxu0 0
    %621 = vmatprep.subr.bf16.mxu0 0
    %622 = vmatpush2.bf16.msra.mxu0 0
    %623 = vmatprep.subr.bf16.mxu0 0
    %624 = vmatpush2.bf16.msra.mxu0 0
    %625 = vmatprep.subr.bf16.mxu0 0
    %626 = vmatpush2.bf16.msra.mxu0 0
    %627 = vmatprep.subr.bf16.mxu0 0
    %628 = vmatpush2.bf16.msra.mxu0 0
    %629 = vmatprep.subr.bf16.mxu0 0
    %630 = vmatpush2.bf16.msra.mxu0 0
    %631 = vmatprep.subr.bf16.mxu0 0
    %632 = vmatpush2.bf16.msra.mxu0 0
    %633 = vmatprep.subr.bf16.mxu0 0
    %634 = vmatpush2.bf16.msra.mxu0 0
    %635 = vmatprep.mubr.bf16.mxu0 0
    %636 = vmatmul.mubr.bf16.gmra.mxu0 %v597
    %v637 = vpop.f32.mrf.mxu0
    %v638 = vadd.f32 0.0, %v637
    %v639 = vpop.f32.mrf.mxu0
    %v640 = vpop.f32.mrf.mxu0
    %v641 = vpop.f32.mrf.mxu0
    %642 = vdwg.mxu0
    %644 = vrot.lane.b32.xlu0 %v533, 112
    %v645 = vpop.permute.xlu0 %644
    %647 = vrot.lane.b32.xlu0 %v534, 112
    %v648 = vpop.permute.xlu0 %647
    %v650 = vsel %vm536, %v645, 0
    %v653 = vsel %vm536, %v648, 0
    %655 = vmatprep.subr.bf16.mxu0 0
    %656 = vmatpush1.bf16.xpose.msra.mxu0 0
    %657 = vmatprep.subr.bf16.mxu0 0
    %658 = vmatpush1.bf16.xpose.msra.mxu0 0
    %659 = vmatprep.subr.bf16.mxu0 0
    %660 = vmatpush1.bf16.xpose.msra.mxu0 0
    %661 = vmatprep.subr.bf16.mxu0 0
    %662 = vmatpush1.bf16.xpose.msra.mxu0 0
    %663 = vmatprep.subr.bf16.mxu0 0
    %664 = vmatpush1.bf16.xpose.msra.mxu0 0
    %665 = vmatprep.subr.bf16.mxu0 0
    %666 = vmatpush1.bf16.xpose.msra.mxu0 0
    %667 = vmatprep.subr.bf16.mxu0 0
    %668 = vmatpush1.bf16.xpose.msra.mxu0 0
    %669 = vmatprep.subr.bf16.mxu0 0
    %670 = vmatpush1.bf16.xpose.msra.mxu0 %v653
    %671 = vmatprep.subr.bf16.mxu0 0
    %672 = vmatpush2.bf16.xpose.msra.mxu0 0
    %673 = vmatprep.subr.bf16.mxu0 0
    %674 = vmatpush2.bf16.xpose.msra.mxu0 0
    %675 = vmatprep.subr.bf16.mxu0 0
    %676 = vmatpush2.bf16.xpose.msra.mxu0 0
    %677 = vmatprep.subr.bf16.mxu0 0
    %678 = vmatpush2.bf16.xpose.msra.mxu0 0
    %679 = vmatprep.subr.bf16.mxu0 0
    %680 = vmatpush2.bf16.xpose.msra.mxu0 0
    %681 = vmatprep.subr.bf16.mxu0 0
    %682 = vmatpush2.bf16.xpose.msra.mxu0 0
    %683 = vmatprep.subr.bf16.mxu0 0
    %684 = vmatpush2.bf16.xpose.msra.mxu0 0
    %685 = vmatprep.subr.bf16.mxu0 0
    %686 = vmatpush2.bf16.xpose.msra.mxu0 0
    %687 = vmatprep.mubr.bf16.mxu0 0
    %688 = vmatmul.mubr.bf16.gmra.mxu0 %v650
    %v689 = vpop.f32.mrf.mxu0
    %v690 = vadd.f32 0.0, %v689
    %v691 = vpop.f32.mrf.mxu0
    %v692 = vpop.f32.mrf.mxu0
    %v693 = vpop.f32.mrf.mxu0
    %694 = vdwg.mxu0
    %v695 = vsel %vm583, %v690, -inf
    %696 = vmax.xlane.f32.xlu0 %v695
    %v697 = vpop.xlane.xlu0 %696
    %v698 = vsub.f32 %v690, %v697
    %v699 = vmul.f32 %v698, 1.442695
    %v700 = vpow.pop %v699
    %v701 = vsel %vm583, %v700, 0.0
    %702 = vadd.xlane.f32.xlu0 %v701
    %v703 = vpop.xlane.xlu0 %702
    %v704 = vrcp.pop %v703
    %v705 = vmul.f32 %v700, %v704
    %v706 = vpack.c.bf16 %v705, %v705
    %708 = vrot.lane.b32.xlu0 %v535, 112
    %v709 = vpop.permute.xlu0 %708
    %v711 = vsel %vm583, %v706, 0
    %v714 = vsel %vm599, %v709, 0
    %716 = vmatprep.subr.bf16.mxu0 0
    %717 = vmatpush1.bf16.msra.mxu0 0
    %718 = vmatprep.subr.bf16.mxu0 0
    %719 = vmatpush1.bf16.msra.mxu0 0
    %720 = vmatprep.subr.bf16.mxu0 0
    %721 = vmatpush1.bf16.msra.mxu0 0
    %722 = vmatprep.subr.bf16.mxu0 0
    %723 = vmatpush1.bf16.msra.mxu0 0
    %724 = vmatprep.subr.bf16.mxu0 0
    %725 = vmatpush1.bf16.msra.mxu0 0
    %726 = vmatprep.subr.bf16.mxu0 0
    %727 = vmatpush1.bf16.msra.mxu0 0
    %728 = vmatprep.subr.bf16.mxu0 0
    %729 = vmatpush1.bf16.msra.mxu0 0
    %730 = vmatprep.subr.bf16.mxu0 0
    %731 = vmatpush1.bf16.msra.mxu0 %v714
    %732 = vmatprep.subr.bf16.mxu0 0
    %733 = vmatpush2.bf16.msra.mxu0 0
    %734 = vmatprep.subr.bf16.mxu0 0
    %735 = vmatpush2.bf16.msra.mxu0 0
    %736 = vmatprep.subr.bf16.mxu0 0
    %737 = vmatpush2.bf16.msra.mxu0 0
    %738 = vmatprep.subr.bf16.mxu0 0
    %739 = vmatpush2.bf16.msra.mxu0 0
    %740 = vmatprep.subr.bf16.mxu0 0
    %741 = vmatpush2.bf16.msra.mxu0 0
    %742 = vmatprep.subr.bf16.mxu0 0
    %743 = vmatpush2.bf16.msra.mxu0 0
    %744 = vmatprep.subr.bf16.mxu0 0
    %745 = vmatpush2.bf16.msra.mxu0 0
    %746 = vmatprep.subr.bf16.mxu0 0
    %747 = vmatpush2.bf16.msra.mxu0 0
    %748 = vmatprep.mubr.bf16.mxu0 0
    %749 = vmatmul.mubr.bf16.gmra.mxu0 %v711
    %v750 = vpop.f32.mrf.mxu0
    %v751 = vadd.f32 0.0, %v750
    %v752 = vpop.f32.mrf.mxu0
    %v753 = vpop.f32.mrf.mxu0
    %v754 = vpop.f32.mrf.mxu0
    %755 = vdwg.mxu0
    %756 = vrot.lane.b32.xlu0 %v533, 96
    %v757 = vpop.permute.xlu0 %756
    %758 = vrot.lane.b32.xlu0 %v534, 96
    %v759 = vpop.permute.xlu0 %758
    %v761 = vsel %vm536, %v757, 0
    %v764 = vsel %vm536, %v759, 0
    %766 = vmatprep.subr.bf16.mxu0 0
    %767 = vmatpush1.bf16.xpose.msra.mxu0 0
    %768 = vmatprep.subr.bf16.mxu0 0
    %769 = vmatpush1.bf16.xpose.msra.mxu0 0
    %770 = vmatprep.subr.bf16.mxu0 0
    %771 = vmatpush1.bf16.xpose.msra.mxu0 0
    %772 = vmatprep.subr.bf16.mxu0 0
    %773 = vmatpush1.bf16.xpose.msra.mxu0 0
    %774 = vmatprep.subr.bf16.mxu0 0
    %775 = vmatpush1.bf16.xpose.msra.mxu0 0
    %776 = vmatprep.subr.bf16.mxu0 0
    %777 = vmatpush1.bf16.xpose.msra.mxu0 0
    %778 = vmatprep.subr.bf16.mxu0 0
    %779 = vmatpush1.bf16.xpose.msra.mxu0 0
    %780 = vmatprep.subr.bf16.mxu0 0
    %781 = vmatpush1.bf16.xpose.msra.mxu0 %v764
    %782 = vmatprep.subr.bf16.mxu0 0
    %783 = vmatpush2.bf16.xpose.msra.mxu0 0
    %784 = vmatprep.subr.bf16.mxu0 0
    %785 = vmatpush2.bf16.xpose.msra.mxu0 0
    %786 = vmatprep.subr.bf16.mxu0 0
    %787 = vmatpush2.bf16.xpose.msra.mxu0 0
    %788 = vmatprep.subr.bf16.mxu0 0
    %789 = vmatpush2.bf16.xpose.msra.mxu0 0
    %790 = vmatprep.subr.bf16.mxu0 0
    %791 = vmatpush2.bf16.xpose.msra.mxu0 0
    %792 = vmatprep.subr.bf16.mxu0 0
    %793 = vmatpush2.bf16.xpose.msra.mxu0 0
    %794 = vmatprep.subr.bf16.mxu0 0
    %795 = vmatpush2.bf16.xpose.msra.mxu0 0
    %796 = vmatprep.subr.bf16.mxu0 0
    %797 = vmatpush2.bf16.xpose.msra.mxu0 0
    %798 = vmatprep.mubr.bf16.mxu0 0
    %799 = vmatmul.mubr.bf16.gmra.mxu0 %v761
    %v800 = vpop.f32.mrf.mxu0
    %v801 = vadd.f32 0.0, %v800
    %v802 = vpop.f32.mrf.mxu0
    %v803 = vpop.f32.mrf.mxu0
    %v804 = vpop.f32.mrf.mxu0
    %805 = vdwg.mxu0
    %v806 = vsel %vm583, %v801, -inf
    %807 = vmax.xlane.f32.xlu0 %v806
    %v808 = vpop.xlane.xlu0 %807
    %v809 = vsub.f32 %v801, %v808
    %v810 = vmul.f32 %v809, 1.442695
    %v811 = vpow.pop %v810
    %v812 = vsel %vm583, %v811, 0.0
    %813 = vadd.xlane.f32.xlu0 %v812
    %v814 = vpop.xlane.xlu0 %813
    %v815 = vrcp.pop %v814
    %v816 = vmul.f32 %v811, %v815
    %v817 = vpack.c.bf16 %v816, %v816
    %818 = vrot.lane.b32.xlu0 %v535, 96
    %v819 = vpop.permute.xlu0 %818
    %v821 = vsel %vm583, %v817, 0
    %v824 = vsel %vm599, %v819, 0
    %826 = vmatprep.subr.bf16.mxu0 0
    %827 = vmatpush1.bf16.msra.mxu0 0
    %828 = vmatprep.subr.bf16.mxu0 0
    %829 = vmatpush1.bf16.msra.mxu0 0
    %830 = vmatprep.subr.bf16.mxu0 0
    %831 = vmatpush1.bf16.msra.mxu0 0
    %832 = vmatprep.subr.bf16.mxu0 0
    %833 = vmatpush1.bf16.msra.mxu0 0
    %834 = vmatprep.subr.bf16.mxu0 0
    %835 = vmatpush1.bf16.msra.mxu0 0
    %836 = vmatprep.subr.bf16.mxu0 0
    %837 = vmatpush1.bf16.msra.mxu0 0
    %838 = vmatprep.subr.bf16.mxu0 0
    %839 = vmatpush1.bf16.msra.mxu0 0
    %840 = vmatprep.subr.bf16.mxu0 0
    %841 = vmatpush1.bf16.msra.mxu0 %v824
    %842 = vmatprep.subr.bf16.mxu0 0
    %843 = vmatpush2.bf16.msra.mxu0 0
    %844 = vmatprep.subr.bf16.mxu0 0
    %845 = vmatpush2.bf16.msra.mxu0 0
    %846 = vmatprep.subr.bf16.mxu0 0
    %847 = vmatpush2.bf16.msra.mxu0 0
    %848 = vmatprep.subr.bf16.mxu0 0
    %849 = vmatpush2.bf16.msra.mxu0 0
    %850 = vmatprep.subr.bf16.mxu0 0
    %851 = vmatpush2.bf16.msra.mxu0 0
    %852 = vmatprep.subr.bf16.mxu0 0
    %853 = vmatpush2.bf16.msra.mxu0 0
    %854 = vmatprep.subr.bf16.mxu0 0
    %855 = vmatpush2.bf16.msra.mxu0 0
    %856 = vmatprep.subr.bf16.mxu0 0
    %857 = vmatpush2.bf16.msra.mxu0 0
    %858 = vmatprep.mubr.bf16.mxu0 0
    %859 = vmatmul.mubr.bf16.gmra.mxu0 %v821
    %v860 = vpop.f32.mrf.mxu0
    %v861 = vadd.f32 0.0, %v860
    %v862 = vpop.f32.mrf.mxu0
    %v863 = vpop.f32.mrf.mxu0
    %v864 = vpop.f32.mrf.mxu0
    %865 = vdwg.mxu0
    %866 = vrot.lane.b32.xlu0 %v533, 80
    %v867 = vpop.permute.xlu0 %866
    %868 = vrot.lane.b32.xlu0 %v534, 80
    %v869 = vpop.permute.xlu0 %868
    %v871 = vsel %vm536, %v867, 0
    %v874 = vsel %vm536, %v869, 0
    %876 = vmatprep.subr.bf16.mxu0 0
    %877 = vmatpush1.bf16.xpose.msra.mxu0 0
    %878 = vmatprep.subr.bf16.mxu0 0
    %879 = vmatpush1.bf16.xpose.msra.mxu0 0
    %880 = vmatprep.subr.bf16.mxu0 0
    %881 = vmatpush1.bf16.xpose.msra.mxu0 0
    %882 = vmatprep.subr.bf16.mxu0 0
    %883 = vmatpush1.bf16.xpose.msra.mxu0 0
    %884 = vmatprep.subr.bf16.mxu0 0
    %885 = vmatpush1.bf16.xpose.msra.mxu0 0
    %886 = vmatprep.subr.bf16.mxu0 0
    %887 = vmatpush1.bf16.xpose.msra.mxu0 0
    %888 = vmatprep.subr.bf16.mxu0 0
    %889 = vmatpush1.bf16.xpose.msra.mxu0 0
    %890 = vmatprep.subr.bf16.mxu0 0
    %891 = vmatpush1.bf16.xpose.msra.mxu0 %v874
    %892 = vmatprep.subr.bf16.mxu0 0
    %893 = vmatpush2.bf16.xpose.msra.mxu0 0
    %894 = vmatprep.subr.bf16.mxu0 0
    %895 = vmatpush2.bf16.xpose.msra.mxu0 0
    %896 = vmatprep.subr.bf16.mxu0 0
    %897 = vmatpush2.bf16.xpose.msra.mxu0 0
    %898 = vmatprep.subr.bf16.mxu0 0
    %899 = vmatpush2.bf16.xpose.msra.mxu0 0
    %900 = vmatprep.subr.bf16.mxu0 0
    %901 = vmatpush2.bf16.xpose.msra.mxu0 0
    %902 = vmatprep.subr.bf16.mxu0 0
    %903 = vmatpush2.bf16.xpose.msra.mxu0 0
    %904 = vmatprep.subr.bf16.mxu0 0
    %905 = vmatpush2.bf16.xpose.msra.mxu0 0
    %906 = vmatprep.subr.bf16.mxu0 0
    %907 = vmatpush2.bf16.xpose.msra.mxu0 0
    %908 = vmatprep.mubr.bf16.mxu0 0
    %909 = vmatmul.mubr.bf16.gmra.mxu0 %v871
    %v910 = vpop.f32.mrf.mxu0
    %v911 = vadd.f32 0.0, %v910
    %v912 = vpop.f32.mrf.mxu0
    %v913 = vpop.f32.mrf.mxu0
    %v914 = vpop.f32.mrf.mxu0
    %915 = vdwg.mxu0
    %v916 = vsel %vm583, %v911, -inf
    %917 = vmax.xlane.f32.xlu0 %v916
    %v918 = vpop.xlane.xlu0 %917
    %v919 = vsub.f32 %v911, %v918
    %v920 = vmul.f32 %v919, 1.442695
    %v921 = vpow.pop %v920
    %v922 = vsel %vm583, %v921, 0.0
    %923 = vadd.xlane.f32.xlu0 %v922
    %v924 = vpop.xlane.xlu0 %923
    %v925 = vrcp.pop %v924
    %v926 = vmul.f32 %v921, %v925
    %v927 = vpack.c.bf16 %v926, %v926
    %928 = vrot.lane.b32.xlu0 %v535, 80
    %v929 = vpop.permute.xlu0 %928
    %v931 = vsel %vm583, %v927, 0
    %v934 = vsel %vm599, %v929, 0
    %936 = vmatprep.subr.bf16.mxu0 0
    %937 = vmatpush1.bf16.msra.mxu0 0
    %938 = vmatprep.subr.bf16.mxu0 0
    %939 = vmatpush1.bf16.msra.mxu0 0
    %940 = vmatprep.subr.bf16.mxu0 0
    %941 = vmatpush1.bf16.msra.mxu0 0
    %942 = vmatprep.subr.bf16.mxu0 0
    %943 = vmatpush1.bf16.msra.mxu0 0
    %944 = vmatprep.subr.bf16.mxu0 0
    %945 = vmatpush1.bf16.msra.mxu0 0
    %946 = vmatprep.subr.bf16.mxu0 0
    %947 = vmatpush1.bf16.msra.mxu0 0
    %948 = vmatprep.subr.bf16.mxu0 0
    %949 = vmatpush1.bf16.msra.mxu0 0
    %950 = vmatprep.subr.bf16.mxu0 0
    %951 = vmatpush1.bf16.msra.mxu0 %v934
    %952 = vmatprep.subr.bf16.mxu0 0
    %953 = vmatpush2.bf16.msra.mxu0 0
    %954 = vmatprep.subr.bf16.mxu0 0
    %955 = vmatpush2.bf16.msra.mxu0 0
    %956 = vmatprep.subr.bf16.mxu0 0
    %957 = vmatpush2.bf16.msra.mxu0 0
    %958 = vmatprep.subr.bf16.mxu0 0
    %959 = vmatpush2.bf16.msra.mxu0 0
    %960 = vmatprep.subr.bf16.mxu0 0
    %961 = vmatpush2.bf16.msra.mxu0 0
    %962 = vmatprep.subr.bf16.mxu0 0
    %963 = vmatpush2.bf16.msra.mxu0 0
    %964 = vmatprep.subr.bf16.mxu0 0
    %965 = vmatpush2.bf16.msra.mxu0 0
    %966 = vmatprep.subr.bf16.mxu0 0
    %967 = vmatpush2.bf16.msra.mxu0 0
    %968 = vmatprep.mubr.bf16.mxu0 0
    %969 = vmatmul.mubr.bf16.gmra.mxu0 %v931
    %v970 = vpop.f32.mrf.mxu0
    %v971 = vadd.f32 0.0, %v970
    %v972 = vpop.f32.mrf.mxu0
    %v973 = vpop.f32.mrf.mxu0
    %v974 = vpop.f32.mrf.mxu0
    %975 = vdwg.mxu0
    %976 = vrot.lane.b32.xlu0 %v533, 64
    %v977 = vpop.permute.xlu0 %976
    %978 = vrot.lane.b32.xlu0 %v534, 64
    %v979 = vpop.permute.xlu0 %978
    %v981 = vsel %vm536, %v977, 0
    %v984 = vsel %vm536, %v979, 0
    %986 = vmatprep.subr.bf16.mxu0 0
    %987 = vmatpush1.bf16.xpose.msra.mxu0 0
    %988 = vmatprep.subr.bf16.mxu0 0
    %989 = vmatpush1.bf16.xpose.msra.mxu0 0
    %990 = vmatprep.subr.bf16.mxu0 0
    %991 = vmatpush1.bf16.xpose.msra.mxu0 0
    %992 = vmatprep.subr.bf16.mxu0 0
    %993 = vmatpush1.bf16.xpose.msra.mxu0 0
    %994 = vmatprep.subr.bf16.mxu0 0
    %995 = vmatpush1.bf16.xpose.msra.mxu0 0
    %996 = vmatprep.subr.bf16.mxu0 0
    %997 = vmatpush1.bf16.xpose.msra.mxu0 0
    %998 = vmatprep.subr.bf16.mxu0 0
    %999 = vmatpush1.bf16.xpose.msra.mxu0 0
    %1000 = vmatprep.subr.bf16.mxu0 0
    %1001 = vmatpush1.bf16.xpose.msra.mxu0 %v984
    %1002 = vmatprep.subr.bf16.mxu0 0
    %1003 = vmatpush2.bf16.xpose.msra.mxu0 0
    %1004 = vmatprep.subr.bf16.mxu0 0
    %1005 = vmatpush2.bf16.xpose.msra.mxu0 0
    %1006 = vmatprep.subr.bf16.mxu0 0
    %1007 = vmatpush2.bf16.xpose.msra.mxu0 0
    %1008 = vmatprep.subr.bf16.mxu0 0
    %1009 = vmatpush2.bf16.xpose.msra.mxu0 0
    %1010 = vmatprep.subr.bf16.mxu0 0
    %1011 = vmatpush2.bf16.xpose.msra.mxu0 0
    %1012 = vmatprep.subr.bf16.mxu0 0
    %1013 = vmatpush2.bf16.xpose.msra.mxu0 0
    %1014 = vmatprep.subr.bf16.mxu0 0
    %1015 = vmatpush2.bf16.xpose.msra.mxu0 0
    %1016 = vmatprep.subr.bf16.mxu0 0
    %1017 = vmatpush2.bf16.xpose.msra.mxu0 0
    %1018 = vmatprep.mubr.bf16.mxu0 0
    %1019 = vmatmul.mubr.bf16.gmra.mxu0 %v981
    %v1020 = vpop.f32.mrf.mxu0
    %v1021 = vadd.f32 0.0, %v1020
    %v1022 = vpop.f32.mrf.mxu0
    %v1023 = vpop.f32.mrf.mxu0
    %v1024 = vpop.f32.mrf.mxu0
    %1025 = vdwg.mxu0
    %v1026 = vsel %vm583, %v1021, -inf
    %1027 = vmax.xlane.f32.xlu0 %v1026
    %v1028 = vpop.xlane.xlu0 %1027
    %v1029 = vsub.f32 %v1021, %v1028
    %v1030 = vmul.f32 %v1029, 1.442695
    %v1031 = vpow.pop %v1030
    %v1032 = vsel %vm583, %v1031, 0.0
    %1033 = vadd.xlane.f32.xlu0 %v1032
    %v1034 = vpop.xlane.xlu0 %1033
    %v1035 = vrcp.pop %v1034
    %v1036 = vmul.f32 %v1031, %v1035
    %v1037 = vpack.c.bf16 %v1036, %v1036
    %1038 = vrot.lane.b32.xlu0 %v535, 64
    %v1039 = vpop.permute.xlu0 %1038
    %v1041 = vsel %vm583, %v1037, 0
    %v1044 = vsel %vm599, %v1039, 0
    %1046 = vmatprep.subr.bf16.mxu0 0
    %1047 = vmatpush1.bf16.msra.mxu0 0
    %1048 = vmatprep.subr.bf16.mxu0 0
    %1049 = vmatpush1.bf16.msra.mxu0 0
    %1050 = vmatprep.subr.bf16.mxu0 0
    %1051 = vmatpush1.bf16.msra.mxu0 0
    %1052 = vmatprep.subr.bf16.mxu0 0
    %1053 = vmatpush1.bf16.msra.mxu0 0
    %1054 = vmatprep.subr.bf16.mxu0 0
    %1055 = vmatpush1.bf16.msra.mxu0 0
    %1056 = vmatprep.subr.bf16.mxu0 0
    %1057 = vmatpush1.bf16.msra.mxu0 0
    %1058 = vmatprep.subr.bf16.mxu0 0
    %1059 = vmatpush1.bf16.msra.mxu0 0
    %1060 = vmatprep.subr.bf16.mxu0 0
    %1061 = vmatpush1.bf16.msra.mxu0 %v1044
    %1062 = vmatprep.subr.bf16.mxu0 0
    %1063 = vmatpush2.bf16.msra.mxu0 0
    %1064 = vmatprep.subr.bf16.mxu0 0
    %1065 = vmatpush2.bf16.msra.mxu0 0
    %1066 = vmatprep.subr.bf16.mxu0 0
    %1067 = vmatpush2.bf16.msra.mxu0 0
    %1068 = vmatprep.subr.bf16.mxu0 0
    %1069 = vmatpush2.bf16.msra.mxu0 0
    %1070 = vmatprep.subr.bf16.mxu0 0
    %1071 = vmatpush2.bf16.msra.mxu0 0
    %1072 = vmatprep.subr.bf16.mxu0 0
    %1073 = vmatpush2.bf16.msra.mxu0 0
    %1074 = vmatprep.subr.bf16.mxu0 0
    %1075 = vmatpush2.bf16.msra.mxu0 0
    %1076 = vmatprep.subr.bf16.mxu0 0
    %1077 = vmatpush2.bf16.msra.mxu0 0
    %1078 = vmatprep.mubr.bf16.mxu0 0
    %1079 = vmatmul.mubr.bf16.gmra.mxu0 %v1041
    %v1080 = vpop.f32.mrf.mxu0
    %v1081 = vadd.f32 0.0, %v1080
    %v1082 = vpop.f32.mrf.mxu0
    %v1083 = vpop.f32.mrf.mxu0
    %v1084 = vpop.f32.mrf.mxu0
    %1085 = vdwg.mxu0
    %1086 = vrot.lane.b32.xlu0 %v533, 48
    %v1087 = vpop.permute.xlu0 %1086
    %1088 = vrot.lane.b32.xlu0 %v534, 48
    %v1089 = vpop.permute.xlu0 %1088
    %v1091 = vsel %vm536, %v1087, 0
    %v1094 = vsel %vm536, %v1089, 0
    %1096 = vmatprep.subr.bf16.mxu0 0
    %1097 = vmatpush1.bf16.xpose.msra.mxu0 0
    %1098 = vmatprep.subr.bf16.mxu0 0
    %1099 = vmatpush1.bf16.xpose.msra.mxu0 0
    %1100 = vmatprep.subr.bf16.mxu0 0
    %1101 = vmatpush1.bf16.xpose.msra.mxu0 0
    %1102 = vmatprep.subr.bf16.mxu0 0
    %1103 = vmatpush1.bf16.xpose.msra.mxu0 0
    %1104 = vmatprep.subr.bf16.mxu0 0
    %1105 = vmatpush1.bf16.xpose.msra.mxu0 0
    %1106 = vmatprep.subr.bf16.mxu0 0
    %1107 = vmatpush1.bf16.xpose.msra.mxu0 0
    %1108 = vmatprep.subr.bf16.mxu0 0
    %1109 = vmatpush1.bf16.xpose.msra.mxu0 0
    %1110 = vmatprep.subr.bf16.mxu0 0
    %1111 = vmatpush1.bf16.xpose.msra.mxu0 %v1094
    %1112 = vmatprep.subr.bf16.mxu0 0
    %1113 = vmatpush2.bf16.xpose.msra.mxu0 0
    %1114 = vmatprep.subr.bf16.mxu0 0
    %1115 = vmatpush2.bf16.xpose.msra.mxu0 0
    %1116 = vmatprep.subr.bf16.mxu0 0
    %1117 = vmatpush2.bf16.xpose.msra.mxu0 0
    %1118 = vmatprep.subr.bf16.mxu0 0
    %1119 = vmatpush2.bf16.xpose.msra.mxu0 0
    %1120 = vmatprep.subr.bf16.mxu0 0
    %1121 = vmatpush2.bf16.xpose.msra.mxu0 0
    %1122 = vmatprep.subr.bf16.mxu0 0
    %1123 = vmatpush2.bf16.xpose.msra.mxu0 0
    %1124 = vmatprep.subr.bf16.mxu0 0
    %1125 = vmatpush2.bf16.xpose.msra.mxu0 0
    %1126 = vmatprep.subr.bf16.mxu0 0
    %1127 = vmatpush2.bf16.xpose.msra.mxu0 0
    %1128 = vmatprep.mubr.bf16.mxu0 0
    %1129 = vmatmul.mubr.bf16.gmra.mxu0 %v1091
    %v1130 = vpop.f32.mrf.mxu0
    %v1131 = vadd.f32 0.0, %v1130
    %v1132 = vpop.f32.mrf.mxu0
    %v1133 = vpop.f32.mrf.mxu0
    %v1134 = vpop.f32.mrf.mxu0
    %1135 = vdwg.mxu0
    %v1136 = vsel %vm583, %v1131, -inf
    %1137 = vmax.xlane.f32.xlu0 %v1136
    %v1138 = vpop.xlane.xlu0 %1137
    %v1139 = vsub.f32 %v1131, %v1138
    %v1140 = vmul.f32 %v1139, 1.442695
    %v1141 = vpow.pop %v1140
    %v1142 = vsel %vm583, %v1141, 0.0
    %1143 = vadd.xlane.f32.xlu0 %v1142
    %v1144 = vpop.xlane.xlu0 %1143
    %v1145 = vrcp.pop %v1144
    %v1146 = vmul.f32 %v1141, %v1145
    %v1147 = vpack.c.bf16 %v1146, %v1146
    %1148 = vrot.lane.b32.xlu0 %v535, 48
    %v1149 = vpop.permute.xlu0 %1148
    %v1151 = vsel %vm583, %v1147, 0
    %v1154 = vsel %vm599, %v1149, 0
    %1156 = vmatprep.subr.bf16.mxu0 0
    %1157 = vmatpush1.bf16.msra.mxu0 0
    %1158 = vmatprep.subr.bf16.mxu0 0
    %1159 = vmatpush1.bf16.msra.mxu0 0
    %1160 = vmatprep.subr.bf16.mxu0 0
    %1161 = vmatpush1.bf16.msra.mxu0 0
    %1162 = vmatprep.subr.bf16.mxu0 0
    %1163 = vmatpush1.bf16.msra.mxu0 0
    %1164 = vmatprep.subr.bf16.mxu0 0
    %1165 = vmatpush1.bf16.msra.mxu0 0
    %1166 = vmatprep.subr.bf16.mxu0 0
    %1167 = vmatpush1.bf16.msra.mxu0 0
    %1168 = vmatprep.subr.bf16.mxu0 0
    %1169 = vmatpush1.bf16.msra.mxu0 0
    %1170 = vmatprep.subr.bf16.mxu0 0
    %1171 = vmatpush1.bf16.msra.mxu0 %v1154
    %1172 = vmatprep.subr.bf16.mxu0 0
    %1173 = vmatpush2.bf16.msra.mxu0 0
    %1174 = vmatprep.subr.bf16.mxu0 0
    %1175 = vmatpush2.bf16.msra.mxu0 0
    %1176 = vmatprep.subr.bf16.mxu0 0
    %1177 = vmatpush2.bf16.msra.mxu0 0
    %1178 = vmatprep.subr.bf16.mxu0 0
    %1179 = vmatpush2.bf16.msra.mxu0 0
    %1180 = vmatprep.subr.bf16.mxu0 0
    %1181 = vmatpush2.bf16.msra.mxu0 0
    %1182 = vmatprep.subr.bf16.mxu0 0
    %1183 = vmatpush2.bf16.msra.mxu0 0
    %1184 = vmatprep.subr.bf16.mxu0 0
    %1185 = vmatpush2.bf16.msra.mxu0 0
    %1186 = vmatprep.subr.bf16.mxu0 0
    %1187 = vmatpush2.bf16.msra.mxu0 0
    %1188 = vmatprep.mubr.bf16.mxu0 0
    %1189 = vmatmul.mubr.bf16.gmra.mxu0 %v1151
    %v1190 = vpop.f32.mrf.mxu0
    %v1191 = vadd.f32 0.0, %v1190
    %v1192 = vpop.f32.mrf.mxu0
    %v1193 = vpop.f32.mrf.mxu0
    %v1194 = vpop.f32.mrf.mxu0
    %1195 = vdwg.mxu0
    %1196 = vrot.lane.b32.xlu0 %v533, 32
    %v1197 = vpop.permute.xlu0 %1196
    %1198 = vrot.lane.b32.xlu0 %v534, 32
    %v1199 = vpop.permute.xlu0 %1198
    %v1201 = vsel %vm536, %v1197, 0
    %v1204 = vsel %vm536, %v1199, 0
    %1206 = vmatprep.subr.bf16.mxu0 0
    %1207 = vmatpush1.bf16.xpose.msra.mxu0 0
    %1208 = vmatprep.subr.bf16.mxu0 0
    %1209 = vmatpush1.bf16.xpose.msra.mxu0 0
    %1210 = vmatprep.subr.bf16.mxu0 0
    %1211 = vmatpush1.bf16.xpose.msra.mxu0 0
    %1212 = vmatprep.subr.bf16.mxu0 0
    %1213 = vmatpush1.bf16.xpose.msra.mxu0 0
    %1214 = vmatprep.subr.bf16.mxu0 0
    %1215 = vmatpush1.bf16.xpose.msra.mxu0 0
    %1216 = vmatprep.subr.bf16.mxu0 0
    %1217 = vmatpush1.bf16.xpose.msra.mxu0 0
    %1218 = vmatprep.subr.bf16.mxu0 0
    %1219 = vmatpush1.bf16.xpose.msra.mxu0 0
    %1220 = vmatprep.subr.bf16.mxu0 0
    %1221 = vmatpush1.bf16.xpose.msra.mxu0 %v1204
    %1222 = vmatprep.subr.bf16.mxu0 0
    %1223 = vmatpush2.bf16.xpose.msra.mxu0 0
    %1224 = vmatprep.subr.bf16.mxu0 0
    %1225 = vmatpush2.bf16.xpose.msra.mxu0 0
    %1226 = vmatprep.subr.bf16.mxu0 0
    %1227 = vmatpush2.bf16.xpose.msra.mxu0 0
    %1228 = vmatprep.subr.bf16.mxu0 0
    %1229 = vmatpush2.bf16.xpose.msra.mxu0 0
    %1230 = vmatprep.subr.bf16.mxu0 0
    %1231 = vmatpush2.bf16.xpose.msra.mxu0 0
    %1232 = vmatprep.subr.bf16.mxu0 0
    %1233 = vmatpush2.bf16.xpose.msra.mxu0 0
    %1234 = vmatprep.subr.bf16.mxu0 0
    %1235 = vmatpush2.bf16.xpose.msra.mxu0 0
    %1236 = vmatprep.subr.bf16.mxu0 0
    %1237 = vmatpush2.bf16.xpose.msra.mxu0 0
    %1238 = vmatprep.mubr.bf16.mxu0 0
    %1239 = vmatmul.mubr.bf16.gmra.mxu0 %v1201
    %v1240 = vpop.f32.mrf.mxu0
    %v1241 = vadd.f32 0.0, %v1240
    %v1242 = vpop.f32.mrf.mxu0
    %v1243 = vpop.f32.mrf.mxu0
    %v1244 = vpop.f32.mrf.mxu0
    %1245 = vdwg.mxu0
    %v1246 = vsel %vm583, %v1241, -inf
    %1247 = vmax.xlane.f32.xlu0 %v1246
    %v1248 = vpop.xlane.xlu0 %1247
    %v1249 = vsub.f32 %v1241, %v1248
    %v1250 = vmul.f32 %v1249, 1.442695
    %v1251 = vpow.pop %v1250
    %v1252 = vsel %vm583, %v1251, 0.0
    %1253 = vadd.xlane.f32.xlu0 %v1252
    %v1254 = vpop.xlane.xlu0 %1253
    %v1255 = vrcp.pop %v1254
    %v1256 = vmul.f32 %v1251, %v1255
    %v1257 = vpack.c.bf16 %v1256, %v1256
    %1258 = vrot.lane.b32.xlu0 %v535, 32
    %v1259 = vpop.permute.xlu0 %1258
    %v1261 = vsel %vm583, %v1257, 0
    %v1264 = vsel %vm599, %v1259, 0
    %1266 = vmatprep.subr.bf16.mxu0 0
    %1267 = vmatpush1.bf16.msra.mxu0 0
    %1268 = vmatprep.subr.bf16.mxu0 0
    %1269 = vmatpush1.bf16.msra.mxu0 0
    %1270 = vmatprep.subr.bf16.mxu0 0
    %1271 = vmatpush1.bf16.msra.mxu0 0
    %1272 = vmatprep.subr.bf16.mxu0 0
    %1273 = vmatpush1.bf16.msra.mxu0 0
    %1274 = vmatprep.subr.bf16.mxu0 0
    %1275 = vmatpush1.bf16.msra.mxu0 0
    %1276 = vmatprep.subr.bf16.mxu0 0
    %1277 = vmatpush1.bf16.msra.mxu0 0
    %1278 = vmatprep.subr.bf16.mxu0 0
    %1279 = vmatpush1.bf16.msra.mxu0 0
    %1280 = vmatprep.subr.bf16.mxu0 0
    %1281 = vmatpush1.bf16.msra.mxu0 %v1264
    %1282 = vmatprep.subr.bf16.mxu0 0
    %1283 = vmatpush2.bf16.msra.mxu0 0
    %1284 = vmatprep.subr.bf16.mxu0 0
    %1285 = vmatpush2.bf16.msra.mxu0 0
    %1286 = vmatprep.subr.bf16.mxu0 0
    %1287 = vmatpush2.bf16.msra.mxu0 0
    %1288 = vmatprep.subr.bf16.mxu0 0
    %1289 = vmatpush2.bf16.msra.mxu0 0
    %1290 = vmatprep.subr.bf16.mxu0 0
    %1291 = vmatpush2.bf16.msra.mxu0 0
    %1292 = vmatprep.subr.bf16.mxu0 0
    %1293 = vmatpush2.bf16.msra.mxu0 0
    %1294 = vmatprep.subr.bf16.mxu0 0
    %1295 = vmatpush2.bf16.msra.mxu0 0
    %1296 = vmatprep.subr.bf16.mxu0 0
    %1297 = vmatpush2.bf16.msra.mxu0 0
    %1298 = vmatprep.mubr.bf16.mxu0 0
    %1299 = vmatmul.mubr.bf16.gmra.mxu0 %v1261
    %v1300 = vpop.f32.mrf.mxu0
    %v1301 = vadd.f32 0.0, %v1300
    %v1302 = vpop.f32.mrf.mxu0
    %v1303 = vpop.f32.mrf.mxu0
    %v1304 = vpop.f32.mrf.mxu0
    %1305 = vdwg.mxu0
    %1306 = vrot.lane.b32.xlu0 %v533, 16
    %v1307 = vpop.permute.xlu0 %1306
    %1308 = vrot.lane.b32.xlu0 %v534, 16
    %v1309 = vpop.permute.xlu0 %1308
    %v1311 = vsel %vm536, %v1307, 0
    %v1314 = vsel %vm536, %v1309, 0
    %1316 = vmatprep.subr.bf16.mxu0 0
    %1317 = vmatpush1.bf16.xpose.msra.mxu0 0
    %1318 = vmatprep.subr.bf16.mxu0 0
    %1319 = vmatpush1.bf16.xpose.msra.mxu0 0
    %1320 = vmatprep.subr.bf16.mxu0 0
    %1321 = vmatpush1.bf16.xpose.msra.mxu0 0
    %1322 = vmatprep.subr.bf16.mxu0 0
    %1323 = vmatpush1.bf16.xpose.msra.mxu0 0
    %1324 = vmatprep.subr.bf16.mxu0 0
    %1325 = vmatpush1.bf16.xpose.msra.mxu0 0
    %1326 = vmatprep.subr.bf16.mxu0 0
    %1327 = vmatpush1.bf16.xpose.msra.mxu0 0
    %1328 = vmatprep.subr.bf16.mxu0 0
    %1329 = vmatpush1.bf16.xpose.msra.mxu0 0
    %1330 = vmatprep.subr.bf16.mxu0 0
    %1331 = vmatpush1.bf16.xpose.msra.mxu0 %v1314
    %1332 = vmatprep.subr.bf16.mxu0 0
    %1333 = vmatpush2.bf16.xpose.msra.mxu0 0
    %1334 = vmatprep.subr.bf16.mxu0 0
    %1335 = vmatpush2.bf16.xpose.msra.mxu0 0
    %1336 = vmatprep.subr.bf16.mxu0 0
    %1337 = vmatpush2.bf16.xpose.msra.mxu0 0
    %1338 = vmatprep.subr.bf16.mxu0 0
    %1339 = vmatpush2.bf16.xpose.msra.mxu0 0
    %1340 = vmatprep.subr.bf16.mxu0 0
    %1341 = vmatpush2.bf16.xpose.msra.mxu0 0
    %1342 = vmatprep.subr.bf16.mxu0 0
    %1343 = vmatpush2.bf16.xpose.msra.mxu0 0
    %1344 = vmatprep.subr.bf16.mxu0 0
    %1345 = vmatpush2.bf16.xpose.msra.mxu0 0
    %1346 = vmatprep.subr.bf16.mxu0 0
    %1347 = vmatpush2.bf16.xpose.msra.mxu0 0
    %1348 = vmatprep.mubr.bf16.mxu0 0
    %1349 = vmatmul.mubr.bf16.gmra.mxu0 %v1311
    %v1350 = vpop.f32.mrf.mxu0
    %v1351 = vadd.f32 0.0, %v1350
    %v1352 = vpop.f32.mrf.mxu0
    %v1353 = vpop.f32.mrf.mxu0
    %v1354 = vpop.f32.mrf.mxu0
    %1355 = vdwg.mxu0
    %v1356 = vsel %vm583, %v1351, -inf
    %1357 = vmax.xlane.f32.xlu0 %v1356
    %v1358 = vpop.xlane.xlu0 %1357
    %v1359 = vsub.f32 %v1351, %v1358
    %v1360 = vmul.f32 %v1359, 1.442695
    %v1361 = vpow.pop %v1360
    %v1362 = vsel %vm583, %v1361, 0.0
    %1363 = vadd.xlane.f32.xlu0 %v1362
    %v1364 = vpop.xlane.xlu0 %1363
    %v1365 = vrcp.pop %v1364
    %v1366 = vmul.f32 %v1361, %v1365
    %v1367 = vpack.c.bf16 %v1366, %v1366
    %1368 = vrot.lane.b32.xlu0 %v535, 16
    %v1369 = vpop.permute.xlu0 %1368
    %v1371 = vsel %vm583, %v1367, 0
    %v1374 = vsel %vm599, %v1369, 0
    %1376 = vmatprep.subr.bf16.mxu0 0
    %1377 = vmatpush1.bf16.msra.mxu0 0
    %1378 = vmatprep.subr.bf16.mxu0 0
    %1379 = vmatpush1.bf16.msra.mxu0 0
    %1380 = vmatprep.subr.bf16.mxu0 0
    %1381 = vmatpush1.bf16.msra.mxu0 0
    %1382 = vmatprep.subr.bf16.mxu0 0
    %1383 = vmatpush1.bf16.msra.mxu0 0
    %1384 = vmatprep.subr.bf16.mxu0 0
    %1385 = vmatpush1.bf16.msra.mxu0 0
    %1386 = vmatprep.subr.bf16.mxu0 0
    %1387 = vmatpush1.bf16.msra.mxu0 0
    %1388 = vmatprep.subr.bf16.mxu0 0
    %1389 = vmatpush1.bf16.msra.mxu0 0
    %1390 = vmatprep.subr.bf16.mxu0 0
    %1391 = vmatpush1.bf16.msra.mxu0 %v1374
    %1392 = vmatprep.subr.bf16.mxu0 0
    %1393 = vmatpush2.bf16.msra.mxu0 0
    %1394 = vmatprep.subr.bf16.mxu0 0
    %1395 = vmatpush2.bf16.msra.mxu0 0
    %1396 = vmatprep.subr.bf16.mxu0 0
    %1397 = vmatpush2.bf16.msra.mxu0 0
    %1398 = vmatprep.subr.bf16.mxu0 0
    %1399 = vmatpush2.bf16.msra.mxu0 0
    %1400 = vmatprep.subr.bf16.mxu0 0
    %1401 = vmatpush2.bf16.msra.mxu0 0
    %1402 = vmatprep.subr.bf16.mxu0 0
    %1403 = vmatpush2.bf16.msra.mxu0 0
    %1404 = vmatprep.subr.bf16.mxu0 0
    %1405 = vmatpush2.bf16.msra.mxu0 0
    %1406 = vmatprep.subr.bf16.mxu0 0
    %1407 = vmatpush2.bf16.msra.mxu0 0
    %1408 = vmatprep.mubr.bf16.mxu0 0
    %1409 = vmatmul.mubr.bf16.gmra.mxu0 %v1371
    %v1410 = vpop.f32.mrf.mxu0
    %v1411 = vadd.f32 0.0, %v1410
    %v1412 = vpop.f32.mrf.mxu0
    %v1413 = vpop.f32.mrf.mxu0
    %v1414 = vpop.f32.mrf.mxu0
    %1415 = vdwg.mxu0
    %1417 = vrot.lane.b32.xlu0 %v751, 16
    %v1418 = vpop.permute.xlu0 %1417
    %1421 = vrot.lane.b32.xlu0 %v861, 32
    %v1422 = vpop.permute.xlu0 %1421
    %1425 = vrot.lane.b32.xlu0 %v971, 48
    %v1426 = vpop.permute.xlu0 %1425
    %1429 = vrot.lane.b32.xlu0 %v1081, 64
    %v1430 = vpop.permute.xlu0 %1429
    %1433 = vrot.lane.b32.xlu0 %v1191, 80
    %v1434 = vpop.permute.xlu0 %1433
    %1437 = vrot.lane.b32.xlu0 %v1301, 96
    %v1438 = vpop.permute.xlu0 %1437
    %1441 = vrot.lane.b32.xlu0 %v1411, 112
    %v1442 = vpop.permute.xlu0 %1441
    %v1444 = vsel %vm536, %v638, %v1418
    %vm1445 = vcmask 261120
    %v1446 = vsel %vm1445, %v1444, %v1422
    %vm1447 = vcmask 392192
    %v1448 = vsel %vm1447, %v1446, %v1426
    %vm1449 = vcmask 523264
    %v1450 = vsel %vm1449, %v1448, %v1430
    %vm1451 = vcmask 654336
    %v1452 = vsel %vm1451, %v1450, %v1434
    %vm1453 = vcmask 785408
    %v1454 = vsel %vm1453, %v1452, %v1438
    %vm1455 = vcmask 916480
    %v1456 = vsel %vm1455, %v1454, %v1442
    %v1457 = vrot.slane %v533, 4
    %v1458 = vrot.slane %v534, 4
    %v1460 = vsel %vm536, %v1457, 0
    %v1463 = vsel %vm536, %v1458, 0
    %1465 = vmatprep.subr.bf16.mxu0 0
    %1466 = vmatpush1.bf16.xpose.msra.mxu0 0
    %1467 = vmatprep.subr.bf16.mxu0 0
    %1468 = vmatpush1.bf16.xpose.msra.mxu0 0
    %1469 = vmatprep.subr.bf16.mxu0 0
    %1470 = vmatpush1.bf16.xpose.msra.mxu0 0
    %1471 = vmatprep.subr.bf16.mxu0 0
    %1472 = vmatpush1.bf16.xpose.msra.mxu0 0
    %1473 = vmatprep.subr.bf16.mxu0 0
    %1474 = vmatpush1.bf16.xpose.msra.mxu0 0
    %1475 = vmatprep.subr.bf16.mxu0 0
    %1476 = vmatpush1.bf16.xpose.msra.mxu0 0
    %1477 = vmatprep.subr.bf16.mxu0 0
    %1478 = vmatpush1.bf16.xpose.msra.mxu0 0
    %1479 = vmatprep.subr.bf16.mxu0 0
    %1480 = vmatpush1.bf16.xpose.msra.mxu0 %v1463
    %1481 = vmatprep.subr.bf16.mxu0 0
    %1482 = vmatpush2.bf16.xpose.msra.mxu0 0
    %1483 = vmatprep.subr.bf16.mxu0 0
    %1484 = vmatpush2.bf16.xpose.msra.mxu0 0
    %1485 = vmatprep.subr.bf16.mxu0 0
    %1486 = vmatpush2.bf16.xpose.msra.mxu0 0
    %1487 = vmatprep.subr.bf16.mxu0 0
    %1488 = vmatpush2.bf16.xpose.msra.mxu0 0
    %1489 = vmatprep.subr.bf16.mxu0 0
    %1490 = vmatpush2.bf16.xpose.msra.mxu0 0
    %1491 = vmatprep.subr.bf16.mxu0 0
    %1492 = vmatpush2.bf16.xpose.msra.mxu0 0
    %1493 = vmatprep.subr.bf16.mxu0 0
    %1494 = vmatpush2.bf16.xpose.msra.mxu0 0
    %1495 = vmatprep.subr.bf16.mxu0 0
    %1496 = vmatpush2.bf16.xpose.msra.mxu0 0
    %1497 = vmatprep.mubr.bf16.mxu0 0
    %1498 = vmatmul.mubr.bf16.gmra.mxu0 %v1460
    %v1499 = vpop.f32.mrf.mxu0
    %v1500 = vadd.f32 0.0, %v1499
    %v1501 = vpop.f32.mrf.mxu0
    %v1502 = vpop.f32.mrf.mxu0
    %v1503 = vpop.f32.mrf.mxu0
    %1504 = vdwg.mxu0
    %v1505 = vsel %vm583, %v1500, -inf
    %1506 = vmax.xlane.f32.xlu0 %v1505
    %v1507 = vpop.xlane.xlu0 %1506
    %v1508 = vsub.f32 %v1500, %v1507
    %v1509 = vmul.f32 %v1508, 1.442695
    %v1510 = vpow.pop %v1509
    %v1511 = vsel %vm583, %v1510, 0.0
    %1512 = vadd.xlane.f32.xlu0 %v1511
    %v1513 = vpop.xlane.xlu0 %1512
    %v1514 = vrcp.pop %v1513
    %v1515 = vmul.f32 %v1510, %v1514
    %v1516 = vpack.c.bf16 %v1515, %v1515
    %v1517 = vrot.slane %v535, 4
    %v1519 = vsel %vm583, %v1516, 0
    %v1522 = vsel %vm599, %v1517, 0
    %1524 = vmatprep.subr.bf16.mxu0 0
    %1525 = vmatpush1.bf16.msra.mxu0 0
    %1526 = vmatprep.subr.bf16.mxu0 0
    %1527 = vmatpush1.bf16.msra.mxu0 0
    %1528 = vmatprep.subr.bf16.mxu0 0
    %1529 = vmatpush1.bf16.msra.mxu0 0
    %1530 = vmatprep.subr.bf16.mxu0 0
    %1531 = vmatpush1.bf16.msra.mxu0 0
    %1532 = vmatprep.subr.bf16.mxu0 0
    %1533 = vmatpush1.bf16.msra.mxu0 0
    %1534 = vmatprep.subr.bf16.mxu0 0
    %1535 = vmatpush1.bf16.msra.mxu0 0
    %1536 = vmatprep.subr.bf16.mxu0 0
    %1537 = vmatpush1.bf16.msra.mxu0 0
    %1538 = vmatprep.subr.bf16.mxu0 0
    %1539 = vmatpush1.bf16.msra.mxu0 %v1522
    %1540 = vmatprep.subr.bf16.mxu0 0
    %1541 = vmatpush2.bf16.msra.mxu0 0
    %1542 = vmatprep.subr.bf16.mxu0 0
    %1543 = vmatpush2.bf16.msra.mxu0 0
    %1544 = vmatprep.subr.bf16.mxu0 0
    %1545 = vmatpush2.bf16.msra.mxu0 0
    %1546 = vmatprep.subr.bf16.mxu0 0
    %1547 = vmatpush2.bf16.msra.mxu0 0
    %1548 = vmatprep.subr.bf16.mxu0 0
    %1549 = vmatpush2.bf16.msra.mxu0 0
    %1550 = vmatprep.subr.bf16.mxu0 0
    %1551 = vmatpush2.bf16.msra.mxu0 0
    %1552 = vmatprep.subr.bf16.mxu0 0
    %1553 = vmatpush2.bf16.msra.mxu0 0
    %1554 = vmatprep.subr.bf16.mxu0 0
    %1555 = vmatpush2.bf16.msra.mxu0 0
    %1556 = vmatprep.mubr.bf16.mxu0 0
    %1557 = vmatmul.mubr.bf16.gmra.mxu0 %v1519
    %v1558 = vpop.f32.mrf.mxu0
    %v1559 = vadd.f32 0.0, %v1558
    %v1560 = vpop.f32.mrf.mxu0
    %v1561 = vpop.f32.mrf.mxu0
    %v1562 = vpop.f32.mrf.mxu0
    %1563 = vdwg.mxu0
    %1564 = vrot.lane.b32.xlu0 %v1457, 112
    %v1565 = vpop.permute.xlu0 %1564
    %1566 = vrot.lane.b32.xlu0 %v1458, 112
    %v1567 = vpop.permute.xlu0 %1566
    %v1569 = vsel %vm536, %v1565, 0
    %v1572 = vsel %vm536, %v1567, 0
    %1574 = vmatprep.subr.bf16.mxu0 0
    %1575 = vmatpush1.bf16.xpose.msra.mxu0 0
    %1576 = vmatprep.subr.bf16.mxu0 0
    %1577 = vmatpush1.bf16.xpose.msra.mxu0 0
    %1578 = vmatprep.subr.bf16.mxu0 0
    %1579 = vmatpush1.bf16.xpose.msra.mxu0 0
    %1580 = vmatprep.subr.bf16.mxu0 0
    %1581 = vmatpush1.bf16.xpose.msra.mxu0 0
    %1582 = vmatprep.subr.bf16.mxu0 0
    %1583 = vmatpush1.bf16.xpose.msra.mxu0 0
    %1584 = vmatprep.subr.bf16.mxu0 0
    %1585 = vmatpush1.bf16.xpose.msra.mxu0 0
    %1586 = vmatprep.subr.bf16.mxu0 0
    %1587 = vmatpush1.bf16.xpose.msra.mxu0 0
    %1588 = vmatprep.subr.bf16.mxu0 0
    %1589 = vmatpush1.bf16.xpose.msra.mxu0 %v1572
    %1590 = vmatprep.subr.bf16.mxu0 0
    %1591 = vmatpush2.bf16.xpose.msra.mxu0 0
    %1592 = vmatprep.subr.bf16.mxu0 0
    %1593 = vmatpush2.bf16.xpose.msra.mxu0 0
    %1594 = vmatprep.subr.bf16.mxu0 0
    %1595 = vmatpush2.bf16.xpose.msra.mxu0 0
    %1596 = vmatprep.subr.bf16.mxu0 0
    %1597 = vmatpush2.bf16.xpose.msra.mxu0 0
    %1598 = vmatprep.subr.bf16.mxu0 0
    %1599 = vmatpush2.bf16.xpose.msra.mxu0 0
    %1600 = vmatprep.subr.bf16.mxu0 0
    %1601 = vmatpush2.bf16.xpose.msra.mxu0 0
    %1602 = vmatprep.subr.bf16.mxu0 0
    %1603 = vmatpush2.bf16.xpose.msra.mxu0 0
    %1604 = vmatprep.subr.bf16.mxu0 0
    %1605 = vmatpush2.bf16.xpose.msra.mxu0 0
    %1606 = vmatprep.mubr.bf16.mxu0 0
    %1607 = vmatmul.mubr.bf16.gmra.mxu0 %v1569
    %v1608 = vpop.f32.mrf.mxu0
    %v1609 = vadd.f32 0.0, %v1608
    %v1610 = vpop.f32.mrf.mxu0
    %v1611 = vpop.f32.mrf.mxu0
    %v1612 = vpop.f32.mrf.mxu0
    %1613 = vdwg.mxu0
    %v1614 = vsel %vm583, %v1609, -inf
    %1615 = vmax.xlane.f32.xlu0 %v1614
    %v1616 = vpop.xlane.xlu0 %1615
    %v1617 = vsub.f32 %v1609, %v1616
    %v1618 = vmul.f32 %v1617, 1.442695
    %v1619 = vpow.pop %v1618
    %v1620 = vsel %vm583, %v1619, 0.0
    %1621 = vadd.xlane.f32.xlu0 %v1620
    %v1622 = vpop.xlane.xlu0 %1621
    %v1623 = vrcp.pop %v1622
    %v1624 = vmul.f32 %v1619, %v1623
    %v1625 = vpack.c.bf16 %v1624, %v1624
    %1626 = vrot.lane.b32.xlu0 %v1517, 112
    %v1627 = vpop.permute.xlu0 %1626
    %v1629 = vsel %vm583, %v1625, 0
    %v1632 = vsel %vm599, %v1627, 0
    %1634 = vmatprep.subr.bf16.mxu0 0
    %1635 = vmatpush1.bf16.msra.mxu0 0
    %1636 = vmatprep.subr.bf16.mxu0 0
    %1637 = vmatpush1.bf16.msra.mxu0 0
    %1638 = vmatprep.subr.bf16.mxu0 0
    %1639 = vmatpush1.bf16.msra.mxu0 0
    %1640 = vmatprep.subr.bf16.mxu0 0
    %1641 = vmatpush1.bf16.msra.mxu0 0
    %1642 = vmatprep.subr.bf16.mxu0 0
    %1643 = vmatpush1.bf16.msra.mxu0 0
    %1644 = vmatprep.subr.bf16.mxu0 0
    %1645 = vmatpush1.bf16.msra.mxu0 0
    %1646 = vmatprep.subr.bf16.mxu0 0
    %1647 = vmatpush1.bf16.msra.mxu0 0
    %1648 = vmatprep.subr.bf16.mxu0 0
    %1649 = vmatpush1.bf16.msra.mxu0 %v1632
    %1650 = vmatprep.subr.bf16.mxu0 0
    %1651 = vmatpush2.bf16.msra.mxu0 0
    %1652 = vmatprep.subr.bf16.mxu0 0
    %1653 = vmatpush2.bf16.msra.mxu0 0
    %1654 = vmatprep.subr.bf16.mxu0 0
    %1655 = vmatpush2.bf16.msra.mxu0 0
    %1656 = vmatprep.subr.bf16.mxu0 0
    %1657 = vmatpush2.bf16.msra.mxu0 0
    %1658 = vmatprep.subr.bf16.mxu0 0
    %1659 = vmatpush2.bf16.msra.mxu0 0
    %1660 = vmatprep.subr.bf16.mxu0 0
    %1661 = vmatpush2.bf16.msra.mxu0 0
    %1662 = vmatprep.subr.bf16.mxu0 0
    %1663 = vmatpush2.bf16.msra.mxu0 0
    %1664 = vmatprep.subr.bf16.mxu0 0
    %1665 = vmatpush2.bf16.msra.mxu0 0
    %1666 = vmatprep.mubr.bf16.mxu0 0
    %1667 = vmatmul.mubr.bf16.gmra.mxu0 %v1629
    %v1668 = vpop.f32.mrf.mxu0
    %v1669 = vadd.f32 0.0, %v1668
    %v1670 = vpop.f32.mrf.mxu0
    %v1671 = vpop.f32.mrf.mxu0
    %v1672 = vpop.f32.mrf.mxu0
    %1673 = vdwg.mxu0
    %1674 = vrot.lane.b32.xlu0 %v1457, 96
    %v1675 = vpop.permute.xlu0 %1674
    %1676 = vrot.lane.b32.xlu0 %v1458, 96
    %v1677 = vpop.permute.xlu0 %1676
    %v1679 = vsel %vm536, %v1675, 0
    %v1682 = vsel %vm536, %v1677, 0
    %1684 = vmatprep.subr.bf16.mxu0 0
    %1685 = vmatpush1.bf16.xpose.msra.mxu0 0
    %1686 = vmatprep.subr.bf16.mxu0 0
    %1687 = vmatpush1.bf16.xpose.msra.mxu0 0
    %1688 = vmatprep.subr.bf16.mxu0 0
    %1689 = vmatpush1.bf16.xpose.msra.mxu0 0
    %1690 = vmatprep.subr.bf16.mxu0 0
    %1691 = vmatpush1.bf16.xpose.msra.mxu0 0
    %1692 = vmatprep.subr.bf16.mxu0 0
    %1693 = vmatpush1.bf16.xpose.msra.mxu0 0
    %1694 = vmatprep.subr.bf16.mxu0 0
    %1695 = vmatpush1.bf16.xpose.msra.mxu0 0
    %1696 = vmatprep.subr.bf16.mxu0 0
    %1697 = vmatpush1.bf16.xpose.msra.mxu0 0
    %1698 = vmatprep.subr.bf16.mxu0 0
    %1699 = vmatpush1.bf16.xpose.msra.mxu0 %v1682
    %1700 = vmatprep.subr.bf16.mxu0 0
    %1701 = vmatpush2.bf16.xpose.msra.mxu0 0
    %1702 = vmatprep.subr.bf16.mxu0 0
    %1703 = vmatpush2.bf16.xpose.msra.mxu0 0
    %1704 = vmatprep.subr.bf16.mxu0 0
    %1705 = vmatpush2.bf16.xpose.msra.mxu0 0
    %1706 = vmatprep.subr.bf16.mxu0 0
    %1707 = vmatpush2.bf16.xpose.msra.mxu0 0
    %1708 = vmatprep.subr.bf16.mxu0 0
    %1709 = vmatpush2.bf16.xpose.msra.mxu0 0
    %1710 = vmatprep.subr.bf16.mxu0 0
    %1711 = vmatpush2.bf16.xpose.msra.mxu0 0
    %1712 = vmatprep.subr.bf16.mxu0 0
    %1713 = vmatpush2.bf16.xpose.msra.mxu0 0
    %1714 = vmatprep.subr.bf16.mxu0 0
    %1715 = vmatpush2.bf16.xpose.msra.mxu0 0
    %1716 = vmatprep.mubr.bf16.mxu0 0
    %1717 = vmatmul.mubr.bf16.gmra.mxu0 %v1679
    %v1718 = vpop.f32.mrf.mxu0
    %v1719 = vadd.f32 0.0, %v1718
    %v1720 = vpop.f32.mrf.mxu0
    %v1721 = vpop.f32.mrf.mxu0
    %v1722 = vpop.f32.mrf.mxu0
    %1723 = vdwg.mxu0
    %v1724 = vsel %vm583, %v1719, -inf
    %1725 = vmax.xlane.f32.xlu0 %v1724
    %v1726 = vpop.xlane.xlu0 %1725
    %v1727 = vsub.f32 %v1719, %v1726
    %v1728 = vmul.f32 %v1727, 1.442695
    %v1729 = vpow.pop %v1728
    %v1730 = vsel %vm583, %v1729, 0.0
    %1731 = vadd.xlane.f32.xlu0 %v1730
    %v1732 = vpop.xlane.xlu0 %1731
    %v1733 = vrcp.pop %v1732
    %v1734 = vmul.f32 %v1729, %v1733
    %v1735 = vpack.c.bf16 %v1734, %v1734
    %1736 = vrot.lane.b32.xlu0 %v1517, 96
    %v1737 = vpop.permute.xlu0 %1736
    %v1739 = vsel %vm583, %v1735, 0
    %v1742 = vsel %vm599, %v1737, 0
    %1744 = vmatprep.subr.bf16.mxu0 0
    %1745 = vmatpush1.bf16.msra.mxu0 0
    %1746 = vmatprep.subr.bf16.mxu0 0
    %1747 = vmatpush1.bf16.msra.mxu0 0
    %1748 = vmatprep.subr.bf16.mxu0 0
    %1749 = vmatpush1.bf16.msra.mxu0 0
    %1750 = vmatprep.subr.bf16.mxu0 0
    %1751 = vmatpush1.bf16.msra.mxu0 0
    %1752 = vmatprep.subr.bf16.mxu0 0
    %1753 = vmatpush1.bf16.msra.mxu0 0
    %1754 = vmatprep.subr.bf16.mxu0 0
    %1755 = vmatpush1.bf16.msra.mxu0 0
    %1756 = vmatprep.subr.bf16.mxu0 0
    %1757 = vmatpush1.bf16.msra.mxu0 0
    %1758 = vmatprep.subr.bf16.mxu0 0
    %1759 = vmatpush1.bf16.msra.mxu0 %v1742
    %1760 = vmatprep.subr.bf16.mxu0 0
    %1761 = vmatpush2.bf16.msra.mxu0 0
    %1762 = vmatprep.subr.bf16.mxu0 0
    %1763 = vmatpush2.bf16.msra.mxu0 0
    %1764 = vmatprep.subr.bf16.mxu0 0
    %1765 = vmatpush2.bf16.msra.mxu0 0
    %1766 = vmatprep.subr.bf16.mxu0 0
    %1767 = vmatpush2.bf16.msra.mxu0 0
    %1768 = vmatprep.subr.bf16.mxu0 0
    %1769 = vmatpush2.bf16.msra.mxu0 0
    %1770 = vmatprep.subr.bf16.mxu0 0
    %1771 = vmatpush2.bf16.msra.mxu0 0
    %1772 = vmatprep.subr.bf16.mxu0 0
    %1773 = vmatpush2.bf16.msra.mxu0 0
    %1774 = vmatprep.subr.bf16.mxu0 0
    %1775 = vmatpush2.bf16.msra.mxu0 0
    %1776 = vmatprep.mubr.bf16.mxu0 0
    %1777 = vmatmul.mubr.bf16.gmra.mxu0 %v1739
    %v1778 = vpop.f32.mrf.mxu0
    %v1779 = vadd.f32 0.0, %v1778
    %v1780 = vpop.f32.mrf.mxu0
    %v1781 = vpop.f32.mrf.mxu0
    %v1782 = vpop.f32.mrf.mxu0
    %1783 = vdwg.mxu0
    %1784 = vrot.lane.b32.xlu0 %v1457, 80
    %v1785 = vpop.permute.xlu0 %1784
    %1786 = vrot.lane.b32.xlu0 %v1458, 80
    %v1787 = vpop.permute.xlu0 %1786
    %v1789 = vsel %vm536, %v1785, 0
    %v1792 = vsel %vm536, %v1787, 0
    %1794 = vmatprep.subr.bf16.mxu0 0
    %1795 = vmatpush1.bf16.xpose.msra.mxu0 0
    %1796 = vmatprep.subr.bf16.mxu0 0
    %1797 = vmatpush1.bf16.xpose.msra.mxu0 0
    %1798 = vmatprep.subr.bf16.mxu0 0
    %1799 = vmatpush1.bf16.xpose.msra.mxu0 0
    %1800 = vmatprep.subr.bf16.mxu0 0
    %1801 = vmatpush1.bf16.xpose.msra.mxu0 0
    %1802 = vmatprep.subr.bf16.mxu0 0
    %1803 = vmatpush1.bf16.xpose.msra.mxu0 0
    %1804 = vmatprep.subr.bf16.mxu0 0
    %1805 = vmatpush1.bf16.xpose.msra.mxu0 0
    %1806 = vmatprep.subr.bf16.mxu0 0
    %1807 = vmatpush1.bf16.xpose.msra.mxu0 0
    %1808 = vmatprep.subr.bf16.mxu0 0
    %1809 = vmatpush1.bf16.xpose.msra.mxu0 %v1792
    %1810 = vmatprep.subr.bf16.mxu0 0
    %1811 = vmatpush2.bf16.xpose.msra.mxu0 0
    %1812 = vmatprep.subr.bf16.mxu0 0
    %1813 = vmatpush2.bf16.xpose.msra.mxu0 0
    %1814 = vmatprep.subr.bf16.mxu0 0
    %1815 = vmatpush2.bf16.xpose.msra.mxu0 0
    %1816 = vmatprep.subr.bf16.mxu0 0
    %1817 = vmatpush2.bf16.xpose.msra.mxu0 0
    %1818 = vmatprep.subr.bf16.mxu0 0
    %1819 = vmatpush2.bf16.xpose.msra.mxu0 0
    %1820 = vmatprep.subr.bf16.mxu0 0
    %1821 = vmatpush2.bf16.xpose.msra.mxu0 0
    %1822 = vmatprep.subr.bf16.mxu0 0
    %1823 = vmatpush2.bf16.xpose.msra.mxu0 0
    %1824 = vmatprep.subr.bf16.mxu0 0
    %1825 = vmatpush2.bf16.xpose.msra.mxu0 0
    %1826 = vmatprep.mubr.bf16.mxu0 0
    %1827 = vmatmul.mubr.bf16.gmra.mxu0 %v1789
    %v1828 = vpop.f32.mrf.mxu0
    %v1829 = vadd.f32 0.0, %v1828
    %v1830 = vpop.f32.mrf.mxu0
    %v1831 = vpop.f32.mrf.mxu0
    %v1832 = vpop.f32.mrf.mxu0
    %1833 = vdwg.mxu0
    %v1834 = vsel %vm583, %v1829, -inf
    %1835 = vmax.xlane.f32.xlu0 %v1834
    %v1836 = vpop.xlane.xlu0 %1835
    %v1837 = vsub.f32 %v1829, %v1836
    %v1838 = vmul.f32 %v1837, 1.442695
    %v1839 = vpow.pop %v1838
    %v1840 = vsel %vm583, %v1839, 0.0
    %1841 = vadd.xlane.f32.xlu0 %v1840
    %v1842 = vpop.xlane.xlu0 %1841
    %v1843 = vrcp.pop %v1842
    %v1844 = vmul.f32 %v1839, %v1843
    %v1845 = vpack.c.bf16 %v1844, %v1844
    %1846 = vrot.lane.b32.xlu0 %v1517, 80
    %v1847 = vpop.permute.xlu0 %1846
    %v1849 = vsel %vm583, %v1845, 0
    %v1852 = vsel %vm599, %v1847, 0
    %1854 = vmatprep.subr.bf16.mxu0 0
    %1855 = vmatpush1.bf16.msra.mxu0 0
    %1856 = vmatprep.subr.bf16.mxu0 0
    %1857 = vmatpush1.bf16.msra.mxu0 0
    %1858 = vmatprep.subr.bf16.mxu0 0
    %1859 = vmatpush1.bf16.msra.mxu0 0
    %1860 = vmatprep.subr.bf16.mxu0 0
    %1861 = vmatpush1.bf16.msra.mxu0 0
    %1862 = vmatprep.subr.bf16.mxu0 0
    %1863 = vmatpush1.bf16.msra.mxu0 0
    %1864 = vmatprep.subr.bf16.mxu0 0
    %1865 = vmatpush1.bf16.msra.mxu0 0
    %1866 = vmatprep.subr.bf16.mxu0 0
    %1867 = vmatpush1.bf16.msra.mxu0 0
    %1868 = vmatprep.subr.bf16.mxu0 0
    %1869 = vmatpush1.bf16.msra.mxu0 %v1852
    %1870 = vmatprep.subr.bf16.mxu0 0
    %1871 = vmatpush2.bf16.msra.mxu0 0
    %1872 = vmatprep.subr.bf16.mxu0 0
    %1873 = vmatpush2.bf16.msra.mxu0 0
    %1874 = vmatprep.subr.bf16.mxu0 0
    %1875 = vmatpush2.bf16.msra.mxu0 0
    %1876 = vmatprep.subr.bf16.mxu0 0
    %1877 = vmatpush2.bf16.msra.mxu0 0
    %1878 = vmatprep.subr.bf16.mxu0 0
    %1879 = vmatpush2.bf16.msra.mxu0 0
    %1880 = vmatprep.subr.bf16.mxu0 0
    %1881 = vmatpush2.bf16.msra.mxu0 0
    %1882 = vmatprep.subr.bf16.mxu0 0
    %1883 = vmatpush2.bf16.msra.mxu0 0
    %1884 = vmatprep.subr.bf16.mxu0 0
    %1885 = vmatpush2.bf16.msra.mxu0 0
    %1886 = vmatprep.mubr.bf16.mxu0 0
    %1887 = vmatmul.mubr.bf16.gmra.mxu0 %v1849
    %v1888 = vpop.f32.mrf.mxu0
    %v1889 = vadd.f32 0.0, %v1888
    %v1890 = vpop.f32.mrf.mxu0
    %v1891 = vpop.f32.mrf.mxu0
    %v1892 = vpop.f32.mrf.mxu0
    %1893 = vdwg.mxu0
    %1894 = vrot.lane.b32.xlu0 %v1457, 64
    %v1895 = vpop.permute.xlu0 %1894
    %1896 = vrot.lane.b32.xlu0 %v1458, 64
    %v1897 = vpop.permute.xlu0 %1896
    %v1899 = vsel %vm536, %v1895, 0
    %v1902 = vsel %vm536, %v1897, 0
    %1904 = vmatprep.subr.bf16.mxu0 0
    %1905 = vmatpush1.bf16.xpose.msra.mxu0 0
    %1906 = vmatprep.subr.bf16.mxu0 0
    %1907 = vmatpush1.bf16.xpose.msra.mxu0 0
    %1908 = vmatprep.subr.bf16.mxu0 0
    %1909 = vmatpush1.bf16.xpose.msra.mxu0 0
    %1910 = vmatprep.subr.bf16.mxu0 0
    %1911 = vmatpush1.bf16.xpose.msra.mxu0 0
    %1912 = vmatprep.subr.bf16.mxu0 0
    %1913 = vmatpush1.bf16.xpose.msra.mxu0 0
    %1914 = vmatprep.subr.bf16.mxu0 0
    %1915 = vmatpush1.bf16.xpose.msra.mxu0 0
    %1916 = vmatprep.subr.bf16.mxu0 0
    %1917 = vmatpush1.bf16.xpose.msra.mxu0 0
    %1918 = vmatprep.subr.bf16.mxu0 0
    %1919 = vmatpush1.bf16.xpose.msra.mxu0 %v1902
    %1920 = vmatprep.subr.bf16.mxu0 0
    %1921 = vmatpush2.bf16.xpose.msra.mxu0 0
    %1922 = vmatprep.subr.bf16.mxu0 0
    %1923 = vmatpush2.bf16.xpose.msra.mxu0 0
    %1924 = vmatprep.subr.bf16.mxu0 0
    %1925 = vmatpush2.bf16.xpose.msra.mxu0 0
    %1926 = vmatprep.subr.bf16.mxu0 0
    %1927 = vmatpush2.bf16.xpose.msra.mxu0 0
    %1928 = vmatprep.subr.bf16.mxu0 0
    %1929 = vmatpush2.bf16.xpose.msra.mxu0 0
    %1930 = vmatprep.subr.bf16.mxu0 0
    %1931 = vmatpush2.bf16.xpose.msra.mxu0 0
    %1932 = vmatprep.subr.bf16.mxu0 0
    %1933 = vmatpush2.bf16.xpose.msra.mxu0 0
    %1934 = vmatprep.subr.bf16.mxu0 0
    %1935 = vmatpush2.bf16.xpose.msra.mxu0 0
    %1936 = vmatprep.mubr.bf16.mxu0 0
    %1937 = vmatmul.mubr.bf16.gmra.mxu0 %v1899
    %v1938 = vpop.f32.mrf.mxu0
    %v1939 = vadd.f32 0.0, %v1938
    %v1940 = vpop.f32.mrf.mxu0
    %v1941 = vpop.f32.mrf.mxu0
    %v1942 = vpop.f32.mrf.mxu0
    %1943 = vdwg.mxu0
    %v1944 = vsel %vm583, %v1939, -inf
    %1945 = vmax.xlane.f32.xlu0 %v1944
    %v1946 = vpop.xlane.xlu0 %1945
    %v1947 = vsub.f32 %v1939, %v1946
    %v1948 = vmul.f32 %v1947, 1.442695
    %v1949 = vpow.pop %v1948
    %v1950 = vsel %vm583, %v1949, 0.0
    %1951 = vadd.xlane.f32.xlu0 %v1950
    %v1952 = vpop.xlane.xlu0 %1951
    %v1953 = vrcp.pop %v1952
    %v1954 = vmul.f32 %v1949, %v1953
    %v1955 = vpack.c.bf16 %v1954, %v1954
    %1956 = vrot.lane.b32.xlu0 %v1517, 64
    %v1957 = vpop.permute.xlu0 %1956
    %v1959 = vsel %vm583, %v1955, 0
    %v1962 = vsel %vm599, %v1957, 0
    %1964 = vmatprep.subr.bf16.mxu0 0
    %1965 = vmatpush1.bf16.msra.mxu0 0
    %1966 = vmatprep.subr.bf16.mxu0 0
    %1967 = vmatpush1.bf16.msra.mxu0 0
    %1968 = vmatprep.subr.bf16.mxu0 0
    %1969 = vmatpush1.bf16.msra.mxu0 0
    %1970 = vmatprep.subr.bf16.mxu0 0
    %1971 = vmatpush1.bf16.msra.mxu0 0
    %1972 = vmatprep.subr.bf16.mxu0 0
    %1973 = vmatpush1.bf16.msra.mxu0 0
    %1974 = vmatprep.subr.bf16.mxu0 0
    %1975 = vmatpush1.bf16.msra.mxu0 0
    %1976 = vmatprep.subr.bf16.mxu0 0
    %1977 = vmatpush1.bf16.msra.mxu0 0
    %1978 = vmatprep.subr.bf16.mxu0 0
    %1979 = vmatpush1.bf16.msra.mxu0 %v1962
    %1980 = vmatprep.subr.bf16.mxu0 0
    %1981 = vmatpush2.bf16.msra.mxu0 0
    %1982 = vmatprep.subr.bf16.mxu0 0
    %1983 = vmatpush2.bf16.msra.mxu0 0
    %1984 = vmatprep.subr.bf16.mxu0 0
    %1985 = vmatpush2.bf16.msra.mxu0 0
    %1986 = vmatprep.subr.bf16.mxu0 0
    %1987 = vmatpush2.bf16.msra.mxu0 0
    %1988 = vmatprep.subr.bf16.mxu0 0
    %1989 = vmatpush2.bf16.msra.mxu0 0
    %1990 = vmatprep.subr.bf16.mxu0 0
    %1991 = vmatpush2.bf16.msra.mxu0 0
    %1992 = vmatprep.subr.bf16.mxu0 0
    %1993 = vmatpush2.bf16.msra.mxu0 0
    %1994 = vmatprep.subr.bf16.mxu0 0
    %1995 = vmatpush2.bf16.msra.mxu0 0
    %1996 = vmatprep.mubr.bf16.mxu0 0
    %1997 = vmatmul.mubr.bf16.gmra.mxu0 %v1959
    %v1998 = vpop.f32.mrf.mxu0
    %v1999 = vadd.f32 0.0, %v1998
    %v2000 = vpop.f32.mrf.mxu0
    %v2001 = vpop.f32.mrf.mxu0
    %v2002 = vpop.f32.mrf.mxu0
    %2003 = vdwg.mxu0
    %2004 = vrot.lane.b32.xlu0 %v1457, 48
    %v2005 = vpop.permute.xlu0 %2004
    %2006 = vrot.lane.b32.xlu0 %v1458, 48
    %v2007 = vpop.permute.xlu0 %2006
    %v2009 = vsel %vm536, %v2005, 0
    %v2012 = vsel %vm536, %v2007, 0
    %2014 = vmatprep.subr.bf16.mxu0 0
    %2015 = vmatpush1.bf16.xpose.msra.mxu0 0
    %2016 = vmatprep.subr.bf16.mxu0 0
    %2017 = vmatpush1.bf16.xpose.msra.mxu0 0
    %2018 = vmatprep.subr.bf16.mxu0 0
    %2019 = vmatpush1.bf16.xpose.msra.mxu0 0
    %2020 = vmatprep.subr.bf16.mxu0 0
    %2021 = vmatpush1.bf16.xpose.msra.mxu0 0
    %2022 = vmatprep.subr.bf16.mxu0 0
    %2023 = vmatpush1.bf16.xpose.msra.mxu0 0
    %2024 = vmatprep.subr.bf16.mxu0 0
    %2025 = vmatpush1.bf16.xpose.msra.mxu0 0
    %2026 = vmatprep.subr.bf16.mxu0 0
    %2027 = vmatpush1.bf16.xpose.msra.mxu0 0
    %2028 = vmatprep.subr.bf16.mxu0 0
    %2029 = vmatpush1.bf16.xpose.msra.mxu0 %v2012
    %2030 = vmatprep.subr.bf16.mxu0 0
    %2031 = vmatpush2.bf16.xpose.msra.mxu0 0
    %2032 = vmatprep.subr.bf16.mxu0 0
    %2033 = vmatpush2.bf16.xpose.msra.mxu0 0
    %2034 = vmatprep.subr.bf16.mxu0 0
    %2035 = vmatpush2.bf16.xpose.msra.mxu0 0
    %2036 = vmatprep.subr.bf16.mxu0 0
    %2037 = vmatpush2.bf16.xpose.msra.mxu0 0
    %2038 = vmatprep.subr.bf16.mxu0 0
    %2039 = vmatpush2.bf16.xpose.msra.mxu0 0
    %2040 = vmatprep.subr.bf16.mxu0 0
    %2041 = vmatpush2.bf16.xpose.msra.mxu0 0
    %2042 = vmatprep.subr.bf16.mxu0 0
    %2043 = vmatpush2.bf16.xpose.msra.mxu0 0
    %2044 = vmatprep.subr.bf16.mxu0 0
    %2045 = vmatpush2.bf16.xpose.msra.mxu0 0
    %2046 = vmatprep.mubr.bf16.mxu0 0
    %2047 = vmatmul.mubr.bf16.gmra.mxu0 %v2009
    %v2048 = vpop.f32.mrf.mxu0
    %v2049 = vadd.f32 0.0, %v2048
    %v2050 = vpop.f32.mrf.mxu0
    %v2051 = vpop.f32.mrf.mxu0
    %v2052 = vpop.f32.mrf.mxu0
    %2053 = vdwg.mxu0
    %v2054 = vsel %vm583, %v2049, -inf
    %2055 = vmax.xlane.f32.xlu0 %v2054
    %v2056 = vpop.xlane.xlu0 %2055
    %v2057 = vsub.f32 %v2049, %v2056
    %v2058 = vmul.f32 %v2057, 1.442695
    %v2059 = vpow.pop %v2058
    %v2060 = vsel %vm583, %v2059, 0.0
    %2061 = vadd.xlane.f32.xlu0 %v2060
    %v2062 = vpop.xlane.xlu0 %2061
    %v2063 = vrcp.pop %v2062
    %v2064 = vmul.f32 %v2059, %v2063
    %v2065 = vpack.c.bf16 %v2064, %v2064
    %2066 = vrot.lane.b32.xlu0 %v1517, 48
    %v2067 = vpop.permute.xlu0 %2066
    %v2069 = vsel %vm583, %v2065, 0
    %v2072 = vsel %vm599, %v2067, 0
    %2074 = vmatprep.subr.bf16.mxu0 0
    %2075 = vmatpush1.bf16.msra.mxu0 0
    %2076 = vmatprep.subr.bf16.mxu0 0
    %2077 = vmatpush1.bf16.msra.mxu0 0
    %2078 = vmatprep.subr.bf16.mxu0 0
    %2079 = vmatpush1.bf16.msra.mxu0 0
    %2080 = vmatprep.subr.bf16.mxu0 0
    %2081 = vmatpush1.bf16.msra.mxu0 0
    %2082 = vmatprep.subr.bf16.mxu0 0
    %2083 = vmatpush1.bf16.msra.mxu0 0
    %2084 = vmatprep.subr.bf16.mxu0 0
    %2085 = vmatpush1.bf16.msra.mxu0 0
    %2086 = vmatprep.subr.bf16.mxu0 0
    %2087 = vmatpush1.bf16.msra.mxu0 0
    %2088 = vmatprep.subr.bf16.mxu0 0
    %2089 = vmatpush1.bf16.msra.mxu0 %v2072
    %2090 = vmatprep.subr.bf16.mxu0 0
    %2091 = vmatpush2.bf16.msra.mxu0 0
    %2092 = vmatprep.subr.bf16.mxu0 0
    %2093 = vmatpush2.bf16.msra.mxu0 0
    %2094 = vmatprep.subr.bf16.mxu0 0
    %2095 = vmatpush2.bf16.msra.mxu0 0
    %2096 = vmatprep.subr.bf16.mxu0 0
    %2097 = vmatpush2.bf16.msra.mxu0 0
    %2098 = vmatprep.subr.bf16.mxu0 0
    %2099 = vmatpush2.bf16.msra.mxu0 0
    %2100 = vmatprep.subr.bf16.mxu0 0
    %2101 = vmatpush2.bf16.msra.mxu0 0
    %2102 = vmatprep.subr.bf16.mxu0 0
    %2103 = vmatpush2.bf16.msra.mxu0 0
    %2104 = vmatprep.subr.bf16.mxu0 0
    %2105 = vmatpush2.bf16.msra.mxu0 0
    %2106 = vmatprep.mubr.bf16.mxu0 0
    %2107 = vmatmul.mubr.bf16.gmra.mxu0 %v2069
    %v2108 = vpop.f32.mrf.mxu0
    %v2109 = vadd.f32 0.0, %v2108
    %v2110 = vpop.f32.mrf.mxu0
    %v2111 = vpop.f32.mrf.mxu0
    %v2112 = vpop.f32.mrf.mxu0
    %2113 = vdwg.mxu0
    %2114 = vrot.lane.b32.xlu0 %v1457, 32
    %v2115 = vpop.permute.xlu0 %2114
    %2116 = vrot.lane.b32.xlu0 %v1458, 32
    %v2117 = vpop.permute.xlu0 %2116
    %v2119 = vsel %vm536, %v2115, 0
    %v2122 = vsel %vm536, %v2117, 0
    %2124 = vmatprep.subr.bf16.mxu0 0
    %2125 = vmatpush1.bf16.xpose.msra.mxu0 0
    %2126 = vmatprep.subr.bf16.mxu0 0
    %2127 = vmatpush1.bf16.xpose.msra.mxu0 0
    %2128 = vmatprep.subr.bf16.mxu0 0
    %2129 = vmatpush1.bf16.xpose.msra.mxu0 0
    %2130 = vmatprep.subr.bf16.mxu0 0
    %2131 = vmatpush1.bf16.xpose.msra.mxu0 0
    %2132 = vmatprep.subr.bf16.mxu0 0
    %2133 = vmatpush1.bf16.xpose.msra.mxu0 0
    %2134 = vmatprep.subr.bf16.mxu0 0
    %2135 = vmatpush1.bf16.xpose.msra.mxu0 0
    %2136 = vmatprep.subr.bf16.mxu0 0
    %2137 = vmatpush1.bf16.xpose.msra.mxu0 0
    %2138 = vmatprep.subr.bf16.mxu0 0
    %2139 = vmatpush1.bf16.xpose.msra.mxu0 %v2122
    %2140 = vmatprep.subr.bf16.mxu0 0
    %2141 = vmatpush2.bf16.xpose.msra.mxu0 0
    %2142 = vmatprep.subr.bf16.mxu0 0
    %2143 = vmatpush2.bf16.xpose.msra.mxu0 0
    %2144 = vmatprep.subr.bf16.mxu0 0
    %2145 = vmatpush2.bf16.xpose.msra.mxu0 0
    %2146 = vmatprep.subr.bf16.mxu0 0
    %2147 = vmatpush2.bf16.xpose.msra.mxu0 0
    %2148 = vmatprep.subr.bf16.mxu0 0
    %2149 = vmatpush2.bf16.xpose.msra.mxu0 0
    %2150 = vmatprep.subr.bf16.mxu0 0
    %2151 = vmatpush2.bf16.xpose.msra.mxu0 0
    %2152 = vmatprep.subr.bf16.mxu0 0
    %2153 = vmatpush2.bf16.xpose.msra.mxu0 0
    %2154 = vmatprep.subr.bf16.mxu0 0
    %2155 = vmatpush2.bf16.xpose.msra.mxu0 0
    %2156 = vmatprep.mubr.bf16.mxu0 0
    %2157 = vmatmul.mubr.bf16.gmra.mxu0 %v2119
    %v2158 = vpop.f32.mrf.mxu0
    %v2159 = vadd.f32 0.0, %v2158
    %v2160 = vpop.f32.mrf.mxu0
    %v2161 = vpop.f32.mrf.mxu0
    %v2162 = vpop.f32.mrf.mxu0
    %2163 = vdwg.mxu0
    %v2164 = vsel %vm583, %v2159, -inf
    %2165 = vmax.xlane.f32.xlu0 %v2164
    %v2166 = vpop.xlane.xlu0 %2165
    %v2167 = vsub.f32 %v2159, %v2166
    %v2168 = vmul.f32 %v2167, 1.442695
    %v2169 = vpow.pop %v2168
    %v2170 = vsel %vm583, %v2169, 0.0
    %2171 = vadd.xlane.f32.xlu0 %v2170
    %v2172 = vpop.xlane.xlu0 %2171
    %v2173 = vrcp.pop %v2172
    %v2174 = vmul.f32 %v2169, %v2173
    %v2175 = vpack.c.bf16 %v2174, %v2174
    %2176 = vrot.lane.b32.xlu0 %v1517, 32
    %v2177 = vpop.permute.xlu0 %2176
    %v2179 = vsel %vm583, %v2175, 0
    %v2182 = vsel %vm599, %v2177, 0
    %2184 = vmatprep.subr.bf16.mxu0 0
    %2185 = vmatpush1.bf16.msra.mxu0 0
    %2186 = vmatprep.subr.bf16.mxu0 0
    %2187 = vmatpush1.bf16.msra.mxu0 0
    %2188 = vmatprep.subr.bf16.mxu0 0
    %2189 = vmatpush1.bf16.msra.mxu0 0
    %2190 = vmatprep.subr.bf16.mxu0 0
    %2191 = vmatpush1.bf16.msra.mxu0 0
    %2192 = vmatprep.subr.bf16.mxu0 0
    %2193 = vmatpush1.bf16.msra.mxu0 0
    %2194 = vmatprep.subr.bf16.mxu0 0
    %2195 = vmatpush1.bf16.msra.mxu0 0
    %2196 = vmatprep.subr.bf16.mxu0 0
    %2197 = vmatpush1.bf16.msra.mxu0 0
    %2198 = vmatprep.subr.bf16.mxu0 0
    %2199 = vmatpush1.bf16.msra.mxu0 %v2182
    %2200 = vmatprep.subr.bf16.mxu0 0
    %2201 = vmatpush2.bf16.msra.mxu0 0
    %2202 = vmatprep.subr.bf16.mxu0 0
    %2203 = vmatpush2.bf16.msra.mxu0 0
    %2204 = vmatprep.subr.bf16.mxu0 0
    %2205 = vmatpush2.bf16.msra.mxu0 0
    %2206 = vmatprep.subr.bf16.mxu0 0
    %2207 = vmatpush2.bf16.msra.mxu0 0
    %2208 = vmatprep.subr.bf16.mxu0 0
    %2209 = vmatpush2.bf16.msra.mxu0 0
    %2210 = vmatprep.subr.bf16.mxu0 0
    %2211 = vmatpush2.bf16.msra.mxu0 0
    %2212 = vmatprep.subr.bf16.mxu0 0
    %2213 = vmatpush2.bf16.msra.mxu0 0
    %2214 = vmatprep.subr.bf16.mxu0 0
    %2215 = vmatpush2.bf16.msra.mxu0 0
    %2216 = vmatprep.mubr.bf16.mxu0 0
    %2217 = vmatmul.mubr.bf16.gmra.mxu0 %v2179
    %v2218 = vpop.f32.mrf.mxu0
    %v2219 = vadd.f32 0.0, %v2218
    %v2220 = vpop.f32.mrf.mxu0
    %v2221 = vpop.f32.mrf.mxu0
    %v2222 = vpop.f32.mrf.mxu0
    %2223 = vdwg.mxu0
    %2224 = vrot.lane.b32.xlu0 %v1457, 16
    %v2225 = vpop.permute.xlu0 %2224
    %2226 = vrot.lane.b32.xlu0 %v1458, 16
    %v2227 = vpop.permute.xlu0 %2226
    %v2229 = vsel %vm536, %v2225, 0
    %v2232 = vsel %vm536, %v2227, 0
    %2234 = vmatprep.subr.bf16.mxu0 0
    %2235 = vmatpush1.bf16.xpose.msra.mxu0 0
    %2236 = vmatprep.subr.bf16.mxu0 0
    %2237 = vmatpush1.bf16.xpose.msra.mxu0 0
    %2238 = vmatprep.subr.bf16.mxu0 0
    %2239 = vmatpush1.bf16.xpose.msra.mxu0 0
    %2240 = vmatprep.subr.bf16.mxu0 0
    %2241 = vmatpush1.bf16.xpose.msra.mxu0 0
    %2242 = vmatprep.subr.bf16.mxu0 0
    %2243 = vmatpush1.bf16.xpose.msra.mxu0 0
    %2244 = vmatprep.subr.bf16.mxu0 0
    %2245 = vmatpush1.bf16.xpose.msra.mxu0 0
    %2246 = vmatprep.subr.bf16.mxu0 0
    %2247 = vmatpush1.bf16.xpose.msra.mxu0 0
    %2248 = vmatprep.subr.bf16.mxu0 0
    %2249 = vmatpush1.bf16.xpose.msra.mxu0 %v2232
    %2250 = vmatprep.subr.bf16.mxu0 0
    %2251 = vmatpush2.bf16.xpose.msra.mxu0 0
    %2252 = vmatprep.subr.bf16.mxu0 0
    %2253 = vmatpush2.bf16.xpose.msra.mxu0 0
    %2254 = vmatprep.subr.bf16.mxu0 0
    %2255 = vmatpush2.bf16.xpose.msra.mxu0 0
    %2256 = vmatprep.subr.bf16.mxu0 0
    %2257 = vmatpush2.bf16.xpose.msra.mxu0 0
    %2258 = vmatprep.subr.bf16.mxu0 0
    %2259 = vmatpush2.bf16.xpose.msra.mxu0 0
    %2260 = vmatprep.subr.bf16.mxu0 0
    %2261 = vmatpush2.bf16.xpose.msra.mxu0 0
    %2262 = vmatprep.subr.bf16.mxu0 0
    %2263 = vmatpush2.bf16.xpose.msra.mxu0 0
    %2264 = vmatprep.subr.bf16.mxu0 0
    %2265 = vmatpush2.bf16.xpose.msra.mxu0 0
    %2266 = vmatprep.mubr.bf16.mxu0 0
    %2267 = vmatmul.mubr.bf16.gmra.mxu0 %v2229
    %v2268 = vpop.f32.mrf.mxu0
    %v2269 = vadd.f32 0.0, %v2268
    %v2270 = vpop.f32.mrf.mxu0
    %v2271 = vpop.f32.mrf.mxu0
    %v2272 = vpop.f32.mrf.mxu0
    %2273 = vdwg.mxu0
    %v2274 = vsel %vm583, %v2269, -inf
    %2275 = vmax.xlane.f32.xlu0 %v2274
    %v2276 = vpop.xlane.xlu0 %2275
    %v2277 = vsub.f32 %v2269, %v2276
    %v2278 = vmul.f32 %v2277, 1.442695
    %v2279 = vpow.pop %v2278
    %v2280 = vsel %vm583, %v2279, 0.0
    %2281 = vadd.xlane.f32.xlu0 %v2280
    %v2282 = vpop.xlane.xlu0 %2281
    %v2283 = vrcp.pop %v2282
    %v2284 = vmul.f32 %v2279, %v2283
    %v2285 = vpack.c.bf16 %v2284, %v2284
    %2286 = vrot.lane.b32.xlu0 %v1517, 16
    %v2287 = vpop.permute.xlu0 %2286
    %v2289 = vsel %vm583, %v2285, 0
    %v2292 = vsel %vm599, %v2287, 0
    %2294 = vmatprep.subr.bf16.mxu0 0
    %2295 = vmatpush1.bf16.msra.mxu0 0
    %2296 = vmatprep.subr.bf16.mxu0 0
    %2297 = vmatpush1.bf16.msra.mxu0 0
    %2298 = vmatprep.subr.bf16.mxu0 0
    %2299 = vmatpush1.bf16.msra.mxu0 0
    %2300 = vmatprep.subr.bf16.mxu0 0
    %2301 = vmatpush1.bf16.msra.mxu0 0
    %2302 = vmatprep.subr.bf16.mxu0 0
    %2303 = vmatpush1.bf16.msra.mxu0 0
    %2304 = vmatprep.subr.bf16.mxu0 0
    %2305 = vmatpush1.bf16.msra.mxu0 0
    %2306 = vmatprep.subr.bf16.mxu0 0
    %2307 = vmatpush1.bf16.msra.mxu0 0
    %2308 = vmatprep.subr.bf16.mxu0 0
    %2309 = vmatpush1.bf16.msra.mxu0 %v2292
    %2310 = vmatprep.subr.bf16.mxu0 0
    %2311 = vmatpush2.bf16.msra.mxu0 0
    %2312 = vmatprep.subr.bf16.mxu0 0
    %2313 = vmatpush2.bf16.msra.mxu0 0
    %2314 = vmatprep.subr.bf16.mxu0 0
    %2315 = vmatpush2.bf16.msra.mxu0 0
    %2316 = vmatprep.subr.bf16.mxu0 0
    %2317 = vmatpush2.bf16.msra.mxu0 0
    %2318 = vmatprep.subr.bf16.mxu0 0
    %2319 = vmatpush2.bf16.msra.mxu0 0
    %2320 = vmatprep.subr.bf16.mxu0 0
    %2321 = vmatpush2.bf16.msra.mxu0 0
    %2322 = vmatprep.subr.bf16.mxu0 0
    %2323 = vmatpush2.bf16.msra.mxu0 0
    %2324 = vmatprep.subr.bf16.mxu0 0
    %2325 = vmatpush2.bf16.msra.mxu0 0
    %2326 = vmatprep.mubr.bf16.mxu0 0
    %2327 = vmatmul.mubr.bf16.gmra.mxu0 %v2289
    %v2328 = vpop.f32.mrf.mxu0
    %v2329 = vadd.f32 0.0, %v2328
    %v2330 = vpop.f32.mrf.mxu0
    %v2331 = vpop.f32.mrf.mxu0
    %v2332 = vpop.f32.mrf.mxu0
    %2333 = vdwg.mxu0
    %2335 = vrot.lane.b32.xlu0 %v1669, 16
    %v2336 = vpop.permute.xlu0 %2335
    %2339 = vrot.lane.b32.xlu0 %v1779, 32
    %v2340 = vpop.permute.xlu0 %2339
    %2343 = vrot.lane.b32.xlu0 %v1889, 48
    %v2344 = vpop.permute.xlu0 %2343
    %2347 = vrot.lane.b32.xlu0 %v1999, 64
    %v2348 = vpop.permute.xlu0 %2347
    %2351 = vrot.lane.b32.xlu0 %v2109, 80
    %v2352 = vpop.permute.xlu0 %2351
    %2355 = vrot.lane.b32.xlu0 %v2219, 96
    %v2356 = vpop.permute.xlu0 %2355
    %2359 = vrot.lane.b32.xlu0 %v2329, 112
    %v2360 = vpop.permute.xlu0 %2359
    %v2362 = vsel %vm536, %v1559, %v2336
    %v2363 = vsel %vm1445, %v2362, %v2340
    %v2364 = vsel %vm1447, %v2363, %v2344
    %v2365 = vsel %vm1449, %v2364, %v2348
    %v2366 = vsel %vm1451, %v2365, %v2352
    %v2367 = vsel %vm1453, %v2366, %v2356
    %v2368 = vsel %vm1455, %v2367, %v2360
    %v2369 = vpack.c.bf16 %v2368, %v1456
    %v2370 = vld [vmem:[#allocation13] sm:$0xf]
    %v2371 = vld [vmem:[#allocation13 + $0x4] sm:$0xf]
    %v2372 = vld [vmem:[#allocation13 + $0x8] sm:$0xf]
    %v2373 = vld [vmem:[#allocation13 + $0xc] sm:$0xf]
    %v2374 = vld [vmem:[#allocation13 + $0x10] sm:$0xf]
    %v2375 = vld [vmem:[#allocation13 + $0x14] sm:$0xf]
    %v2376 = vld [vmem:[#allocation13 + $0x18] sm:$0xf]
    %v2377 = vld [vmem:[#allocation13 + $0x1c] sm:$0xf]
    %v2378 = vld [vmem:[#allocation13 + $0x20] sm:$0xf]
    %v2379 = vld [vmem:[#allocation13 + $0x24] sm:$0xf]
    %v2380 = vld [vmem:[#allocation13 + $0x28] sm:$0xf]
    %v2381 = vld [vmem:[#allocation13 + $0x2c] sm:$0xf]
    %v2382 = vld [vmem:[#allocation13 + $0x30] sm:$0xf]
    %v2383 = vld [vmem:[#allocation13 + $0x34] sm:$0xf]
    %v2384 = vld [vmem:[#allocation13 + $0x38] sm:$0xf]
    %v2385 = vld [vmem:[#allocation13 + $0x3c] sm:$0xf]
    %v2386 = vld [vmem:[%s10] sm:$0x1]
    %v2388 = vlaneseq
    %v2389 = vshrl.u32 %v2388, 7
    %v2390 = vsub.s32 0, %v2389
    %v2391 = vrot.slane %v2386, %v2390
    %v2409 = vunpack.c.l.b16 %v2370
    %v2410 = vunpack.c.l.b16 %v2371
    %v2411 = vunpack.c.l.b16 %v2372
    %v2412 = vunpack.c.l.b16 %v2373
    %v2413 = vunpack.c.l.b16 %v2374
    %v2414 = vunpack.c.l.b16 %v2375
    %v2415 = vunpack.c.l.b16 %v2376
    %v2416 = vunpack.c.l.b16 %v2377
    %v2417 = vunpack.c.l.b16 %v2378
    %v2418 = vunpack.c.l.b16 %v2379
    %v2419 = vunpack.c.l.b16 %v2380
    %v2420 = vunpack.c.l.b16 %v2381
    %v2421 = vunpack.c.l.b16 %v2382
    %v2422 = vunpack.c.l.b16 %v2383
    %v2423 = vunpack.c.l.b16 %v2384
    %v2424 = vunpack.c.l.b16 %v2385
    %v2425 = vpack.c.b16 %v2410, %v2409
    %v2426 = vpack.c.b16 %v2412, %v2411
    %v2427 = vpack.c.b16 %v2414, %v2413
    %v2428 = vpack.c.b16 %v2416, %v2415
    %v2429 = vpack.c.b16 %v2418, %v2417
    %v2430 = vpack.c.b16 %v2420, %v2419
    %v2431 = vpack.c.b16 %v2422, %v2421
    %v2432 = vpack.c.b16 %v2424, %v2423
    %2441 = vmatprep.subr.bf16.mxu0 0
    %2442 = vmatpush1.bf16.msra.mxu0 %v2432
    %2443 = vmatprep.subr.bf16.mxu0 0
    %2444 = vmatpush1.bf16.msra.mxu0 %v2431
    %2445 = vmatprep.subr.bf16.mxu0 0
    %2446 = vmatpush1.bf16.msra.mxu0 %v2430
    %2447 = vmatprep.subr.bf16.mxu0 0
    %2448 = vmatpush1.bf16.msra.mxu0 %v2429
    %2449 = vmatprep.subr.bf16.mxu0 0
    %2450 = vmatpush1.bf16.msra.mxu0 %v2428
    %2451 = vmatprep.subr.bf16.mxu0 0
    %2452 = vmatpush1.bf16.msra.mxu0 %v2427
    %2453 = vmatprep.subr.bf16.mxu0 0
    %2454 = vmatpush1.bf16.msra.mxu0 %v2426
    %2455 = vmatprep.subr.bf16.mxu0 0
    %2456 = vmatpush1.bf16.msra.mxu0 %v2425
    %2457 = vmatprep.subr.bf16.mxu0 0
    %2458 = vmatpush2.bf16.msra.mxu0 0
    %2459 = vmatprep.subr.bf16.mxu0 0
    %2460 = vmatpush2.bf16.msra.mxu0 0
    %2461 = vmatprep.subr.bf16.mxu0 0
    %2462 = vmatpush2.bf16.msra.mxu0 0
    %2463 = vmatprep.subr.bf16.mxu0 0
    %2464 = vmatpush2.bf16.msra.mxu0 0
    %2465 = vmatprep.subr.bf16.mxu0 0
    %2466 = vmatpush2.bf16.msra.mxu0 0
    %2467 = vmatprep.subr.bf16.mxu0 0
    %2468 = vmatpush2.bf16.msra.mxu0 0
    %2469 = vmatprep.subr.bf16.mxu0 0
    %2470 = vmatpush2.bf16.msra.mxu0 0
    %2471 = vmatprep.subr.bf16.mxu0 0
    %2472 = vmatpush2.bf16.msra.mxu0 0
    %2473 = vmatprep.mubr.bf16.mxu0 0
    %2474 = vmatmul.mubr.bf16.gmra.mxu0 %v2369
    %v2475 = vpop.f32.mrf.mxu0
    %v2476 = vadd.f32 %v2391, %v2475
    %v2477 = vpop.f32.mrf.mxu0
    %v2478 = vpop.f32.mrf.mxu0
    %v2479 = vadd.f32 %v2391, %v2478
    %v2480 = vpop.f32.mrf.mxu0
    %2481 = vdwg.mxu0
    %v2482 = vadd.f32 %v2476, %v186
    %v2483 = vadd.f32 %v2479, %v187
    %2484 = vadd.xlane.f32.xlu0 %v2482
    %v2485 = vpop.xlane.xlu0 %2484
    %2486 = vadd.xlane.f32.xlu0 %v2483
    %v2487 = vpop.xlane.xlu0 %2486
    %v2488 = vrcp.pop 128.0
    %v2489 = vmul.f32 %v2485, %v2488
    %v2490 = vmul.f32 %v2487, %v2488
    %v2491 = vsub.f32 %v2482, %v2489
    %v2492 = vsub.f32 %v2483, %v2490
    %v2493 = vmul.f32 %v2491, %v2491
    %v2494 = vmul.f32 %v2492, %v2492
    %2495 = vadd.xlane.f32.xlu0 %v2493
    %v2496 = vpop.xlane.xlu0 %2495
    %2497 = vadd.xlane.f32.xlu0 %v2494
    %v2498 = vpop.xlane.xlu0 %2497
    %v2499 = vmul.f32 %v2496, %v2488
    %v2500 = vmul.f32 %v2498, %v2488
    %v2501 = vadd.f32 %v2499, 1e-05
    %v2502 = vadd.f32 %v2500, 1e-05
    %v2503 = vrsqrt.pop %v2501
    %v2504 = vrsqrt.pop %v2502
    %v2505 = vmul.f32 %v2491, %v2503
    %v2506 = vmul.f32 %v2492, %v2504
    %v2507 = vld [vmem:[%s11] sm:$0x1]
    %v2509 = vlaneseq
    %v2510 = vshrl.u32 %v2509, 7
    %v2511 = vsub.s32 0, %v2510
    %v2512 = vrot.slane %v2507, %v2511
    %v2514 = vmul.f32 %v2505, %v2512
    %v2515 = vmul.f32 %v2506, %v2512
    %v2516 = vld [vmem:[%s12] sm:$0x1]
    %v2518 = vlaneseq
    %v2519 = vshrl.u32 %v2518, 7
    %v2520 = vsub.s32 0, %v2519
    %v2521 = vrot.slane %v2516, %v2520
    %v2523 = vadd.f32 %v2514, %v2521
    %v2524 = vadd.f32 %v2515, %v2521
    %v2525 = vpack.c.bf16 %v2524, %v2523
    %v2526 = vld [vmem:[#allocation14] sm:$0xff]
    %v2527 = vld [vmem:[#allocation14 + $0x8] sm:$0xff]
    %v2528 = vld [vmem:[#allocation14 + $0x10] sm:$0xff]
    %v2529 = vld [vmem:[#allocation14 + $0x18] sm:$0xff]
    %v2530 = vld [vmem:[#allocation14 + $0x20] sm:$0xff]
    %v2531 = vld [vmem:[#allocation14 + $0x28] sm:$0xff]
    %v2532 = vld [vmem:[#allocation14 + $0x30] sm:$0xff]
    %v2533 = vld [vmem:[#allocation14 + $0x38] sm:$0xff]
    %v2534 = vld [vmem:[#allocation14 + $0x40] sm:$0xff]
    %v2535 = vld [vmem:[#allocation14 + $0x48] sm:$0xff]
    %v2536 = vld [vmem:[#allocation14 + $0x50] sm:$0xff]
    %v2537 = vld [vmem:[#allocation14 + $0x58] sm:$0xff]
    %v2538 = vld [vmem:[#allocation14 + $0x60] sm:$0xff]
    %v2539 = vld [vmem:[#allocation14 + $0x68] sm:$0xff]
    %v2540 = vld [vmem:[#allocation14 + $0x70] sm:$0xff]
    %v2541 = vld [vmem:[#allocation14 + $0x78] sm:$0xff]
    %v2542 = vld [vmem:[#allocation14 + $0x80] sm:$0xff]
    %v2543 = vld [vmem:[#allocation14 + $0x88] sm:$0xff]
    %v2544 = vld [vmem:[#allocation14 + $0x90] sm:$0xff]
    %v2545 = vld [vmem:[#allocation14 + $0x98] sm:$0xff]
    %v2546 = vld [vmem:[#allocation14 + $0xa0] sm:$0xff]
    %v2547 = vld [vmem:[#allocation14 + $0xa8] sm:$0xff]
    %v2548 = vld [vmem:[#allocation14 + $0xb0] sm:$0xff]
    %v2549 = vld [vmem:[#allocation14 + $0xb8] sm:$0xff]
    %v2550 = vld [vmem:[#allocation14 + $0xc0] sm:$0xff]
    %v2551 = vld [vmem:[#allocation14 + $0xc8] sm:$0xff]
    %v2552 = vld [vmem:[#allocation14 + $0xd0] sm:$0xff]
    %v2553 = vld [vmem:[#allocation14 + $0xd8] sm:$0xff]
    %v2554 = vld [vmem:[#allocation14 + $0xe0] sm:$0xff]
    %v2555 = vld [vmem:[#allocation14 + $0xe8] sm:$0xff]
    %v2556 = vld [vmem:[#allocation14 + $0xf0] sm:$0xff]
    %v2557 = vld [vmem:[#allocation14 + $0xf8] sm:$0xff]
    %v2558 = vld [vmem:[#allocation14 + $0x100] sm:$0xff]
    %v2559 = vld [vmem:[#allocation14 + $0x108] sm:$0xff]
    %v2560 = vld [vmem:[#allocation14 + $0x110] sm:$0xff]
    %v2561 = vld [vmem:[#allocation14 + $0x118] sm:$0xff]
    %v2562 = vld [vmem:[#allocation14 + $0x120] sm:$0xff]
    %v2563 = vld [vmem:[#allocation14 + $0x128] sm:$0xff]
    %v2564 = vld [vmem:[#allocation14 + $0x130] sm:$0xff]
    %v2565 = vld [vmem:[#allocation14 + $0x138] sm:$0xff]
    %v2566 = vld [vmem:[#allocation14 + $0x140] sm:$0xff]
    %v2567 = vld [vmem:[#allocation14 + $0x148] sm:$0xff]
    %v2568 = vld [vmem:[#allocation14 + $0x150] sm:$0xff]
    %v2569 = vld [vmem:[#allocation14 + $0x158] sm:$0xff]
    %v2570 = vld [vmem:[#allocation14 + $0x160] sm:$0xff]
    %v2571 = vld [vmem:[#allocation14 + $0x168] sm:$0xff]
    %v2572 = vld [vmem:[#allocation14 + $0x170] sm:$0xff]
    %v2573 = vld [vmem:[#allocation14 + $0x178] sm:$0xff]
    %v2574 = vld [vmem:[#allocation14 + $0x180] sm:$0xff]
    %v2575 = vld [vmem:[#allocation14 + $0x188] sm:$0xff]
    %v2576 = vld [vmem:[#allocation14 + $0x190] sm:$0xff]
    %v2577 = vld [vmem:[#allocation14 + $0x198] sm:$0xff]
    %v2578 = vld [vmem:[#allocation14 + $0x1a0] sm:$0xff]
    %v2579 = vld [vmem:[#allocation14 + $0x1a8] sm:$0xff]
    %v2580 = vld [vmem:[#allocation14 + $0x1b0] sm:$0xff]
    %v2581 = vld [vmem:[#allocation14 + $0x1b8] sm:$0xff]
    %v2582 = vld [vmem:[#allocation14 + $0x1c0] sm:$0xff]
    %v2583 = vld [vmem:[#allocation14 + $0x1c8] sm:$0xff]
    %v2584 = vld [vmem:[#allocation14 + $0x1d0] sm:$0xff]
    %v2585 = vld [vmem:[#allocation14 + $0x1d8] sm:$0xff]
    %v2586 = vld [vmem:[#allocation14 + $0x1e0] sm:$0xff]
    %v2587 = vld [vmem:[#allocation14 + $0x1e8] sm:$0xff]
    %v2588 = vld [vmem:[#allocation14 + $0x1f0] sm:$0xff]
    %v2589 = vld [vmem:[#allocation14 + $0x1f8] sm:$0xff]
    %v2590 = vld [vmem:[%s14] sm:$0xff]
    %v2592 = vlaneseq
    %v2593 = vshrl.u32 %v2592, 7
    %v2594 = vsub.s32 0, %v2593
    %v2595 = vrot.slane %v2590, %v2594
    %v2596 = vlaneseq
    %v2597 = vshrl.u32 %v2596, 7
    %v2598 = vsub.s32 1, %v2597
    %v2599 = vrot.slane %v2590, %v2598
    %v2600 = vlaneseq
    %v2601 = vshrl.u32 %v2600, 7
    %v2602 = vsub.s32 2, %v2601
    %v2603 = vrot.slane %v2590, %v2602
    %v2604 = vlaneseq
    %v2605 = vshrl.u32 %v2604, 7
    %v2606 = vsub.s32 3, %v2605
    %v2607 = vrot.slane %v2590, %v2606
    %v2608 = vlaneseq
    %v2609 = vshrl.u32 %v2608, 7
    %v2610 = vsub.s32 4, %v2609
    %v2611 = vrot.slane %v2590, %v2610
    %v2612 = vlaneseq
    %v2613 = vshrl.u32 %v2612, 7
    %v2614 = vsub.s32 5, %v2613
    %v2615 = vrot.slane %v2590, %v2614
    %v2616 = vlaneseq
    %v2617 = vshrl.u32 %v2616, 7
    %v2618 = vsub.s32 6, %v2617
    %v2619 = vrot.slane %v2590, %v2618
    %v2620 = vlaneseq
    %v2621 = vshrl.u32 %v2620, 7
    %v2622 = vsub.s32 7, %v2621
    %v2623 = vrot.slane %v2590, %v2622
    %v2696 = vunpack.c.l.b16 %v2526
    %v2697 = vunpack.c.h.b16 %v2526
    %v2698 = vunpack.c.l.b16 %v2527
    %v2699 = vunpack.c.h.b16 %v2527
    %v2700 = vunpack.c.l.b16 %v2528
    %v2701 = vunpack.c.h.b16 %v2528
    %v2702 = vunpack.c.l.b16 %v2529
    %v2703 = vunpack.c.h.b16 %v2529
    %v2704 = vunpack.c.l.b16 %v2530
    %v2705 = vunpack.c.h.b16 %v2530
    %v2706 = vunpack.c.l.b16 %v2531
    %v2707 = vunpack.c.h.b16 %v2531
    %v2708 = vunpack.c.l.b16 %v2532
    %v2709 = vunpack.c.h.b16 %v2532
    %v2710 = vunpack.c.l.b16 %v2533
    %v2711 = vunpack.c.h.b16 %v2533
    %v2712 = vunpack.c.l.b16 %v2534
    %v2713 = vunpack.c.h.b16 %v2534
    %v2714 = vunpack.c.l.b16 %v2535
    %v2715 = vunpack.c.h.b16 %v2535
    %v2716 = vunpack.c.l.b16 %v2536
    %v2717 = vunpack.c.h.b16 %v2536
    %v2718 = vunpack.c.l.b16 %v2537
    %v2719 = vunpack.c.h.b16 %v2537
    %v2720 = vunpack.c.l.b16 %v2538
    %v2721 = vunpack.c.h.b16 %v2538
    %v2722 = vunpack.c.l.b16 %v2539
    %v2723 = vunpack.c.h.b16 %v2539
    %v2724 = vunpack.c.l.b16 %v2540
    %v2725 = vunpack.c.h.b16 %v2540
    %v2726 = vunpack.c.l.b16 %v2541
    %v2727 = vunpack.c.h.b16 %v2541
    %v2728 = vunpack.c.l.b16 %v2542
    %v2729 = vunpack.c.h.b16 %v2542
    %v2730 = vunpack.c.l.b16 %v2543
    %v2731 = vunpack.c.h.b16 %v2543
    %v2732 = vunpack.c.l.b16 %v2544
    %v2733 = vunpack.c.h.b16 %v2544
    %v2734 = vunpack.c.l.b16 %v2545
    %v2735 = vunpack.c.h.b16 %v2545
    %v2736 = vunpack.c.l.b16 %v2546
    %v2737 = vunpack.c.h.b16 %v2546
    %v2738 = vunpack.c.l.b16 %v2547
    %v2739 = vunpack.c.h.b16 %v2547
    %v2740 = vunpack.c.l.b16 %v2548
    %v2741 = vunpack.c.h.b16 %v2548
    %v2742 = vunpack.c.l.b16 %v2549
    %v2743 = vunpack.c.h.b16 %v2549
    %v2744 = vunpack.c.l.b16 %v2550
    %v2745 = vunpack.c.h.b16 %v2550
    %v2746 = vunpack.c.l.b16 %v2551
    %v2747 = vunpack.c.h.b16 %v2551
    %v2748 = vunpack.c.l.b16 %v2552
    %v2749 = vunpack.c.h.b16 %v2552
    %v2750 = vunpack.c.l.b16 %v2553
    %v2751 = vunpack.c.h.b16 %v2553
    %v2752 = vunpack.c.l.b16 %v2554
    %v2753 = vunpack.c.h.b16 %v2554
    %v2754 = vunpack.c.l.b16 %v2555
    %v2755 = vunpack.c.h.b16 %v2555
    %v2756 = vunpack.c.l.b16 %v2556
    %v2757 = vunpack.c.h.b16 %v2556
    %v2758 = vunpack.c.l.b16 %v2557
    %v2759 = vunpack.c.h.b16 %v2557
    %v2760 = vunpack.c.l.b16 %v2558
    %v2761 = vunpack.c.h.b16 %v2558
    %v2762 = vunpack.c.l.b16 %v2559
    %v2763 = vunpack.c.h.b16 %v2559
    %v2764 = vunpack.c.l.b16 %v2560
    %v2765 = vunpack.c.h.b16 %v2560
    %v2766 = vunpack.c.l.b16 %v2561
    %v2767 = vunpack.c.h.b16 %v2561
    %v2768 = vunpack.c.l.b16 %v2562
    %v2769 = vunpack.c.h.b16 %v2562
    %v2770 = vunpack.c.l.b16 %v2563
    %v2771 = vunpack.c.h.b16 %v2563
    %v2772 = vunpack.c.l.b16 %v2564
    %v2773 = vunpack.c.h.b16 %v2564
    %v2774 = vunpack.c.l.b16 %v2565
    %v2775 = vunpack.c.h.b16 %v2565
    %v2776 = vunpack.c.l.b16 %v2566
    %v2777 = vunpack.c.h.b16 %v2566
    %v2778 = vunpack.c.l.b16 %v2567
    %v2779 = vunpack.c.h.b16 %v2567
    %v2780 = vunpack.c.l.b16 %v2568
    %v2781 = vunpack.c.h.b16 %v2568
    %v2782 = vunpack.c.l.b16 %v2569
    %v2783 = vunpack.c.h.b16 %v2569
    %v2784 = vunpack.c.l.b16 %v2570
    %v2785 = vunpack.c.h.b16 %v2570
    %v2786 = vunpack.c.l.b16 %v2571
    %v2787 = vunpack.c.h.b16 %v2571
    %v2788 = vunpack.c.l.b16 %v2572
    %v2789 = vunpack.c.h.b16 %v2572
    %v2790 = vunpack.c.l.b16 %v2573
    %v2791 = vunpack.c.h.b16 %v2573
    %v2792 = vunpack.c.l.b16 %v2574
    %v2793 = vunpack.c.h.b16 %v2574
    %v2794 = vunpack.c.l.b16 %v2575
    %v2795 = vunpack.c.h.b16 %v2575
    %v2796 = vunpack.c.l.b16 %v2576
    %v2797 = vunpack.c.h.b16 %v2576
    %v2798 = vunpack.c.l.b16 %v2577
    %v2799 = vunpack.c.h.b16 %v2577
    %v2800 = vunpack.c.l.b16 %v2578
    %v2801 = vunpack.c.h.b16 %v2578
    %v2802 = vunpack.c.l.b16 %v2579
    %v2803 = vunpack.c.h.b16 %v2579
    %v2804 = vunpack.c.l.b16 %v2580
    %v2805 = vunpack.c.h.b16 %v2580
    %v2806 = vunpack.c.l.b16 %v2581
    %v2807 = vunpack.c.h.b16 %v2581
    %v2808 = vunpack.c.l.b16 %v2582
    %v2809 = vunpack.c.h.b16 %v2582
    %v2810 = vunpack.c.l.b16 %v2583
    %v2811 = vunpack.c.h.b16 %v2583
    %v2812 = vunpack.c.l.b16 %v2584
    %v2813 = vunpack.c.h.b16 %v2584
    %v2814 = vunpack.c.l.b16 %v2585
    %v2815 = vunpack.c.h.b16 %v2585
    %v2816 = vunpack.c.l.b16 %v2586
    %v2817 = vunpack.c.h.b16 %v2586
    %v2818 = vunpack.c.l.b16 %v2587
    %v2819 = vunpack.c.h.b16 %v2587
    %v2820 = vunpack.c.l.b16 %v2588
    %v2821 = vunpack.c.h.b16 %v2588
    %v2822 = vunpack.c.l.b16 %v2589
    %v2823 = vunpack.c.h.b16 %v2589
    %v2824 = vpack.c.b16 %v2704, %v2696
    %v2825 = vpack.c.b16 %v2705, %v2697
    %v2826 = vpack.c.b16 %v2706, %v2698
    %v2827 = vpack.c.b16 %v2707, %v2699
    %v2828 = vpack.c.b16 %v2708, %v2700
    %v2829 = vpack.c.b16 %v2709, %v2701
    %v2830 = vpack.c.b16 %v2710, %v2702
    %v2831 = vpack.c.b16 %v2711, %v2703
    %v2832 = vpack.c.b16 %v2720, %v2712
    %v2833 = vpack.c.b16 %v2721, %v2713
    %v2834 = vpack.c.b16 %v2722, %v2714
    %v2835 = vpack.c.b16 %v2723, %v2715
    %v2836 = vpack.c.b16 %v2724, %v2716
    %v2837 = vpack.c.b16 %v2725, %v2717
    %v2838 = vpack.c.b16 %v2726, %v2718
    %v2839 = vpack.c.b16 %v2727, %v2719
    %v2840 = vpack.c.b16 %v2736, %v2728
    %v2841 = vpack.c.b16 %v2737, %v2729
    %v2842 = vpack.c.b16 %v2738, %v2730
    %v2843 = vpack.c.b16 %v2739, %v2731
    %v2844 = vpack.c.b16 %v2740, %v2732
    %v2845 = vpack.c.b16 %v2741, %v2733
    %v2846 = vpack.c.b16 %v2742, %v2734
    %v2847 = vpack.c.b16 %v2743, %v2735
    %v2848 = vpack.c.b16 %v2752, %v2744
    %v2849 = vpack.c.b16 %v2753, %v2745
    %v2850 = vpack.c.b16 %v2754, %v2746
    %v2851 = vpack.c.b16 %v2755, %v2747
    %v2852 = vpack.c.b16 %v2756, %v2748
    %v2853 = vpack.c.b16 %v2757, %v2749
    %v2854 = vpack.c.b16 %v2758, %v2750
    %v2855 = vpack.c.b16 %v2759, %v2751
    %v2856 = vpack.c.b16 %v2768, %v2760
    %v2857 = vpack.c.b16 %v2769, %v2761
    %v2858 = vpack.c.b16 %v2770, %v2762
    %v2859 = vpack.c.b16 %v2771, %v2763
    %v2860 = vpack.c.b16 %v2772, %v2764
    %v2861 = vpack.c.b16 %v2773, %v2765
    %v2862 = vpack.c.b16 %v2774, %v2766
    %v2863 = vpack.c.b16 %v2775, %v2767
    %v2864 = vpack.c.b16 %v2784, %v2776
    %v2865 = vpack.c.b16 %v2785, %v2777
    %v2866 = vpack.c.b16 %v2786, %v2778
    %v2867 = vpack.c.b16 %v2787, %v2779
    %v2868 = vpack.c.b16 %v2788, %v2780
    %v2869 = vpack.c.b16 %v2789, %v2781
    %v2870 = vpack.c.b16 %v2790, %v2782
    %v2871 = vpack.c.b16 %v2791, %v2783
    %v2872 = vpack.c.b16 %v2800, %v2792
    %v2873 = vpack.c.b16 %v2801, %v2793
    %v2874 = vpack.c.b16 %v2802, %v2794
    %v2875 = vpack.c.b16 %v2803, %v2795
    %v2876 = vpack.c.b16 %v2804, %v2796
    %v2877 = vpack.c.b16 %v2805, %v2797
    %v2878 = vpack.c.b16 %v2806, %v2798
    %v2879 = vpack.c.b16 %v2807, %v2799
    %v2880 = vpack.c.b16 %v2816, %v2808
    %v2881 = vpack.c.b16 %v2817, %v2809
    %v2882 = vpack.c.b16 %v2818, %v2810
    %v2883 = vpack.c.b16 %v2819, %v2811
    %v2884 = vpack.c.b16 %v2820, %v2812
    %v2885 = vpack.c.b16 %v2821, %v2813
    %v2886 = vpack.c.b16 %v2822, %v2814
    %v2887 = vpack.c.b16 %v2823, %v2815
    %2952 = vmatprep.subr.bf16.mxu0 %v2881
    %2953 = vmatpush1.bf16.msra.mxu0 %v2880
    %2954 = vmatprep.subr.bf16.mxu0 %v2873
    %2955 = vmatpush1.bf16.msra.mxu0 %v2872
    %2956 = vmatprep.subr.bf16.mxu0 %v2865
    %2957 = vmatpush1.bf16.msra.mxu0 %v2864
    %2958 = vmatprep.subr.bf16.mxu0 %v2857
    %2959 = vmatpush1.bf16.msra.mxu0 %v2856
    %2960 = vmatprep.subr.bf16.mxu0 %v2849
    %2961 = vmatpush1.bf16.msra.mxu0 %v2848
    %2962 = vmatprep.subr.bf16.mxu0 %v2841
    %2963 = vmatpush1.bf16.msra.mxu0 %v2840
    %2964 = vmatprep.subr.bf16.mxu0 %v2833
    %2965 = vmatpush1.bf16.msra.mxu0 %v2832
    %2966 = vmatprep.subr.bf16.mxu0 %v2825
    %2967 = vmatpush1.bf16.msra.mxu0 %v2824
    %2968 = vmatprep.subr.bf16.mxu0 0
    %2969 = vmatpush2.bf16.msra.mxu0 0
    %2970 = vmatprep.subr.bf16.mxu0 0
    %2971 = vmatpush2.bf16.msra.mxu0 0
    %2972 = vmatprep.subr.bf16.mxu0 0
    %2973 = vmatpush2.bf16.msra.mxu0 0
    %2974 = vmatprep.subr.bf16.mxu0 0
    %2975 = vmatpush2.bf16.msra.mxu0 0
    %2976 = vmatprep.subr.bf16.mxu0 0
    %2977 = vmatpush2.bf16.msra.mxu0 0
    %2978 = vmatprep.subr.bf16.mxu0 0
    %2979 = vmatpush2.bf16.msra.mxu0 0
    %2980 = vmatprep.subr.bf16.mxu0 0
    %2981 = vmatpush2.bf16.msra.mxu0 0
    %2982 = vmatprep.subr.bf16.mxu0 0
    %2983 = vmatpush2.bf16.msra.mxu0 0
    %2984 = vmatprep.mubr.bf16.mxu0 0
    %2985 = vmatmul.mubr.bf16.gmra.mxu0 %v2525
    %v2986 = vpop.f32.mrf.mxu0
    %v2987 = vadd.f32 %v2595, %v2986
    %v2988 = vpop.f32.mrf.mxu0
    %v2989 = vadd.f32 %v2599, %v2988
    %v2990 = vpop.f32.mrf.mxu0
    %v2991 = vadd.f32 %v2595, %v2990
    %v2992 = vpop.f32.mrf.mxu0
    %v2993 = vadd.f32 %v2599, %v2992
    %2994 = vdwg.mxu0
    %2995 = vmatprep.subr.bf16.mxu0 %v2883
    %2996 = vmatpush1.bf16.msra.mxu0 %v2882
    %2997 = vmatprep.subr.bf16.mxu0 %v2875
    %2998 = vmatpush1.bf16.msra.mxu0 %v2874
    %2999 = vmatprep.subr.bf16.mxu0 %v2867
    %3000 = vmatpush1.bf16.msra.mxu0 %v2866
    %3001 = vmatprep.subr.bf16.mxu0 %v2859
    %3002 = vmatpush1.bf16.msra.mxu0 %v2858
    %3003 = vmatprep.subr.bf16.mxu0 %v2851
    %3004 = vmatpush1.bf16.msra.mxu0 %v2850
    %3005 = vmatprep.subr.bf16.mxu0 %v2843
    %3006 = vmatpush1.bf16.msra.mxu0 %v2842
    %3007 = vmatprep.subr.bf16.mxu0 %v2835
    %3008 = vmatpush1.bf16.msra.mxu0 %v2834
    %3009 = vmatprep.subr.bf16.mxu0 %v2827
    %3010 = vmatpush1.bf16.msra.mxu0 %v2826
    %3011 = vmatprep.subr.bf16.mxu0 0
    %3012 = vmatpush2.bf16.msra.mxu0 0
    %3013 = vmatprep.subr.bf16.mxu0 0
    %3014 = vmatpush2.bf16.msra.mxu0 0
    %3015 = vmatprep.subr.bf16.mxu0 0
    %3016 = vmatpush2.bf16.msra.mxu0 0
    %3017 = vmatprep.subr.bf16.mxu0 0
    %3018 = vmatpush2.bf16.msra.mxu0 0
    %3019 = vmatprep.subr.bf16.mxu0 0
    %3020 = vmatpush2.bf16.msra.mxu0 0
    %3021 = vmatprep.subr.bf16.mxu0 0
    %3022 = vmatpush2.bf16.msra.mxu0 0
    %3023 = vmatprep.subr.bf16.mxu0 0
    %3024 = vmatpush2.bf16.msra.mxu0 0
    %3025 = vmatprep.subr.bf16.mxu0 0
    %3026 = vmatpush2.bf16.msra.mxu0 0
    %3027 = vmatprep.mubr.bf16.mxu0 0
    %3028 = vmatmul.mubr.bf16.gmra.mxu0 %v2525
    %v3029 = vpop.f32.mrf.mxu0
    %v3030 = vadd.f32 %v2603, %v3029
    %v3031 = vpop.f32.mrf.mxu0
    %v3032 = vadd.f32 %v2607, %v3031
    %v3033 = vpop.f32.mrf.mxu0
    %v3034 = vadd.f32 %v2603, %v3033
    %v3035 = vpop.f32.mrf.mxu0
    %v3036 = vadd.f32 %v2607, %v3035
    %3037 = vdwg.mxu0
    %3038 = vmatprep.subr.bf16.mxu0 %v2885
    %3039 = vmatpush1.bf16.msra.mxu0 %v2884
    %3040 = vmatprep.subr.bf16.mxu0 %v2877
    %3041 = vmatpush1.bf16.msra.mxu0 %v2876
    %3042 = vmatprep.subr.bf16.mxu0 %v2869
    %3043 = vmatpush1.bf16.msra.mxu0 %v2868
    %3044 = vmatprep.subr.bf16.mxu0 %v2861
    %3045 = vmatpush1.bf16.msra.mxu0 %v2860
    %3046 = vmatprep.subr.bf16.mxu0 %v2853
    %3047 = vmatpush1.bf16.msra.mxu0 %v2852
    %3048 = vmatprep.subr.bf16.mxu0 %v2845
    %3049 = vmatpush1.bf16.msra.mxu0 %v2844
    %3050 = vmatprep.subr.bf16.mxu0 %v2837
    %3051 = vmatpush1.bf16.msra.mxu0 %v2836
    %3052 = vmatprep.subr.bf16.mxu0 %v2829
    %3053 = vmatpush1.bf16.msra.mxu0 %v2828
    %3054 = vmatprep.subr.bf16.mxu0 0
    %3055 = vmatpush2.bf16.msra.mxu0 0
    %3056 = vmatprep.subr.bf16.mxu0 0
    %3057 = vmatpush2.bf16.msra.mxu0 0
    %3058 = vmatprep.subr.bf16.mxu0 0
    %3059 = vmatpush2.bf16.msra.mxu0 0
    %3060 = vmatprep.subr.bf16.mxu0 0
    %3061 = vmatpush2.bf16.msra.mxu0 0
    %3062 = vmatprep.subr.bf16.mxu0 0
    %3063 = vmatpush2.bf16.msra.mxu0 0
    %3064 = vmatprep.subr.bf16.mxu0 0
    %3065 = vmatpush2.bf16.msra.mxu0 0
    %3066 = vmatprep.subr.bf16.mxu0 0
    %3067 = vmatpush2.bf16.msra.mxu0 0
    %3068 = vmatprep.subr.bf16.mxu0 0
    %3069 = vmatpush2.bf16.msra.mxu0 0
    %3070 = vmatprep.mubr.bf16.mxu0 0
    %3071 = vmatmul.mubr.bf16.gmra.mxu0 %v2525
    %v3072 = vpop.f32.mrf.mxu0
    %v3073 = vadd.f32 %v2611, %v3072
    %v3074 = vpop.f32.mrf.mxu0
    %v3075 = vadd.f32 %v2615, %v3074
    %v3076 = vpop.f32.mrf.mxu0
    %v3077 = vadd.f32 %v2611, %v3076
    %v3078 = vpop.f32.mrf.mxu0
    %v3079 = vadd.f32 %v2615, %v3078
    %3080 = vdwg.mxu0
    %3081 = vmatprep.subr.bf16.mxu0 %v2887
    %3082 = vmatpush1.bf16.msra.mxu0 %v2886
    %3083 = vmatprep.subr.bf16.mxu0 %v2879
    %3084 = vmatpush1.bf16.msra.mxu0 %v2878
    %3085 = vmatprep.subr.bf16.mxu0 %v2871
    %3086 = vmatpush1.bf16.msra.mxu0 %v2870
    %3087 = vmatprep.subr.bf16.mxu0 %v2863
    %3088 = vmatpush1.bf16.msra.mxu0 %v2862
    %3089 = vmatprep.subr.bf16.mxu0 %v2855
    %3090 = vmatpush1.bf16.msra.mxu0 %v2854
    %3091 = vmatprep.subr.bf16.mxu0 %v2847
    %3092 = vmatpush1.bf16.msra.mxu0 %v2846
    %3093 = vmatprep.subr.bf16.mxu0 %v2839
    %3094 = vmatpush1.bf16.msra.mxu0 %v2838
    %3095 = vmatprep.subr.bf16.mxu0 %v2831
    %3096 = vmatpush1.bf16.msra.mxu0 %v2830
    %3097 = vmatprep.subr.bf16.mxu0 0
    %3098 = vmatpush2.bf16.msra.mxu0 0
    %3099 = vmatprep.subr.bf16.mxu0 0
    %3100 = vmatpush2.bf16.msra.mxu0 0
    %3101 = vmatprep.subr.bf16.mxu0 0
    %3102 = vmatpush2.bf16.msra.mxu0 0
    %3103 = vmatprep.subr.bf16.mxu0 0
    %3104 = vmatpush2.bf16.msra.mxu0 0
    %3105 = vmatprep.subr.bf16.mxu0 0
    %3106 = vmatpush2.bf16.msra.mxu0 0
    %3107 = vmatprep.subr.bf16.mxu0 0
    %3108 = vmatpush2.bf16.msra.mxu0 0
    %3109 = vmatprep.subr.bf16.mxu0 0
    %3110 = vmatpush2.bf16.msra.mxu0 0
    %3111 = vmatprep.subr.bf16.mxu0 0
    %3112 = vmatpush2.bf16.msra.mxu0 0
    %3113 = vmatprep.mubr.bf16.mxu0 0
    %3114 = vmatmul.mubr.bf16.gmra.mxu0 %v2525
    %v3115 = vpop.f32.mrf.mxu0
    %v3116 = vadd.f32 %v2619, %v3115
    %v3117 = vpop.f32.mrf.mxu0
    %v3118 = vadd.f32 %v2623, %v3117
    %v3119 = vpop.f32.mrf.mxu0
    %v3120 = vadd.f32 %v2619, %v3119
    %v3121 = vpop.f32.mrf.mxu0
    %v3122 = vadd.f32 %v2623, %v3121
    %3123 = vdwg.mxu0
    %v3124 = vmax.f32 %v2987, 0.0
    %v3125 = vmax.f32 %v2989, 0.0
    %v3126 = vmax.f32 %v3030, 0.0
    %v3127 = vmax.f32 %v3032, 0.0
    %v3128 = vmax.f32 %v3073, 0.0
    %v3129 = vmax.f32 %v3075, 0.0
    %v3130 = vmax.f32 %v3116, 0.0
    %v3131 = vmax.f32 %v3118, 0.0
    %v3132 = vmax.f32 %v2991, 0.0
    %v3133 = vmax.f32 %v2993, 0.0
    %v3134 = vmax.f32 %v3034, 0.0
    %v3135 = vmax.f32 %v3036, 0.0
    %v3136 = vmax.f32 %v3077, 0.0
    %v3137 = vmax.f32 %v3079, 0.0
    %v3138 = vmax.f32 %v3120, 0.0
    %v3139 = vmax.f32 %v3122, 0.0
    %v3140 = vpack.c.bf16 %v3132, %v3124
    %v3141 = vpack.c.bf16 %v3133, %v3125
    %v3142 = vpack.c.bf16 %v3134, %v3126
    %v3143 = vpack.c.bf16 %v3135, %v3127
    %v3144 = vpack.c.bf16 %v3136, %v3128
    %v3145 = vpack.c.bf16 %v3137, %v3129
    %v3146 = vpack.c.bf16 %v3138, %v3130
    %v3147 = vpack.c.bf16 %v3139, %v3131
    %v3148 = vld [vmem:[#allocation16] sm:$0xf]
    %v3149 = vld [vmem:[#allocation16 + $0x4] sm:$0xf]
    %v3150 = vld [vmem:[#allocation16 + $0x8] sm:$0xf]
    %v3151 = vld [vmem:[#allocation16 + $0xc] sm:$0xf]
    %v3152 = vld [vmem:[#allocation16 + $0x10] sm:$0xf]
    %v3153 = vld [vmem:[#allocation16 + $0x14] sm:$0xf]
    %v3154 = vld [vmem:[#allocation16 + $0x18] sm:$0xf]
    %v3155 = vld [vmem:[#allocation16 + $0x1c] sm:$0xf]
    %v3156 = vld [vmem:[#allocation16 + $0x20] sm:$0xf]
    %v3157 = vld [vmem:[#allocation16 + $0x24] sm:$0xf]
    %v3158 = vld [vmem:[#allocation16 + $0x28] sm:$0xf]
    %v3159 = vld [vmem:[#allocation16 + $0x2c] sm:$0xf]
    %v3160 = vld [vmem:[#allocation16 + $0x30] sm:$0xf]
    %v3161 = vld [vmem:[#allocation16 + $0x34] sm:$0xf]
    %v3162 = vld [vmem:[#allocation16 + $0x38] sm:$0xf]
    %v3163 = vld [vmem:[#allocation16 + $0x3c] sm:$0xf]
    %v3164 = vld [vmem:[#allocation16 + $0x40] sm:$0xf]
    %v3165 = vld [vmem:[#allocation16 + $0x44] sm:$0xf]
    %v3166 = vld [vmem:[#allocation16 + $0x48] sm:$0xf]
    %v3167 = vld [vmem:[#allocation16 + $0x4c] sm:$0xf]
    %v3168 = vld [vmem:[#allocation16 + $0x50] sm:$0xf]
    %v3169 = vld [vmem:[#allocation16 + $0x54] sm:$0xf]
    %v3170 = vld [vmem:[#allocation16 + $0x58] sm:$0xf]
    %v3171 = vld [vmem:[#allocation16 + $0x5c] sm:$0xf]
    %v3172 = vld [vmem:[#allocation16 + $0x60] sm:$0xf]
    %v3173 = vld [vmem:[#allocation16 + $0x64] sm:$0xf]
    %v3174 = vld [vmem:[#allocation16 + $0x68] sm:$0xf]
    %v3175 = vld [vmem:[#allocation16 + $0x6c] sm:$0xf]
    %v3176 = vld [vmem:[#allocation16 + $0x70] sm:$0xf]
    %v3177 = vld [vmem:[#allocation16 + $0x74] sm:$0xf]
    %v3178 = vld [vmem:[#allocation16 + $0x78] sm:$0xf]
    %v3179 = vld [vmem:[#allocation16 + $0x7c] sm:$0xf]
    %v3180 = vld [vmem:[#allocation16 + $0x80] sm:$0xf]
    %v3181 = vld [vmem:[#allocation16 + $0x84] sm:$0xf]
    %v3182 = vld [vmem:[#allocation16 + $0x88] sm:$0xf]
    %v3183 = vld [vmem:[#allocation16 + $0x8c] sm:$0xf]
    %v3184 = vld [vmem:[#allocation16 + $0x90] sm:$0xf]
    %v3185 = vld [vmem:[#allocation16 + $0x94] sm:$0xf]
    %v3186 = vld [vmem:[#allocation16 + $0x98] sm:$0xf]
    %v3187 = vld [vmem:[#allocation16 + $0x9c] sm:$0xf]
    %v3188 = vld [vmem:[#allocation16 + $0xa0] sm:$0xf]
    %v3189 = vld [vmem:[#allocation16 + $0xa4] sm:$0xf]
    %v3190 = vld [vmem:[#allocation16 + $0xa8] sm:$0xf]
    %v3191 = vld [vmem:[#allocation16 + $0xac] sm:$0xf]
    %v3192 = vld [vmem:[#allocation16 + $0xb0] sm:$0xf]
    %v3193 = vld [vmem:[#allocation16 + $0xb4] sm:$0xf]
    %v3194 = vld [vmem:[#allocation16 + $0xb8] sm:$0xf]
    %v3195 = vld [vmem:[#allocation16 + $0xbc] sm:$0xf]
    %v3196 = vld [vmem:[#allocation16 + $0xc0] sm:$0xf]
    %v3197 = vld [vmem:[#allocation16 + $0xc4] sm:$0xf]
    %v3198 = vld [vmem:[#allocation16 + $0xc8] sm:$0xf]
    %v3199 = vld [vmem:[#allocation16 + $0xcc] sm:$0xf]
    %v3200 = vld [vmem:[#allocation16 + $0xd0] sm:$0xf]
    %v3201 = vld [vmem:[#allocation16 + $0xd4] sm:$0xf]
    %v3202 = vld [vmem:[#allocation16 + $0xd8] sm:$0xf]
    %v3203 = vld [vmem:[#allocation16 + $0xdc] sm:$0xf]
    %v3204 = vld [vmem:[#allocation16 + $0xe0] sm:$0xf]
    %v3205 = vld [vmem:[#allocation16 + $0xe4] sm:$0xf]
    %v3206 = vld [vmem:[#allocation16 + $0xe8] sm:$0xf]
    %v3207 = vld [vmem:[#allocation16 + $0xec] sm:$0xf]
    %v3208 = vld [vmem:[#allocation16 + $0xf0] sm:$0xf]
    %v3209 = vld [vmem:[#allocation16 + $0xf4] sm:$0xf]
    %v3210 = vld [vmem:[#allocation16 + $0xf8] sm:$0xf]
    %v3211 = vld [vmem:[#allocation16 + $0xfc] sm:$0xf]
    %v3212 = vld [vmem:[#allocation16 + $0x100] sm:$0xf]
    %v3213 = vld [vmem:[#allocation16 + $0x104] sm:$0xf]
    %v3214 = vld [vmem:[#allocation16 + $0x108] sm:$0xf]
    %v3215 = vld [vmem:[#allocation16 + $0x10c] sm:$0xf]
    %v3216 = vld [vmem:[#allocation16 + $0x110] sm:$0xf]
    %v3217 = vld [vmem:[#allocation16 + $0x114] sm:$0xf]
    %v3218 = vld [vmem:[#allocation16 + $0x118] sm:$0xf]
    %v3219 = vld [vmem:[#allocation16 + $0x11c] sm:$0xf]
    %v3220 = vld [vmem:[#allocation16 + $0x120] sm:$0xf]
    %v3221 = vld [vmem:[#allocation16 + $0x124] sm:$0xf]
    %v3222 = vld [vmem:[#allocation16 + $0x128] sm:$0xf]
    %v3223 = vld [vmem:[#allocation16 + $0x12c] sm:$0xf]
    %v3224 = vld [vmem:[#allocation16 + $0x130] sm:$0xf]
    %v3225 = vld [vmem:[#allocation16 + $0x134] sm:$0xf]
    %v3226 = vld [vmem:[#allocation16 + $0x138] sm:$0xf]
    %v3227 = vld [vmem:[#allocation16 + $0x13c] sm:$0xf]
    %v3228 = vld [vmem:[#allocation16 + $0x140] sm:$0xf]
    %v3229 = vld [vmem:[#allocation16 + $0x144] sm:$0xf]
    %v3230 = vld [vmem:[#allocation16 + $0x148] sm:$0xf]
    %v3231 = vld [vmem:[#allocation16 + $0x14c] sm:$0xf]
    %v3232 = vld [vmem:[#allocation16 + $0x150] sm:$0xf]
    %v3233 = vld [vmem:[#allocation16 + $0x154] sm:$0xf]
    %v3234 = vld [vmem:[#allocation16 + $0x158] sm:$0xf]
    %v3235 = vld [vmem:[#allocation16 + $0x15c] sm:$0xf]
    %v3236 = vld [vmem:[#allocation16 + $0x160] sm:$0xf]
    %v3237 = vld [vmem:[#allocation16 + $0x164] sm:$0xf]
    %v3238 = vld [vmem:[#allocation16 + $0x168] sm:$0xf]
    %v3239 = vld [vmem:[#allocation16 + $0x16c] sm:$0xf]
    %v3240 = vld [vmem:[#allocation16 + $0x170] sm:$0xf]
    %v3241 = vld [vmem:[#allocation16 + $0x174] sm:$0xf]
    %v3242 = vld [vmem:[#allocation16 + $0x178] sm:$0xf]
    %v3243 = vld [vmem:[#allocation16 + $0x17c] sm:$0xf]
    %v3244 = vld [vmem:[#allocation16 + $0x180] sm:$0xf]
    %v3245 = vld [vmem:[#allocation16 + $0x184] sm:$0xf]
    %v3246 = vld [vmem:[#allocation16 + $0x188] sm:$0xf]
    %v3247 = vld [vmem:[#allocation16 + $0x18c] sm:$0xf]
    %v3248 = vld [vmem:[#allocation16 + $0x190] sm:$0xf]
    %v3249 = vld [vmem:[#allocation16 + $0x194] sm:$0xf]
    %v3250 = vld [vmem:[#allocation16 + $0x198] sm:$0xf]
    %v3251 = vld [vmem:[#allocation16 + $0x19c] sm:$0xf]
    %v3252 = vld [vmem:[#allocation16 + $0x1a0] sm:$0xf]
    %v3253 = vld [vmem:[#allocation16 + $0x1a4] sm:$0xf]
    %v3254 = vld [vmem:[#allocation16 + $0x1a8] sm:$0xf]
    %v3255 = vld [vmem:[#allocation16 + $0x1ac] sm:$0xf]
    %v3256 = vld [vmem:[#allocation16 + $0x1b0] sm:$0xf]
    %v3257 = vld [vmem:[#allocation16 + $0x1b4] sm:$0xf]
    %v3258 = vld [vmem:[#allocation16 + $0x1b8] sm:$0xf]
    %v3259 = vld [vmem:[#allocation16 + $0x1bc] sm:$0xf]
    %v3260 = vld [vmem:[#allocation16 + $0x1c0] sm:$0xf]
    %v3261 = vld [vmem:[#allocation16 + $0x1c4] sm:$0xf]
    %v3262 = vld [vmem:[#allocation16 + $0x1c8] sm:$0xf]
    %v3263 = vld [vmem:[#allocation16 + $0x1cc] sm:$0xf]
    %v3264 = vld [vmem:[#allocation16 + $0x1d0] sm:$0xf]
    %v3265 = vld [vmem:[#allocation16 + $0x1d4] sm:$0xf]
    %v3266 = vld [vmem:[#allocation16 + $0x1d8] sm:$0xf]
    %v3267 = vld [vmem:[#allocation16 + $0x1dc] sm:$0xf]
    %v3268 = vld [vmem:[#allocation16 + $0x1e0] sm:$0xf]
    %v3269 = vld [vmem:[#allocation16 + $0x1e4] sm:$0xf]
    %v3270 = vld [vmem:[#allocation16 + $0x1e8] sm:$0xf]
    %v3271 = vld [vmem:[#allocation16 + $0x1ec] sm:$0xf]
    %v3272 = vld [vmem:[#allocation16 + $0x1f0] sm:$0xf]
    %v3273 = vld [vmem:[#allocation16 + $0x1f4] sm:$0xf]
    %v3274 = vld [vmem:[#allocation16 + $0x1f8] sm:$0xf]
    %v3275 = vld [vmem:[#allocation16 + $0x1fc] sm:$0xf]
    %v3276 = vld [vmem:[%s16] sm:$0x1]
    %v3278 = vlaneseq
    %v3279 = vshrl.u32 %v3278, 7
    %v3280 = vsub.s32 0, %v3279
    %v3281 = vrot.slane %v3276, %v3280
    %v3411 = vunpack.c.l.b16 %v3148
    %v3412 = vunpack.c.l.b16 %v3149
    %v3413 = vunpack.c.l.b16 %v3150
    %v3414 = vunpack.c.l.b16 %v3151
    %v3415 = vunpack.c.l.b16 %v3152
    %v3416 = vunpack.c.l.b16 %v3153
    %v3417 = vunpack.c.l.b16 %v3154
    %v3418 = vunpack.c.l.b16 %v3155
    %v3419 = vunpack.c.l.b16 %v3156
    %v3420 = vunpack.c.l.b16 %v3157
    %v3421 = vunpack.c.l.b16 %v3158
    %v3422 = vunpack.c.l.b16 %v3159
    %v3423 = vunpack.c.l.b16 %v3160
    %v3424 = vunpack.c.l.b16 %v3161
    %v3425 = vunpack.c.l.b16 %v3162
    %v3426 = vunpack.c.l.b16 %v3163
    %v3427 = vunpack.c.l.b16 %v3164
    %v3428 = vunpack.c.l.b16 %v3165
    %v3429 = vunpack.c.l.b16 %v3166
    %v3430 = vunpack.c.l.b16 %v3167
    %v3431 = vunpack.c.l.b16 %v3168
    %v3432 = vunpack.c.l.b16 %v3169
    %v3433 = vunpack.c.l.b16 %v3170
    %v3434 = vunpack.c.l.b16 %v3171
    %v3435 = vunpack.c.l.b16 %v3172
    %v3436 = vunpack.c.l.b16 %v3173
    %v3437 = vunpack.c.l.b16 %v3174
    %v3438 = vunpack.c.l.b16 %v3175
    %v3439 = vunpack.c.l.b16 %v3176
    %v3440 = vunpack.c.l.b16 %v3177
    %v3441 = vunpack.c.l.b16 %v3178
    %v3442 = vunpack.c.l.b16 %v3179
    %v3443 = vunpack.c.l.b16 %v3180
    %v3444 = vunpack.c.l.b16 %v3181
    %v3445 = vunpack.c.l.b16 %v3182
    %v3446 = vunpack.c.l.b16 %v3183
    %v3447 = vunpack.c.l.b16 %v3184
    %v3448 = vunpack.c.l.b16 %v3185
    %v3449 = vunpack.c.l.b16 %v3186
    %v3450 = vunpack.c.l.b16 %v3187
    %v3451 = vunpack.c.l.b16 %v3188
    %v3452 = vunpack.c.l.b16 %v3189
    %v3453 = vunpack.c.l.b16 %v3190
    %v3454 = vunpack.c.l.b16 %v3191
    %v3455 = vunpack.c.l.b16 %v3192
    %v3456 = vunpack.c.l.b16 %v3193
    %v3457 = vunpack.c.l.b16 %v3194
    %v3458 = vunpack.c.l.b16 %v3195
    %v3459 = vunpack.c.l.b16 %v3196
    %v3460 = vunpack.c.l.b16 %v3197
    %v3461 = vunpack.c.l.b16 %v3198
    %v3462 = vunpack.c.l.b16 %v3199
    %v3463 = vunpack.c.l.b16 %v3200
    %v3464 = vunpack.c.l.b16 %v3201
    %v3465 = vunpack.c.l.b16 %v3202
    %v3466 = vunpack.c.l.b16 %v3203
    %v3467 = vunpack.c.l.b16 %v3204
    %v3468 = vunpack.c.l.b16 %v3205
    %v3469 = vunpack.c.l.b16 %v3206
    %v3470 = vunpack.c.l.b16 %v3207
    %v3471 = vunpack.c.l.b16 %v3208
    %v3472 = vunpack.c.l.b16 %v3209
    %v3473 = vunpack.c.l.b16 %v3210
    %v3474 = vunpack.c.l.b16 %v3211
    %v3475 = vunpack.c.l.b16 %v3212
    %v3476 = vunpack.c.l.b16 %v3213
    %v3477 = vunpack.c.l.b16 %v3214
    %v3478 = vunpack.c.l.b16 %v3215
    %v3479 = vunpack.c.l.b16 %v3216
    %v3480 = vunpack.c.l.b16 %v3217
    %v3481 = vunpack.c.l.b16 %v3218
    %v3482 = vunpack.c.l.b16 %v3219
    %v3483 = vunpack.c.l.b16 %v3220
    %v3484 = vunpack.c.l.b16 %v3221
    %v3485 = vunpack.c.l.b16 %v3222
    %v3486 = vunpack.c.l.b16 %v3223
    %v3487 = vunpack.c.l.b16 %v3224
    %v3488 = vunpack.c.l.b16 %v3225
    %v3489 = vunpack.c.l.b16 %v3226
    %v3490 = vunpack.c.l.b16 %v3227
    %v3491 = vunpack.c.l.b16 %v3228
    %v3492 = vunpack.c.l.b16 %v3229
    %v3493 = vunpack.c.l.b16 %v3230
    %v3494 = vunpack.c.l.b16 %v3231
    %v3495 = vunpack.c.l.b16 %v3232
    %v3496 = vunpack.c.l.b16 %v3233
    %v3497 = vunpack.c.l.b16 %v3234
    %v3498 = vunpack.c.l.b16 %v3235
    %v3499 = vunpack.c.l.b16 %v3236
    %v3500 = vunpack.c.l.b16 %v3237
    %v3501 = vunpack.c.l.b16 %v3238
    %v3502 = vunpack.c.l.b16 %v3239
    %v3503 = vunpack.c.l.b16 %v3240
    %v3504 = vunpack.c.l.b16 %v3241
    %v3505 = vunpack.c.l.b16 %v3242
    %v3506 = vunpack.c.l.b16 %v3243
    %v3507 = vunpack.c.l.b16 %v3244
    %v3508 = vunpack.c.l.b16 %v3245
    %v3509 = vunpack.c.l.b16 %v3246
    %v3510 = vunpack.c.l.b16 %v3247
    %v3511 = vunpack.c.l.b16 %v3248
    %v3512 = vunpack.c.l.b16 %v3249
    %v3513 = vunpack.c.l.b16 %v3250
    %v3514 = vunpack.c.l.b16 %v3251
    %v3515 = vunpack.c.l.b16 %v3252
    %v3516 = vunpack.c.l.b16 %v3253
    %v3517 = vunpack.c.l.b16 %v3254
    %v3518 = vunpack.c.l.b16 %v3255
    %v3519 = vunpack.c.l.b16 %v3256
    %v3520 = vunpack.c.l.b16 %v3257
    %v3521 = vunpack.c.l.b16 %v3258
    %v3522 = vunpack.c.l.b16 %v3259
    %v3523 = vunpack.c.l.b16 %v3260
    %v3524 = vunpack.c.l.b16 %v3261
    %v3525 = vunpack.c.l.b16 %v3262
    %v3526 = vunpack.c.l.b16 %v3263
    %v3527 = vunpack.c.l.b16 %v3264
    %v3528 = vunpack.c.l.b16 %v3265
    %v3529 = vunpack.c.l.b16 %v3266
    %v3530 = vunpack.c.l.b16 %v3267
    %v3531 = vunpack.c.l.b16 %v3268
    %v3532 = vunpack.c.l.b16 %v3269
    %v3533 = vunpack.c.l.b16 %v3270
    %v3534 = vunpack.c.l.b16 %v3271
    %v3535 = vunpack.c.l.b16 %v3272
    %v3536 = vunpack.c.l.b16 %v3273
    %v3537 = vunpack.c.l.b16 %v3274
    %v3538 = vunpack.c.l.b16 %v3275
    %v3539 = vpack.c.b16 %v3412, %v3411
    %v3540 = vpack.c.b16 %v3414, %v3413
    %v3541 = vpack.c.b16 %v3416, %v3415
    %v3542 = vpack.c.b16 %v3418, %v3417
    %v3543 = vpack.c.b16 %v3420, %v3419
    %v3544 = vpack.c.b16 %v3422, %v3421
    %v3545 = vpack.c.b16 %v3424, %v3423
    %v3546 = vpack.c.b16 %v3426, %v3425
    %v3547 = vpack.c.b16 %v3428, %v3427
    %v3548 = vpack.c.b16 %v3430, %v3429
    %v3549 = vpack.c.b16 %v3432, %v3431
    %v3550 = vpack.c.b16 %v3434, %v3433
    %v3551 = vpack.c.b16 %v3436, %v3435
    %v3552 = vpack.c.b16 %v3438, %v3437
    %v3553 = vpack.c.b16 %v3440, %v3439
    %v3554 = vpack.c.b16 %v3442, %v3441
    %v3555 = vpack.c.b16 %v3444, %v3443
    %v3556 = vpack.c.b16 %v3446, %v3445
    %v3557 = vpack.c.b16 %v3448, %v3447
    %v3558 = vpack.c.b16 %v3450, %v3449
    %v3559 = vpack.c.b16 %v3452, %v3451
    %v3560 = vpack.c.b16 %v3454, %v3453
    %v3561 = vpack.c.b16 %v3456, %v3455
    %v3562 = vpack.c.b16 %v3458, %v3457
    %v3563 = vpack.c.b16 %v3460, %v3459
    %v3564 = vpack.c.b16 %v3462, %v3461
    %v3565 = vpack.c.b16 %v3464, %v3463
    %v3566 = vpack.c.b16 %v3466, %v3465
    %v3567 = vpack.c.b16 %v3468, %v3467
    %v3568 = vpack.c.b16 %v3470, %v3469
    %v3569 = vpack.c.b16 %v3472, %v3471
    %v3570 = vpack.c.b16 %v3474, %v3473
    %v3571 = vpack.c.b16 %v3476, %v3475
    %v3572 = vpack.c.b16 %v3478, %v3477
    %v3573 = vpack.c.b16 %v3480, %v3479
    %v3574 = vpack.c.b16 %v3482, %v3481
    %v3575 = vpack.c.b16 %v3484, %v3483
    %v3576 = vpack.c.b16 %v3486, %v3485
    %v3577 = vpack.c.b16 %v3488, %v3487
    %v3578 = vpack.c.b16 %v3490, %v3489
    %v3579 = vpack.c.b16 %v3492, %v3491
    %v3580 = vpack.c.b16 %v3494, %v3493
    %v3581 = vpack.c.b16 %v3496, %v3495
    %v3582 = vpack.c.b16 %v3498, %v3497
    %v3583 = vpack.c.b16 %v3500, %v3499
    %v3584 = vpack.c.b16 %v3502, %v3501
    %v3585 = vpack.c.b16 %v3504, %v3503
    %v3586 = vpack.c.b16 %v3506, %v3505
    %v3587 = vpack.c.b16 %v3508, %v3507
    %v3588 = vpack.c.b16 %v3510, %v3509
    %v3589 = vpack.c.b16 %v3512, %v3511
    %v3590 = vpack.c.b16 %v3514, %v3513
    %v3591 = vpack.c.b16 %v3516, %v3515
    %v3592 = vpack.c.b16 %v3518, %v3517
    %v3593 = vpack.c.b16 %v3520, %v3519
    %v3594 = vpack.c.b16 %v3522, %v3521
    %v3595 = vpack.c.b16 %v3524, %v3523
    %v3596 = vpack.c.b16 %v3526, %v3525
    %v3597 = vpack.c.b16 %v3528, %v3527
    %v3598 = vpack.c.b16 %v3530, %v3529
    %v3599 = vpack.c.b16 %v3532, %v3531
    %v3600 = vpack.c.b16 %v3534, %v3533
    %v3601 = vpack.c.b16 %v3536, %v3535
    %v3602 = vpack.c.b16 %v3538, %v3537
    %3667 = vmatprep.subr.bf16.mxu0 0
    %3668 = vmatpush1.bf16.msra.mxu0 %v3546
    %3669 = vmatprep.subr.bf16.mxu0 0
    %3670 = vmatpush1.bf16.msra.mxu0 %v3545
    %3671 = vmatprep.subr.bf16.mxu0 0
    %3672 = vmatpush1.bf16.msra.mxu0 %v3544
    %3673 = vmatprep.subr.bf16.mxu0 0
    %3674 = vmatpush1.bf16.msra.mxu0 %v3543
    %3675 = vmatprep.subr.bf16.mxu0 0
    %3676 = vmatpush1.bf16.msra.mxu0 %v3542
    %3677 = vmatprep.subr.bf16.mxu0 0
    %3678 = vmatpush1.bf16.msra.mxu0 %v3541
    %3679 = vmatprep.subr.bf16.mxu0 0
    %3680 = vmatpush1.bf16.msra.mxu0 %v3540
    %3681 = vmatprep.subr.bf16.mxu0 0
    %3682 = vmatpush1.bf16.msra.mxu0 %v3539
    %3683 = vmatprep.subr.bf16.mxu0 0
    %3684 = vmatpush2.bf16.msra.mxu0 %v3554
    %3685 = vmatprep.subr.bf16.mxu0 0
    %3686 = vmatpush2.bf16.msra.mxu0 %v3553
    %3687 = vmatprep.subr.bf16.mxu0 0
    %3688 = vmatpush2.bf16.msra.mxu0 %v3552
    %3689 = vmatprep.subr.bf16.mxu0 0
    %3690 = vmatpush2.bf16.msra.mxu0 %v3551
    %3691 = vmatprep.subr.bf16.mxu0 0
    %3692 = vmatpush2.bf16.msra.mxu0 %v3550
    %3693 = vmatprep.subr.bf16.mxu0 0
    %3694 = vmatpush2.bf16.msra.mxu0 %v3549
    %3695 = vmatprep.subr.bf16.mxu0 0
    %3696 = vmatpush2.bf16.msra.mxu0 %v3548
    %3697 = vmatprep.subr.bf16.mxu0 0
    %3698 = vmatpush2.bf16.msra.mxu0 %v3547
    %3699 = vmatprep.mubr.bf16.mxu0 %v3141
    %3700 = vmatmul.mubr.bf16.gmra.mxu0 %v3140
    %v3701 = vpop.f32.mrf.mxu0
    %v3702 = vadd.f32 %v3281, %v3701
    %v3703 = vpop.f32.mrf.mxu0
    %v3704 = vpop.f32.mrf.mxu0
    %v3705 = vadd.f32 %v3281, %v3704
    %v3706 = vpop.f32.mrf.mxu0
    %3707 = vdwg.mxu0
    %3708 = vmatprep.subr.bf16.mxu0 0
    %3709 = vmatpush1.bf16.msra.mxu0 %v3562
    %3710 = vmatprep.subr.bf16.mxu0 0
    %3711 = vmatpush1.bf16.msra.mxu0 %v3561
    %3712 = vmatprep.subr.bf16.mxu0 0
    %3713 = vmatpush1.bf16.msra.mxu0 %v3560
    %3714 = vmatprep.subr.bf16.mxu0 0
    %3715 = vmatpush1.bf16.msra.mxu0 %v3559
    %3716 = vmatprep.subr.bf16.mxu0 0
    %3717 = vmatpush1.bf16.msra.mxu0 %v3558
    %3718 = vmatprep.subr.bf16.mxu0 0
    %3719 = vmatpush1.bf16.msra.mxu0 %v3557
    %3720 = vmatprep.subr.bf16.mxu0 0
    %3721 = vmatpush1.bf16.msra.mxu0 %v3556
    %3722 = vmatprep.subr.bf16.mxu0 0
    %3723 = vmatpush1.bf16.msra.mxu0 %v3555
    %3724 = vmatprep.subr.bf16.mxu0 0
    %3725 = vmatpush2.bf16.msra.mxu0 %v3570
    %3726 = vmatprep.subr.bf16.mxu0 0
    %3727 = vmatpush2.bf16.msra.mxu0 %v3569
    %3728 = vmatprep.subr.bf16.mxu0 0
    %3729 = vmatpush2.bf16.msra.mxu0 %v3568
    %3730 = vmatprep.subr.bf16.mxu0 0
    %3731 = vmatpush2.bf16.msra.mxu0 %v3567
    %3732 = vmatprep.subr.bf16.mxu0 0
    %3733 = vmatpush2.bf16.msra.mxu0 %v3566
    %3734 = vmatprep.subr.bf16.mxu0 0
    %3735 = vmatpush2.bf16.msra.mxu0 %v3565
    %3736 = vmatprep.subr.bf16.mxu0 0
    %3737 = vmatpush2.bf16.msra.mxu0 %v3564
    %3738 = vmatprep.subr.bf16.mxu0 0
    %3739 = vmatpush2.bf16.msra.mxu0 %v3563
    %3740 = vmatprep.mubr.bf16.mxu0 %v3143
    %3741 = vmatmul.mubr.bf16.gmra.mxu0 %v3142
    %v3742 = vpop.f32.mrf.mxu0
    %v3743 = vadd.f32 %v3702, %v3742
    %v3744 = vpop.f32.mrf.mxu0
    %v3745 = vpop.f32.mrf.mxu0
    %v3746 = vadd.f32 %v3705, %v3745
    %v3747 = vpop.f32.mrf.mxu0
    %3748 = vdwg.mxu0
    %3749 = vmatprep.subr.bf16.mxu0 0
    %3750 = vmatpush1.bf16.msra.mxu0 %v3578
    %3751 = vmatprep.subr.bf16.mxu0 0
    %3752 = vmatpush1.bf16.msra.mxu0 %v3577
    %3753 = vmatprep.subr.bf16.mxu0 0
    %3754 = vmatpush1.bf16.msra.mxu0 %v3576
    %3755 = vmatprep.subr.bf16.mxu0 0
    %3756 = vmatpush1.bf16.msra.mxu0 %v3575
    %3757 = vmatprep.subr.bf16.mxu0 0
    %3758 = vmatpush1.bf16.msra.mxu0 %v3574
    %3759 = vmatprep.subr.bf16.mxu0 0
    %3760 = vmatpush1.bf16.msra.mxu0 %v3573
    %3761 = vmatprep.subr.bf16.mxu0 0
    %3762 = vmatpush1.bf16.msra.mxu0 %v3572
    %3763 = vmatprep.subr.bf16.mxu0 0
    %3764 = vmatpush1.bf16.msra.mxu0 %v3571
    %3765 = vmatprep.subr.bf16.mxu0 0
    %3766 = vmatpush2.bf16.msra.mxu0 %v3586
    %3767 = vmatprep.subr.bf16.mxu0 0
    %3768 = vmatpush2.bf16.msra.mxu0 %v3585
    %3769 = vmatprep.subr.bf16.mxu0 0
    %3770 = vmatpush2.bf16.msra.mxu0 %v3584
    %3771 = vmatprep.subr.bf16.mxu0 0
    %3772 = vmatpush2.bf16.msra.mxu0 %v3583
    %3773 = vmatprep.subr.bf16.mxu0 0
    %3774 = vmatpush2.bf16.msra.mxu0 %v3582
    %3775 = vmatprep.subr.bf16.mxu0 0
    %3776 = vmatpush2.bf16.msra.mxu0 %v3581
    %3777 = vmatprep.subr.bf16.mxu0 0
    %3778 = vmatpush2.bf16.msra.mxu0 %v3580
    %3779 = vmatprep.subr.bf16.mxu0 0
    %3780 = vmatpush2.bf16.msra.mxu0 %v3579
    %3781 = vmatprep.mubr.bf16.mxu0 %v3145
    %3782 = vmatmul.mubr.bf16.gmra.mxu0 %v3144
    %v3783 = vpop.f32.mrf.mxu0
    %v3784 = vadd.f32 %v3743, %v3783
    %v3785 = vpop.f32.mrf.mxu0
    %v3786 = vpop.f32.mrf.mxu0
    %v3787 = vadd.f32 %v3746, %v3786
    %v3788 = vpop.f32.mrf.mxu0
    %3789 = vdwg.mxu0
    %3790 = vmatprep.subr.bf16.mxu0 0
    %3791 = vmatpush1.bf16.msra.mxu0 %v3594
    %3792 = vmatprep.subr.bf16.mxu0 0
    %3793 = vmatpush1.bf16.msra.mxu0 %v3593
    %3794 = vmatprep.subr.bf16.mxu0 0
    %3795 = vmatpush1.bf16.msra.mxu0 %v3592
    %3796 = vmatprep.subr.bf16.mxu0 0
    %3797 = vmatpush1.bf16.msra.mxu0 %v3591
    %3798 = vmatprep.subr.bf16.mxu0 0
    %3799 = vmatpush1.bf16.msra.mxu0 %v3590
    %3800 = vmatprep.subr.bf16.mxu0 0
    %3801 = vmatpush1.bf16.msra.mxu0 %v3589
    %3802 = vmatprep.subr.bf16.mxu0 0
    %3803 = vmatpush1.bf16.msra.mxu0 %v3588
    %3804 = vmatprep.subr.bf16.mxu0 0
    %3805 = vmatpush1.bf16.msra.mxu0 %v3587
    %3806 = vmatprep.subr.bf16.mxu0 0
    %3807 = vmatpush2.bf16.msra.mxu0 %v3602
    %3808 = vmatprep.subr.bf16.mxu0 0
    %3809 = vmatpush2.bf16.msra.mxu0 %v3601
    %3810 = vmatprep.subr.bf16.mxu0 0
    %3811 = vmatpush2.bf16.msra.mxu0 %v3600
    %3812 = vmatprep.subr.bf16.mxu0 0
    %3813 = vmatpush2.bf16.msra.mxu0 %v3599
    %3814 = vmatprep.subr.bf16.mxu0 0
    %3815 = vmatpush2.bf16.msra.mxu0 %v3598
    %3816 = vmatprep.subr.bf16.mxu0 0
    %3817 = vmatpush2.bf16.msra.mxu0 %v3597
    %3818 = vmatprep.subr.bf16.mxu0 0
    %3819 = vmatpush2.bf16.msra.mxu0 %v3596
    %3820 = vmatprep.subr.bf16.mxu0 0
    %3821 = vmatpush2.bf16.msra.mxu0 %v3595
    %3822 = vmatprep.mubr.bf16.mxu0 %v3147
    %3823 = vmatmul.mubr.bf16.gmra.mxu0 %v3146
    %v3824 = vpop.f32.mrf.mxu0
    %v3825 = vadd.f32 %v3784, %v3824
    %v3826 = vpop.f32.mrf.mxu0
    %v3827 = vpop.f32.mrf.mxu0
    %v3828 = vadd.f32 %v3787, %v3827
    %v3829 = vpop.f32.mrf.mxu0
    %3830 = vdwg.mxu0
    %v3831 = vadd.f32 %v3825, %v2523
    %v3832 = vadd.f32 %v3828, %v2524
    %3833 = vadd.xlane.f32.xlu0 %v3831
    %v3834 = vpop.xlane.xlu0 %3833
    %3835 = vadd.xlane.f32.xlu0 %v3832
    %v3836 = vpop.xlane.xlu0 %3835
    %v3837 = vmul.f32 %v3834, %v2488
    %v3838 = vmul.f32 %v3836, %v2488
    %v3839 = vsub.f32 %v3831, %v3837
    %v3840 = vsub.f32 %v3832, %v3838
    %v3841 = vmul.f32 %v3839, %v3839
    %v3842 = vmul.f32 %v3840, %v3840
    %3843 = vadd.xlane.f32.xlu0 %v3841
    %v3844 = vpop.xlane.xlu0 %3843
    %3845 = vadd.xlane.f32.xlu0 %v3842
    %v3846 = vpop.xlane.xlu0 %3845
    %v3847 = vmul.f32 %v3844, %v2488
    %v3848 = vmul.f32 %v3846, %v2488
    %v3849 = vadd.f32 %v3847, 1e-05
    %v3850 = vadd.f32 %v3848, 1e-05
    %v3851 = vrsqrt.pop %v3849
    %v3852 = vrsqrt.pop %v3850
    %v3853 = vmul.f32 %v3839, %v3851
    %v3854 = vmul.f32 %v3840, %v3852
    %v3855 = vld [vmem:[%s17] sm:$0x1]
    %v3857 = vlaneseq
    %v3858 = vshrl.u32 %v3857, 7
    %v3859 = vsub.s32 0, %v3858
    %v3860 = vrot.slane %v3855, %v3859
    %v3862 = vmul.f32 %v3853, %v3860
    %v3863 = vmul.f32 %v3854, %v3860
    %v3864 = vld [vmem:[%s18] sm:$0x1]
    %v3866 = vlaneseq
    %v3867 = vshrl.u32 %v3866, 7
    %v3868 = vsub.s32 0, %v3867
    %v3869 = vrot.slane %v3864, %v3868
    %v3871 = vadd.f32 %v3862, %v3869
    %v3872 = vadd.f32 %v3863, %v3869
    %3873 = vst [vmem:[#allocation17] sm:$0xff] %v3871
    %3874 = vst [vmem:[#allocation17 + $0x8] sm:$0xff] %v3872
    // Predicated region
    $region114: #{tpu_custom_call.1} parent=1 // pred_check
      _
    $region115: #{tpu_custom_call.1} parent=1 // pred_check_branch
      %3876 = sbr.rel (0) target = $region117
    $region116: #{tpu_custom_call.1} parent=1 // pred_region
      %s3878 = ssub.s32 256, 256
      %3879 = vsyncadd [#allocation4], %s3878
      %s3880 = sshll.u32 [#allocation17], 4
      %s3881 = int_to_ptr.vmem [resolvable:$true] %s3880
      %3886 = dma.vmem_to_hbm [thread:$0]  %s3881, 256, %s19, [#allocation4], 128, 128, 8
    $region117: #{tpu_custom_call.1} parent=1 // pred_fallthru
      _
    // Predicated region
    $region118: #{tpu_custom_call.1} parent=1 // pred_check
      _
    $region119: #{tpu_custom_call.1} parent=1 // pred_check_branch
      %3888 = sbr.rel (0) target = $region121
    $region120: #{tpu_custom_call.1} parent=1 // pred_region
      %3889 = dma.done [#allocation4], 256
    $region121: #{tpu_custom_call.1} parent=1 // pred_fallthru
      _
    %3890 = vsyncpa [#allocation3], 1
    %3891 = vsyncpa [#allocation6], 1
    %3892 = vsyncpa [#allocation9], 1
    %3893 = vsyncpa [#allocation12], 1
    %3894 = vsyncpa [#allocation15], 1
    %3895 = vsyncpa [#allocation4], 1

</llo_original>
